<compile_context>
chip_gen: v6e
topology: v6e:2x2x1
jax: 0.10.0
libtpu: 0.0.40
codegen_flags: <defaults>
</compile_context>

<pallas_src>
import itertools
import numpy as np
import jax
import jax.numpy as jnp
from jax.experimental import pallas as pl
from jax.experimental.pallas import tpu as pltpu

# ---------------- configuration (small, consistent with TinyViTBlock) -------
B = 2
DIM = 32                    # dim
NUM_HEADS = 4
WS = 4                      # window_size
RES = (8, 8)                # input_resolution
MLP_RATIO = 4.0
KD = DIM // NUM_HEADS       # key_dim = 8
DD = KD                     # d = attn_ratio(=1) * key_dim
DH = DD * NUM_HEADS         # = dim
HID = int(DIM * MLP_RATIO)  # mlp hidden = 128
N_TOK = RES[0] * RES[1]     # 64 tokens per image
N_WIN_TOK = WS * WS         # 16 tokens / window
SCALE = KD ** -0.5
LN_EPS = 1e-5
BN_EPS = 1e-5
NEG_INF = -1e30             # finite mask value (avoids exp(-inf - -inf) NaNs)
BF16 = jnp.bfloat16


# ---------------------------- fused Pallas kernel ----------------------------
def _layernorm(x, g, b):
    mean = jnp.mean(x, axis=-1, keepdims=True)
    var = jnp.mean(jnp.square(x - mean), axis=-1, keepdims=True)
    return (x - mean) * jax.lax.rsqrt(var + LN_EPS) * g + b


def fused_block_kernel(x_ref, bias_ref,
                       ln1g_ref, ln1b_ref,
                       wq_ref, wk_ref, wv_ref, bq_ref, bk_ref, bv_ref,
                       wp_ref, bp_ref,
                       cw_ref, bns_ref, bnh_ref,
                       ln2g_ref, ln2b_ref,
                       w1_ref, fb1_ref, w2_ref, fb2_ref,
                       o_ref, pad_ref):
    Hh, Ww = RES
    x = x_ref[0]                                             # (N_TOK, DIM) f32

    # ---- attention over all windows of this image at once --------------------
    xn = _layernorm(x, ln1g_ref[...], ln1b_ref[...])
    xb = xn.astype(BF16)
    q_all = jnp.dot(xb, wq_ref[...].astype(BF16),
                    preferred_element_type=jnp.float32) + bq_ref[...]
    k_all = jnp.dot(xb, wk_ref[...].astype(BF16),
                    preferred_element_type=jnp.float32) + bk_ref[...]
    v_all = jnp.dot(xb, wv_ref[...].astype(BF16),
                    preferred_element_type=jnp.float32) + bv_ref[...]
    wp = wp_ref[...]                                         # (DH, DIM)

    attn = jnp.zeros((N_TOK, DIM), jnp.float32)
    for h in range(NUM_HEADS):                               # static head loop
        q = q_all[:, h * KD:(h + 1) * KD].astype(BF16)       # (N, KD)
        k = k_all[:, h * KD:(h + 1) * KD].astype(BF16)       # (N, KD)
        v = v_all[:, h * DD:(h + 1) * DD].astype(BF16)       # (N, DD)
        # q @ k^T (contract last dims) + block-diagonal bias/mask
        logits = jax.lax.dot_general(q, k, (((1,), (1,)), ((), ())),
                                     preferred_element_type=jnp.float32)
        logits = logits * SCALE + bias_ref[h]                # (N, N)
        logits = logits - jnp.max(logits, axis=-1, keepdims=True)
        pexp = jnp.exp(logits)
        pexp = pexp * pl.reciprocal(jnp.sum(pexp, axis=-1, keepdims=True),
                                    approx=True)
        o_h = jnp.dot(pexp.astype(BF16), v,
                      preferred_element_type=jnp.float32)    # (N, DD)
        attn = attn + jnp.dot(o_h.astype(BF16),
                              wp[h * DD:(h + 1) * DD, :].astype(BF16),
                              preferred_element_type=jnp.float32)
    x1 = x + attn + bp_ref[...]                              # residual (drop_path = id)

    # ---- depthwise 3x3 conv + folded BN (zero pad via VMEM scratch) ----------
    xc = x1.reshape(Hh, Ww, DIM)
    pad_ref[...] = jnp.zeros_like(pad_ref)
    pad_ref[pl.ds(1, Hh), pl.ds(1, Ww), :] = xc
    xp = pad_ref[...]                                        # (Hh+2, Ww+2, DIM)
    w = cw_ref[...]                                          # (9, DIM) taps
    acc = jnp.zeros((Hh, Ww, DIM), jnp.float32)
    for dh in range(3):
        for dw in range(3):
            k_idx = dh * 3 + dw
            tap = w[k_idx:k_idx + 1, :][None, :, :]          # (1, 1, DIM)
            acc = acc + xp[dh:dh + Hh, dw:dw + Ww, :] * tap
    x2 = (acc * bns_ref[...][None, :, :]
          + bnh_ref[...][None, :, :]).reshape(N_TOK, DIM)

    # ---- MLP (LN -> fc1 -> exact GELU -> fc2) + residual ---------------------
    xn2 = _layernorm(x2, ln2g_ref[...], ln2b_ref[...])
    hmid = jnp.dot(xn2.astype(BF16), w1_ref[...].astype(BF16),
                   preferred_element_type=jnp.float32) + fb1_ref[...]
    hmid = 0.5 * hmid * (1.0 + jax.lax.erf(hmid * 0.7071067811865476))
    y = jnp.dot(hmid.astype(BF16), w2_ref[...].astype(BF16),
                preferred_element_type=jnp.float32) + fb2_ref[...]
    o_ref[0] = (x2 + y).astype(o_ref.dtype)


# ------------------------------ wrapper --------------------------------------
def tinyvit_block_forward(x, p):
    Bn, Np, C = x.shape
    Hh, Ww = RES

    def const_spec(shape):
        zeros = (0,) * len(shape)
        return pl.BlockSpec(shape, lambda *_: zeros)

    return pl.pallas_call(
        fused_block_kernel,
        out_shape=jax.ShapeDtypeStruct((Bn, Np, C), x.dtype),
        grid=(Bn,),
        in_specs=[
            pl.BlockSpec((1, Np, C), lambda b: (b, 0, 0)),           # x
            const_spec((NUM_HEADS, Np, Np)),                         # bias_full
            const_spec((1, C)), const_spec((1, C)),                  # attn LN g/b
            const_spec((C, NUM_HEADS * KD)),                         # wq
            const_spec((C, NUM_HEADS * KD)),                         # wk
            const_spec((C, NUM_HEADS * DD)),                         # wv
            const_spec((1, NUM_HEADS * KD)),                         # bq
            const_spec((1, NUM_HEADS * KD)),                         # bk
            const_spec((1, NUM_HEADS * DD)),                         # bv
            const_spec((DH, C)), const_spec((1, C)),                 # wp, bp
            const_spec((9, C)),                                      # conv taps
            const_spec((1, C)), const_spec((1, C)),                  # bn scale/shift
            const_spec((1, C)), const_spec((1, C)),                  # mlp LN g/b
            const_spec((C, HID)), const_spec((1, HID)),              # fc1
            const_spec((HID, C)), const_spec((1, C)),                # fc2
        ],
        out_specs=pl.BlockSpec((1, Np, C), lambda b: (b, 0, 0)),
        scratch_shapes=[pltpu.VMEM((Hh + 2, Ww + 2, C), jnp.float32)],
        compiler_params=pltpu.CompilerParams(
            dimension_semantics=("parallel",)),
    )(x, p['bias_full'], p['attn_ln_g'], p['attn_ln_b'],
      p['wq'], p['wk'], p['wv'], p['bq'], p['bk'], p['bv'],
      p['wp'], p['bp'],
      p['conv_w'], p['bn_scale'], p['bn_shift'],
      p['mlp_ln_g'], p['mlp_ln_b'],
      p['w1'], p['b1'], p['w2'], p['b2'])


# ----------------------- deterministic parameter setup -----------------------
def make_params(key):
    ks = jax.random.split(key, 16)

    def rnd(k, shape, s=0.05):
        return jax.random.normal(k, shape, dtype=jnp.float32) * s

    # qkv Linear(dim, dh + 2*key_dim*heads): PyTorch column order is per-head
    # blocks of [q(KD) | k(KD) | v(DD)].  Pre-split into head-major q/k/v mats.
    blk = 2 * KD + DD
    w_qkv = rnd(ks[0], (DIM, NUM_HEADS * blk))
    b_qkv = rnd(ks[1], (NUM_HEADS * blk,), 0.02)
    wq = jnp.concatenate([w_qkv[:, h * blk:h * blk + KD] for h in range(NUM_HEADS)], axis=1)
    wk = jnp.concatenate([w_qkv[:, h * blk + KD:h * blk + 2 * KD] for h in range(NUM_HEADS)], axis=1)
    wv = jnp.concatenate([w_qkv[:, h * blk + 2 * KD:h * blk + blk] for h in range(NUM_HEADS)], axis=1)
    bq = jnp.concatenate([b_qkv[h * blk:h * blk + KD] for h in range(NUM_HEADS)])[None]
    bk = jnp.concatenate([b_qkv[h * blk + KD:h * blk + 2 * KD] for h in range(NUM_HEADS)])[None]
    bv = jnp.concatenate([b_qkv[h * blk + 2 * KD:h * blk + blk] for h in range(NUM_HEADS)])[None]

    # relative attention bias table, same construction as Attention.__init__
    points = list(itertools.product(range(WS), range(WS)))
    offsets, idxs = {}, []
    for p1 in points:
        for p2 in points:
            off = (abs(p1[0] - p2[0]), abs(p1[1] - p2[1]))
            if off not in offsets:
                offsets[off] = len(offsets)
            idxs.append(offsets[off])
    idx_arr = np.asarray(idxs, dtype=np.int32).reshape(len(points), len(points))
    attention_biases = rnd(ks[4], (NUM_HEADS, len(offsets)), 0.1)
    ab = attention_biases[:, idx_arr]                        # (H, 16, 16)

    # full-image bias: ab on same-window pairs (natural row-major token order),
    # NEG_INF elsewhere -> block-diagonal attention without window partitioning.
    Hh, Ww = RES
    pair_idx = np.zeros((N_TOK, N_TOK), np.int32)
    same_win = np.zeros((N_TOK, N_TOK), bool)
    for i in range(N_TOK):
        y1, x1 = divmod(i, Ww)
        for j in range(N_TOK):
            y2, x2 = divmod(j, Ww)
            if (y1 // WS == y2 // WS) and (x1 // WS == x2 // WS):
                p1 = (y1 % WS) * WS + (x1 % WS)
                p2 = (y2 % WS) * WS + (x2 % WS)
                pair_idx[i, j] = p1 * N_WIN_TOK + p2
                same_win[i, j] = True
    ab_flat = ab.reshape(NUM_HEADS, N_WIN_TOK * N_WIN_TOK)
    bias_full = jnp.where(jnp.asarray(same_win)[None],
                          ab_flat[:, jnp.asarray(pair_idx)],
                          jnp.float32(NEG_INF))              # (H, N_TOK, N_TOK)

    wp = rnd(ks[5], (DH, DIM))
    bp = rnd(ks[6], (DIM,), 0.02)[None]

    conv_w = rnd(ks[7], (9, DIM), 0.1)                       # depthwise (C,1,3,3) -> (3*3, C)
    bn_gamma = 1.0 + rnd(ks[8], (DIM,), 0.05)
    bn_beta = rnd(ks[9], (DIM,), 0.05)
    bn_mean = rnd(ks[10], (DIM,), 0.05)
    bn_var = 1.0 + jnp.abs(rnd(ks[11], (DIM,), 0.05))
    inv = bn_gamma / jnp.sqrt(bn_var + BN_EPS)
    bn_scale = inv[None]
    bn_shift = (bn_beta - bn_mean * inv)[None]

    return dict(
        attn_ln_g=jnp.ones((1, DIM), jnp.float32), attn_ln_b=jnp.zeros((1, DIM), jnp.float32),
        wq=wq, wk=wk, wv=wv, bq=bq, bk=bk, bv=bv, ab=ab, bias_full=bias_full,
        wp=wp, bp=bp,
        conv_w=conv_w, bn_scale=bn_scale, bn_shift=bn_shift,
        mlp_ln_g=jnp.ones((1, DIM), jnp.float32), mlp_ln_b=jnp.zeros((1, DIM), jnp.float32),
        w1=rnd(ks[12], (DIM, HID)), b1=rnd(ks[13], (HID,), 0.02)[None],
        w2=rnd(ks[14], (HID, DIM)), b2=rnd(ks[15], (DIM,), 0.02)[None],
    )


# --------------------------- pure-JAX reference -------------------------------
def reference_forward(x, p):
    Hh, Ww = RES
    Bn, Np, C = x.shape
    nH, nW = Hh // WS, Ww // WS
    xw = x.reshape(Bn, nH, WS, nW, WS, C).transpose(0, 1, 3, 2, 4, 5).reshape(-1, WS * WS, C)

    mean = xw.mean(-1, keepdims=True)
    var = ((xw - mean) ** 2).mean(-1, keepdims=True)
    xn = (xw - mean) / jnp.sqrt(var + LN_EPS) * p['attn_ln_g'][0] + p['attn_ln_b'][0]
    q = (xn @ p['wq'] + p['bq'][0]).reshape(-1, WS * WS, NUM_HEADS, KD).transpose(0, 2, 1, 3)
    k = (xn @ p['wk'] + p['bk'][0]).reshape(-1, WS * WS, NUM_HEADS, KD).transpose(0, 2, 1, 3)
    v = (xn @ p['wv'] + p['bv'][0]).reshape(-1, WS * WS, NUM_HEADS, DD).transpose(0, 2, 1, 3)
    logits = jnp.einsum('whnd,whmd->whnm', q, k) * SCALE + p['ab'][None]
    a = jax.nn.softmax(logits, axis=-1)
    o = jnp.einsum('whnm,whmd->whnd', a, v).transpose(0, 2, 1, 3).reshape(-1, WS * WS, DH)
    o = o @ p['wp'] + p['bp'][0]
    o = o.reshape(Bn, nH, nW, WS, WS, C).transpose(0, 1, 3, 2, 4, 5).reshape(Bn, Np, C)
    x = x + o

    xc = x.reshape(Bn, Hh, Ww, C)
    w = p['conv_w'].reshape(3, 3, 1, C)
    co = jax.lax.conv_general_dilated(xc, w, (1, 1), 'SAME', feature_group_count=C,
                                      dimension_numbers=('NHWC', 'HWIO', 'NHWC'))
    co = co * p['bn_scale'][0] + p['bn_shift'][0]
    x = co.reshape(Bn, Np, C)

    mean = x.mean(-1, keepdims=True)
    var = ((x - mean) ** 2).mean(-1, keepdims=True)
    xn = (x - mean) / jnp.sqrt(var + LN_EPS) * p['mlp_ln_g'][0] + p['mlp_ln_b'][0]
    h = xn @ p['w1'] + p['b1'][0]
    h = 0.5 * h * (1.0 + jax.lax.erf(h * 0.7071067811865476))
    y = h @ p['w2'] + p['b2'][0]
    return x + y


if __name__ == "__main__":
    key = jax.random.PRNGKey(0)
    kx, kp = jax.random.split(key)
    x = jax.random.normal(kx, (B, N_TOK, DIM), dtype=jnp.float32)
    params = make_params(kp)

    out = jax.jit(tinyvit_block_forward)(x, params)
    out = jax.block_until_ready(out)

    ref = reference_forward(x, params)
    assert out.shape == (B, N_TOK, DIM)
    assert bool(jnp.allclose(out, ref, atol=2e-2, rtol=2e-2)), "mismatch vs reference"
    print("KERNEL_OK")
</pallas_src>

<mosaic_0001>
module attributes {stable_mosaic.version = 11 : i64} {
  func.func @fused_block_kernel(%arg0: i32, %arg1: memref<1x64x32xf32, #tpu.memory_space<vmem>>, %arg2: memref<4x64x64xf32, #tpu.memory_space<vmem>>, %arg3: memref<1x32xf32, #tpu.memory_space<vmem>>, %arg4: memref<1x32xf32, #tpu.memory_space<vmem>>, %arg5: memref<32x32xf32, #tpu.memory_space<vmem>>, %arg6: memref<32x32xf32, #tpu.memory_space<vmem>>, %arg7: memref<32x32xf32, #tpu.memory_space<vmem>>, %arg8: memref<1x32xf32, #tpu.memory_space<vmem>>, %arg9: memref<1x32xf32, #tpu.memory_space<vmem>>, %arg10: memref<1x32xf32, #tpu.memory_space<vmem>>, %arg11: memref<32x32xf32, #tpu.memory_space<vmem>>, %arg12: memref<1x32xf32, #tpu.memory_space<vmem>>, %arg13: memref<9x32xf32, #tpu.memory_space<vmem>>, %arg14: memref<1x32xf32, #tpu.memory_space<vmem>>, %arg15: memref<1x32xf32, #tpu.memory_space<vmem>>, %arg16: memref<1x32xf32, #tpu.memory_space<vmem>>, %arg17: memref<1x32xf32, #tpu.memory_space<vmem>>, %arg18: memref<32x128xf32, #tpu.memory_space<vmem>>, %arg19: memref<1x128xf32, #tpu.memory_space<vmem>>, %arg20: memref<128x32xf32, #tpu.memory_space<vmem>>, %arg21: memref<1x32xf32, #tpu.memory_space<vmem>>, %arg22: memref<1x64x32xf32, #tpu.memory_space<vmem>>, %arg23: memref<10x10x32xf32, #tpu.memory_space<vmem>>) attributes {dimension_semantics = [#tpu.dimension_semantics<parallel>], iteration_bounds = array<i64: 2>, scalar_prefetch = 0 : i64, scratch_operands = 1 : i64, tpu.core_type = #tpu.core_type<tc>, window_params = [{transform_indices = @transform_0, window_bounds = array<i64: 1, 64, 32>}, {pipeline_mode = #tpu.pipeline_mode<synchronous>, transform_indices = @transform_1, window_bounds = array<i64: 4, 64, 64>}, {pipeline_mode = #tpu.pipeline_mode<synchronous>, transform_indices = @transform_2, window_bounds = array<i64: 1, 32>}, {pipeline_mode = #tpu.pipeline_mode<synchronous>, transform_indices = @transform_3, window_bounds = array<i64: 1, 32>}, {pipeline_mode = #tpu.pipeline_mode<synchronous>, transform_indices = @transform_4, window_bounds = array<i64: 32, 32>}, {pipeline_mode = #tpu.pipeline_mode<synchronous>, transform_indices = @transform_5, window_bounds = array<i64: 32, 32>}, {pipeline_mode = #tpu.pipeline_mode<synchronous>, transform_indices = @transform_6, window_bounds = array<i64: 32, 32>}, {pipeline_mode = #tpu.pipeline_mode<synchronous>, transform_indices = @transform_7, window_bounds = array<i64: 1, 32>}, {pipeline_mode = #tpu.pipeline_mode<synchronous>, transform_indices = @transform_8, window_bounds = array<i64: 1, 32>}, {pipeline_mode = #tpu.pipeline_mode<synchronous>, transform_indices = @transform_9, window_bounds = array<i64: 1, 32>}, {pipeline_mode = #tpu.pipeline_mode<synchronous>, transform_indices = @transform_10, window_bounds = array<i64: 32, 32>}, {pipeline_mode = #tpu.pipeline_mode<synchronous>, transform_indices = @transform_11, window_bounds = array<i64: 1, 32>}, {pipeline_mode = #tpu.pipeline_mode<synchronous>, transform_indices = @transform_12, window_bounds = array<i64: 9, 32>}, {pipeline_mode = #tpu.pipeline_mode<synchronous>, transform_indices = @transform_13, window_bounds = array<i64: 1, 32>}, {pipeline_mode = #tpu.pipeline_mode<synchronous>, transform_indices = @transform_14, window_bounds = array<i64: 1, 32>}, {pipeline_mode = #tpu.pipeline_mode<synchronous>, transform_indices = @transform_15, window_bounds = array<i64: 1, 32>}, {pipeline_mode = #tpu.pipeline_mode<synchronous>, transform_indices = @transform_16, window_bounds = array<i64: 1, 32>}, {pipeline_mode = #tpu.pipeline_mode<synchronous>, transform_indices = @transform_17, window_bounds = array<i64: 32, 128>}, {pipeline_mode = #tpu.pipeline_mode<synchronous>, transform_indices = @transform_18, window_bounds = array<i64: 1, 128>}, {pipeline_mode = #tpu.pipeline_mode<synchronous>, transform_indices = @transform_19, window_bounds = array<i64: 128, 32>}, {pipeline_mode = #tpu.pipeline_mode<synchronous>, transform_indices = @transform_20, window_bounds = array<i64: 1, 32>}, {transform_indices = @transform_21, window_bounds = array<i64: 1, 64, 32>}]} {
    %c0 = arith.constant 0 : index
    %c0_0 = arith.constant 0 : index
    %c0_1 = arith.constant 0 : index
    %0 = vector.load %arg1[%c0, %c0_0, %c0_1] : memref<1x64x32xf32, #tpu.memory_space<vmem>>, vector<1x64x32xf32>
    %1 = vector.shape_cast %0 : vector<1x64x32xf32> to vector<64x32xf32>
    %c0_2 = arith.constant 0 : index
    %c0_3 = arith.constant 0 : index
    %2 = vector.load %arg3[%c0_2, %c0_3] : memref<1x32xf32, #tpu.memory_space<vmem>>, vector<1x32xf32>
    %c0_4 = arith.constant 0 : index
    %c0_5 = arith.constant 0 : index
    %3 = vector.load %arg4[%c0_4, %c0_5] : memref<1x32xf32, #tpu.memory_space<vmem>>, vector<1x32xf32>
    %cst = arith.constant dense<0.000000e+00> : vector<64xf32>
    %4 = vector.multi_reduction <add>, %1, %cst [1] : vector<64x32xf32> to vector<64xf32>
    %5 = vector.shape_cast %4 : vector<64xf32> to vector<64x1xf32>
    %cst_6 = arith.constant 3.200000e+01 : f32
    %6 = vector.broadcast %cst_6 : f32 to vector<64x1xf32>
    %7 = arith.divf %5, %6 : vector<64x1xf32>
    %8 = vector.broadcast %7 : vector<64x1xf32> to vector<64x32xf32>
    %9 = arith.subf %1, %8 : vector<64x32xf32>
    %10 = arith.mulf %9, %9 : vector<64x32xf32>
    %cst_7 = arith.constant dense<0.000000e+00> : vector<64xf32>
    %11 = vector.multi_reduction <add>, %10, %cst_7 [1] : vector<64x32xf32> to vector<64xf32>
    %12 = vector.shape_cast %11 : vector<64xf32> to vector<64x1xf32>
    %cst_8 = arith.constant 3.200000e+01 : f32
    %13 = vector.broadcast %cst_8 : f32 to vector<64x1xf32>
    %14 = arith.divf %12, %13 : vector<64x1xf32>
    %15 = vector.broadcast %7 : vector<64x1xf32> to vector<64x32xf32>
    %16 = arith.subf %1, %15 : vector<64x32xf32>
    %cst_9 = arith.constant 9.99999974E-6 : f32
    %17 = vector.broadcast %cst_9 : f32 to vector<64x1xf32>
    %18 = arith.addf %14, %17 : vector<64x1xf32>
    %19 = math.rsqrt %18 : vector<64x1xf32>
    %20 = vector.broadcast %19 : vector<64x1xf32> to vector<64x32xf32>
    %21 = arith.mulf %16, %20 : vector<64x32xf32>
    %22 = vector.broadcast %2 : vector<1x32xf32> to vector<64x32xf32>
    %23 = arith.mulf %21, %22 : vector<64x32xf32>
    %24 = vector.broadcast %3 : vector<1x32xf32> to vector<64x32xf32>
    %25 = arith.addf %23, %24 : vector<64x32xf32>
    %26 = arith.truncf %25 : vector<64x32xf32> to vector<64x32xbf16>
    %c0_10 = arith.constant 0 : index
    %c0_11 = arith.constant 0 : index
    %27 = vector.load %arg5[%c0_10, %c0_11] : memref<32x32xf32, #tpu.memory_space<vmem>>, vector<32x32xf32>
    %28 = arith.truncf %27 : vector<32x32xf32> to vector<32x32xbf16>
    %cst_12 = arith.constant dense<0.000000e+00> : vector<64x32xf32>
    %29 = tpu.matmul %26, %28, %cst_12 {dimension_numbers = #tpu.dot_dimension_numbers<[1], [0], [0], [1], [0, 0, 1, 1], [], []>} : vector<64x32xbf16>, vector<32x32xbf16>, vector<64x32xf32> -> vector<64x32xf32>
    %c0_13 = arith.constant 0 : index
    %c0_14 = arith.constant 0 : index
    %30 = vector.load %arg8[%c0_13, %c0_14] : memref<1x32xf32, #tpu.memory_space<vmem>>, vector<1x32xf32>
    %31 = vector.broadcast %30 : vector<1x32xf32> to vector<64x32xf32>
    %32 = arith.addf %29, %31 : vector<64x32xf32>
    %c0_15 = arith.constant 0 : index
    %c0_16 = arith.constant 0 : index
    %33 = vector.load %arg6[%c0_15, %c0_16] : memref<32x32xf32, #tpu.memory_space<vmem>>, vector<32x32xf32>
    %34 = arith.truncf %33 : vector<32x32xf32> to vector<32x32xbf16>
    %cst_17 = arith.constant dense<0.000000e+00> : vector<64x32xf32>
    %35 = tpu.matmul %26, %34, %cst_17 {dimension_numbers = #tpu.dot_dimension_numbers<[1], [0], [0], [1], [0, 0, 1, 1], [], []>} : vector<64x32xbf16>, vector<32x32xbf16>, vector<64x32xf32> -> vector<64x32xf32>
    %c0_18 = arith.constant 0 : index
    %c0_19 = arith.constant 0 : index
    %36 = vector.load %arg9[%c0_18, %c0_19] : memref<1x32xf32, #tpu.memory_space<vmem>>, vector<1x32xf32>
    %37 = vector.broadcast %36 : vector<1x32xf32> to vector<64x32xf32>
    %38 = arith.addf %35, %37 : vector<64x32xf32>
    %c0_20 = arith.constant 0 : index
    %c0_21 = arith.constant 0 : index
    %39 = vector.load %arg7[%c0_20, %c0_21] : memref<32x32xf32, #tpu.memory_space<vmem>>, vector<32x32xf32>
    %40 = arith.truncf %39 : vector<32x32xf32> to vector<32x32xbf16>
    %cst_22 = arith.constant dense<0.000000e+00> : vector<64x32xf32>
    %41 = tpu.matmul %26, %40, %cst_22 {dimension_numbers = #tpu.dot_dimension_numbers<[1], [0], [0], [1], [0, 0, 1, 1], [], []>} : vector<64x32xbf16>, vector<32x32xbf16>, vector<64x32xf32> -> vector<64x32xf32>
    %c0_23 = arith.constant 0 : index
    %c0_24 = arith.constant 0 : index
    %42 = vector.load %arg10[%c0_23, %c0_24] : memref<1x32xf32, #tpu.memory_space<vmem>>, vector<1x32xf32>
    %43 = vector.broadcast %42 : vector<1x32xf32> to vector<64x32xf32>
    %44 = arith.addf %41, %43 : vector<64x32xf32>
    %c0_25 = arith.constant 0 : index
    %c0_26 = arith.constant 0 : index
    %45 = vector.load %arg11[%c0_25, %c0_26] : memref<32x32xf32, #tpu.memory_space<vmem>>, vector<32x32xf32>
    %cst_27 = arith.constant 0.000000e+00 : f32
    %46 = vector.broadcast %cst_27 : f32 to vector<64x32xf32>
    %47 = vector.extract_strided_slice %32 {offsets = [0, 0], sizes = [64, 8], strides = [1, 1]} : vector<64x32xf32> to vector<64x8xf32>
    %48 = arith.truncf %47 : vector<64x8xf32> to vector<64x8xbf16>
    %49 = vector.extract_strided_slice %38 {offsets = [0, 0], sizes = [64, 8], strides = [1, 1]} : vector<64x32xf32> to vector<64x8xf32>
    %50 = arith.truncf %49 : vector<64x8xf32> to vector<64x8xbf16>
    %51 = vector.extract_strided_slice %44 {offsets = [0, 0], sizes = [64, 8], strides = [1, 1]} : vector<64x32xf32> to vector<64x8xf32>
    %52 = arith.truncf %51 : vector<64x8xf32> to vector<64x8xbf16>
    %cst_28 = arith.constant dense<0.000000e+00> : vector<64x64xf32>
    %53 = tpu.matmul %48, %50, %cst_28 {dimension_numbers = #tpu.dot_dimension_numbers<[1], [1], [0], [0], [0, 0, 1, 0], [], []>} : vector<64x8xbf16>, vector<64x8xbf16>, vector<64x64xf32> -> vector<64x64xf32>
    %cst_29 = arith.constant 0.353553385 : f32
    %54 = vector.broadcast %cst_29 : f32 to vector<64x64xf32>
    %55 = arith.mulf %53, %54 : vector<64x64xf32>
    %c0_30 = arith.constant 0 : index
    %c0_31 = arith.constant 0 : index
    %c0_32 = arith.constant 0 : index
    %56 = vector.load %arg2[%c0_30, %c0_31, %c0_32] : memref<4x64x64xf32, #tpu.memory_space<vmem>>, vector<1x64x64xf32>
    %57 = vector.shape_cast %56 : vector<1x64x64xf32> to vector<64x64xf32>
    %58 = arith.addf %55, %57 : vector<64x64xf32>
    %cst_33 = arith.constant dense<0xFF800000> : vector<64xf32>
    %59 = vector.multi_reduction <maximumf>, %58, %cst_33 [1] : vector<64x64xf32> to vector<64xf32>
    %60 = vector.shape_cast %59 : vector<64xf32> to vector<64x1xf32>
    %61 = vector.broadcast %60 : vector<64x1xf32> to vector<64x64xf32>
    %62 = arith.subf %58, %61 : vector<64x64xf32>
    %63 = math.exp %62 : vector<64x64xf32>
    %cst_34 = arith.constant dense<0.000000e+00> : vector<64xf32>
    %64 = vector.multi_reduction <add>, %63, %cst_34 [1] : vector<64x64xf32> to vector<64xf32>
    %65 = vector.shape_cast %64 : vector<64xf32> to vector<64x1xf32>
    %66 = tpu.reciprocal %65 {approx = true} : vector<64x1xf32> -> vector<64x1xf32>
    %67 = vector.broadcast %66 : vector<64x1xf32> to vector<64x64xf32>
    %68 = arith.mulf %63, %67 : vector<64x64xf32>
    %69 = arith.truncf %68 : vector<64x64xf32> to vector<64x64xbf16>
    %cst_35 = arith.constant dense<0.000000e+00> : vector<64x8xf32>
    %70 = tpu.matmul %69, %52, %cst_35 {dimension_numbers = #tpu.dot_dimension_numbers<[1], [0], [0], [1], [0, 0, 1, 1], [], []>} : vector<64x64xbf16>, vector<64x8xbf16>, vector<64x8xf32> -> vector<64x8xf32>
    %71 = arith.truncf %70 : vector<64x8xf32> to vector<64x8xbf16>
    %72 = vector.extract_strided_slice %45 {offsets = [0, 0], sizes = [8, 32], strides = [1, 1]} : vector<32x32xf32> to vector<8x32xf32>
    %73 = arith.truncf %72 : vector<8x32xf32> to vector<8x32xbf16>
    %cst_36 = arith.constant dense<0.000000e+00> : vector<64x32xf32>
    %74 = tpu.matmul %71, %73, %cst_36 {dimension_numbers = #tpu.dot_dimension_numbers<[1], [0], [0], [1], [0, 0, 1, 1], [], []>} : vector<64x8xbf16>, vector<8x32xbf16>, vector<64x32xf32> -> vector<64x32xf32>
    %75 = arith.addf %46, %74 : vector<64x32xf32>
    %76 = vector.extract_strided_slice %32 {offsets = [0, 8], sizes = [64, 8], strides = [1, 1]} : vector<64x32xf32> to vector<64x8xf32>
    %77 = arith.truncf %76 : vector<64x8xf32> to vector<64x8xbf16>
    %78 = vector.extract_strided_slice %38 {offsets = [0, 8], sizes = [64, 8], strides = [1, 1]} : vector<64x32xf32> to vector<64x8xf32>
    %79 = arith.truncf %78 : vector<64x8xf32> to vector<64x8xbf16>
    %80 = vector.extract_strided_slice %44 {offsets = [0, 8], sizes = [64, 8], strides = [1, 1]} : vector<64x32xf32> to vector<64x8xf32>
    %81 = arith.truncf %80 : vector<64x8xf32> to vector<64x8xbf16>
    %cst_37 = arith.constant dense<0.000000e+00> : vector<64x64xf32>
    %82 = tpu.matmul %77, %79, %cst_37 {dimension_numbers = #tpu.dot_dimension_numbers<[1], [1], [0], [0], [0, 0, 1, 0], [], []>} : vector<64x8xbf16>, vector<64x8xbf16>, vector<64x64xf32> -> vector<64x64xf32>
    %cst_38 = arith.constant 0.353553385 : f32
    %83 = vector.broadcast %cst_38 : f32 to vector<64x64xf32>
    %84 = arith.mulf %82, %83 : vector<64x64xf32>
    %c1 = arith.constant 1 : index
    %c0_39 = arith.constant 0 : index
    %c0_40 = arith.constant 0 : index
    %85 = vector.load %arg2[%c1, %c0_39, %c0_40] : memref<4x64x64xf32, #tpu.memory_space<vmem>>, vector<1x64x64xf32>
    %86 = vector.shape_cast %85 : vector<1x64x64xf32> to vector<64x64xf32>
    %87 = arith.addf %84, %86 : vector<64x64xf32>
    %cst_41 = arith.constant dense<0xFF800000> : vector<64xf32>
    %88 = vector.multi_reduction <maximumf>, %87, %cst_41 [1] : vector<64x64xf32> to vector<64xf32>
    %89 = vector.shape_cast %88 : vector<64xf32> to vector<64x1xf32>
    %90 = vector.broadcast %89 : vector<64x1xf32> to vector<64x64xf32>
    %91 = arith.subf %87, %90 : vector<64x64xf32>
    %92 = math.exp %91 : vector<64x64xf32>
    %cst_42 = arith.constant dense<0.000000e+00> : vector<64xf32>
    %93 = vector.multi_reduction <add>, %92, %cst_42 [1] : vector<64x64xf32> to vector<64xf32>
    %94 = vector.shape_cast %93 : vector<64xf32> to vector<64x1xf32>
    %95 = tpu.reciprocal %94 {approx = true} : vector<64x1xf32> -> vector<64x1xf32>
    %96 = vector.broadcast %95 : vector<64x1xf32> to vector<64x64xf32>
    %97 = arith.mulf %92, %96 : vector<64x64xf32>
    %98 = arith.truncf %97 : vector<64x64xf32> to vector<64x64xbf16>
    %cst_43 = arith.constant dense<0.000000e+00> : vector<64x8xf32>
    %99 = tpu.matmul %98, %81, %cst_43 {dimension_numbers = #tpu.dot_dimension_numbers<[1], [0], [0], [1], [0, 0, 1, 1], [], []>} : vector<64x64xbf16>, vector<64x8xbf16>, vector<64x8xf32> -> vector<64x8xf32>
    %100 = arith.truncf %99 : vector<64x8xf32> to vector<64x8xbf16>
    %101 = vector.extract_strided_slice %45 {offsets = [8, 0], sizes = [8, 32], strides = [1, 1]} : vector<32x32xf32> to vector<8x32xf32>
    %102 = arith.truncf %101 : vector<8x32xf32> to vector<8x32xbf16>
    %cst_44 = arith.constant dense<0.000000e+00> : vector<64x32xf32>
    %103 = tpu.matmul %100, %102, %cst_44 {dimension_numbers = #tpu.dot_dimension_numbers<[1], [0], [0], [1], [0, 0, 1, 1], [], []>} : vector<64x8xbf16>, vector<8x32xbf16>, vector<64x32xf32> -> vector<64x32xf32>
    %104 = arith.addf %75, %103 : vector<64x32xf32>
    %105 = vector.extract_strided_slice %32 {offsets = [0, 16], sizes = [64, 8], strides = [1, 1]} : vector<64x32xf32> to vector<64x8xf32>
    %106 = arith.truncf %105 : vector<64x8xf32> to vector<64x8xbf16>
    %107 = vector.extract_strided_slice %38 {offsets = [0, 16], sizes = [64, 8], strides = [1, 1]} : vector<64x32xf32> to vector<64x8xf32>
    %108 = arith.truncf %107 : vector<64x8xf32> to vector<64x8xbf16>
    %109 = vector.extract_strided_slice %44 {offsets = [0, 16], sizes = [64, 8], strides = [1, 1]} : vector<64x32xf32> to vector<64x8xf32>
    %110 = arith.truncf %109 : vector<64x8xf32> to vector<64x8xbf16>
    %cst_45 = arith.constant dense<0.000000e+00> : vector<64x64xf32>
    %111 = tpu.matmul %106, %108, %cst_45 {dimension_numbers = #tpu.dot_dimension_numbers<[1], [1], [0], [0], [0, 0, 1, 0], [], []>} : vector<64x8xbf16>, vector<64x8xbf16>, vector<64x64xf32> -> vector<64x64xf32>
    %cst_46 = arith.constant 0.353553385 : f32
    %112 = vector.broadcast %cst_46 : f32 to vector<64x64xf32>
    %113 = arith.mulf %111, %112 : vector<64x64xf32>
    %c2 = arith.constant 2 : index
    %c0_47 = arith.constant 0 : index
    %c0_48 = arith.constant 0 : index
    %114 = vector.load %arg2[%c2, %c0_47, %c0_48] : memref<4x64x64xf32, #tpu.memory_space<vmem>>, vector<1x64x64xf32>
    %115 = vector.shape_cast %114 : vector<1x64x64xf32> to vector<64x64xf32>
    %116 = arith.addf %113, %115 : vector<64x64xf32>
    %cst_49 = arith.constant dense<0xFF800000> : vector<64xf32>
    %117 = vector.multi_reduction <maximumf>, %116, %cst_49 [1] : vector<64x64xf32> to vector<64xf32>
    %118 = vector.shape_cast %117 : vector<64xf32> to vector<64x1xf32>
    %119 = vector.broadcast %118 : vector<64x1xf32> to vector<64x64xf32>
    %120 = arith.subf %116, %119 : vector<64x64xf32>
    %121 = math.exp %120 : vector<64x64xf32>
    %cst_50 = arith.constant dense<0.000000e+00> : vector<64xf32>
    %122 = vector.multi_reduction <add>, %121, %cst_50 [1] : vector<64x64xf32> to vector<64xf32>
    %123 = vector.shape_cast %122 : vector<64xf32> to vector<64x1xf32>
    %124 = tpu.reciprocal %123 {approx = true} : vector<64x1xf32> -> vector<64x1xf32>
    %125 = vector.broadcast %124 : vector<64x1xf32> to vector<64x64xf32>
    %126 = arith.mulf %121, %125 : vector<64x64xf32>
    %127 = arith.truncf %126 : vector<64x64xf32> to vector<64x64xbf16>
    %cst_51 = arith.constant dense<0.000000e+00> : vector<64x8xf32>
    %128 = tpu.matmul %127, %110, %cst_51 {dimension_numbers = #tpu.dot_dimension_numbers<[1], [0], [0], [1], [0, 0, 1, 1], [], []>} : vector<64x64xbf16>, vector<64x8xbf16>, vector<64x8xf32> -> vector<64x8xf32>
    %129 = arith.truncf %128 : vector<64x8xf32> to vector<64x8xbf16>
    %130 = vector.extract_strided_slice %45 {offsets = [16, 0], sizes = [8, 32], strides = [1, 1]} : vector<32x32xf32> to vector<8x32xf32>
    %131 = arith.truncf %130 : vector<8x32xf32> to vector<8x32xbf16>
    %cst_52 = arith.constant dense<0.000000e+00> : vector<64x32xf32>
    %132 = tpu.matmul %129, %131, %cst_52 {dimension_numbers = #tpu.dot_dimension_numbers<[1], [0], [0], [1], [0, 0, 1, 1], [], []>} : vector<64x8xbf16>, vector<8x32xbf16>, vector<64x32xf32> -> vector<64x32xf32>
    %133 = arith.addf %104, %132 : vector<64x32xf32>
    %134 = vector.extract_strided_slice %32 {offsets = [0, 24], sizes = [64, 8], strides = [1, 1]} : vector<64x32xf32> to vector<64x8xf32>
    %135 = arith.truncf %134 : vector<64x8xf32> to vector<64x8xbf16>
    %136 = vector.extract_strided_slice %38 {offsets = [0, 24], sizes = [64, 8], strides = [1, 1]} : vector<64x32xf32> to vector<64x8xf32>
    %137 = arith.truncf %136 : vector<64x8xf32> to vector<64x8xbf16>
    %138 = vector.extract_strided_slice %44 {offsets = [0, 24], sizes = [64, 8], strides = [1, 1]} : vector<64x32xf32> to vector<64x8xf32>
    %139 = arith.truncf %138 : vector<64x8xf32> to vector<64x8xbf16>
    %cst_53 = arith.constant dense<0.000000e+00> : vector<64x64xf32>
    %140 = tpu.matmul %135, %137, %cst_53 {dimension_numbers = #tpu.dot_dimension_numbers<[1], [1], [0], [0], [0, 0, 1, 0], [], []>} : vector<64x8xbf16>, vector<64x8xbf16>, vector<64x64xf32> -> vector<64x64xf32>
    %cst_54 = arith.constant 0.353553385 : f32
    %141 = vector.broadcast %cst_54 : f32 to vector<64x64xf32>
    %142 = arith.mulf %140, %141 : vector<64x64xf32>
    %c3 = arith.constant 3 : index
    %c0_55 = arith.constant 0 : index
    %c0_56 = arith.constant 0 : index
    %143 = vector.load %arg2[%c3, %c0_55, %c0_56] : memref<4x64x64xf32, #tpu.memory_space<vmem>>, vector<1x64x64xf32>
    %144 = vector.shape_cast %143 : vector<1x64x64xf32> to vector<64x64xf32>
    %145 = arith.addf %142, %144 : vector<64x64xf32>
    %cst_57 = arith.constant dense<0xFF800000> : vector<64xf32>
    %146 = vector.multi_reduction <maximumf>, %145, %cst_57 [1] : vector<64x64xf32> to vector<64xf32>
    %147 = vector.shape_cast %146 : vector<64xf32> to vector<64x1xf32>
    %148 = vector.broadcast %147 : vector<64x1xf32> to vector<64x64xf32>
    %149 = arith.subf %145, %148 : vector<64x64xf32>
    %150 = math.exp %149 : vector<64x64xf32>
    %cst_58 = arith.constant dense<0.000000e+00> : vector<64xf32>
    %151 = vector.multi_reduction <add>, %150, %cst_58 [1] : vector<64x64xf32> to vector<64xf32>
    %152 = vector.shape_cast %151 : vector<64xf32> to vector<64x1xf32>
    %153 = tpu.reciprocal %152 {approx = true} : vector<64x1xf32> -> vector<64x1xf32>
    %154 = vector.broadcast %153 : vector<64x1xf32> to vector<64x64xf32>
    %155 = arith.mulf %150, %154 : vector<64x64xf32>
    %156 = arith.truncf %155 : vector<64x64xf32> to vector<64x64xbf16>
    %cst_59 = arith.constant dense<0.000000e+00> : vector<64x8xf32>
    %157 = tpu.matmul %156, %139, %cst_59 {dimension_numbers = #tpu.dot_dimension_numbers<[1], [0], [0], [1], [0, 0, 1, 1], [], []>} : vector<64x64xbf16>, vector<64x8xbf16>, vector<64x8xf32> -> vector<64x8xf32>
    %158 = arith.truncf %157 : vector<64x8xf32> to vector<64x8xbf16>
    %159 = vector.extract_strided_slice %45 {offsets = [24, 0], sizes = [8, 32], strides = [1, 1]} : vector<32x32xf32> to vector<8x32xf32>
    %160 = arith.truncf %159 : vector<8x32xf32> to vector<8x32xbf16>
    %cst_60 = arith.constant dense<0.000000e+00> : vector<64x32xf32>
    %161 = tpu.matmul %158, %160, %cst_60 {dimension_numbers = #tpu.dot_dimension_numbers<[1], [0], [0], [1], [0, 0, 1, 1], [], []>} : vector<64x8xbf16>, vector<8x32xbf16>, vector<64x32xf32> -> vector<64x32xf32>
    %162 = arith.addf %133, %161 : vector<64x32xf32>
    %163 = arith.addf %1, %162 : vector<64x32xf32>
    %c0_61 = arith.constant 0 : index
    %c0_62 = arith.constant 0 : index
    %164 = vector.load %arg12[%c0_61, %c0_62] : memref<1x32xf32, #tpu.memory_space<vmem>>, vector<1x32xf32>
    %165 = vector.broadcast %164 : vector<1x32xf32> to vector<64x32xf32>
    %166 = arith.addf %163, %165 : vector<64x32xf32>
    %167 = vector.shape_cast %166 : vector<64x32xf32> to vector<8x8x32xf32>
    %cst_63 = arith.constant 0.000000e+00 : f32
    %168 = vector.broadcast %cst_63 : f32 to vector<10x10x32xf32>
    %c0_64 = arith.constant 0 : index
    %c0_65 = arith.constant 0 : index
    %c0_66 = arith.constant 0 : index
    %169 = vector.load %arg23[%c0_64, %c0_65, %c0_66] : memref<10x10x32xf32, #tpu.memory_space<vmem>>, vector<10x10x32xf32>
    tpu.vector_store %arg23[%c0_64, %c0_65, %c0_66], %168 {strides = array<i32>} : memref<10x10x32xf32, #tpu.memory_space<vmem>>, vector<10x10x32xf32>,
    %c1_67 = arith.constant 1 : index
    %c1_68 = arith.constant 1 : index
    %c0_69 = arith.constant 0 : index
    %170 = vector.load %arg23[%c1_67, %c1_68, %c0_69] : memref<10x10x32xf32, #tpu.memory_space<vmem>>, vector<8x8x32xf32>
    tpu.vector_store %arg23[%c1_67, %c1_68, %c0_69], %167 {strides = array<i32>} : memref<10x10x32xf32, #tpu.memory_space<vmem>>, vector<8x8x32xf32>,
    %c0_70 = arith.constant 0 : index
    %c0_71 = arith.constant 0 : index
    %c0_72 = arith.constant 0 : index
    %171 = vector.load %arg23[%c0_70, %c0_71, %c0_72] : memref<10x10x32xf32, #tpu.memory_space<vmem>>, vector<10x10x32xf32>
    %c0_73 = arith.constant 0 : index
    %c0_74 = arith.constant 0 : index
    %172 = vector.load %arg13[%c0_73, %c0_74] : memref<9x32xf32, #tpu.memory_space<vmem>>, vector<9x32xf32>
    %cst_75 = arith.constant 0.000000e+00 : f32
    %173 = vector.broadcast %cst_75 : f32 to vector<8x8x32xf32>
    %174 = vector.extract_strided_slice %172 {offsets = [0, 0], sizes = [1, 32], strides = [1, 1]} : vector<9x32xf32> to vector<1x32xf32>
    %175 = vector.shape_cast %174 : vector<1x32xf32> to vector<1x1x32xf32>
    %176 = vector.extract_strided_slice %171 {offsets = [0, 0, 0], sizes = [8, 8, 32], strides = [1, 1, 1]} : vector<10x10x32xf32> to vector<8x8x32xf32>
    %177 = vector.broadcast %175 : vector<1x1x32xf32> to vector<8x8x32xf32>
    %178 = arith.mulf %176, %177 : vector<8x8x32xf32>
    %179 = arith.addf %173, %178 : vector<8x8x32xf32>
    %180 = vector.extract_strided_slice %172 {offsets = [1, 0], sizes = [1, 32], strides = [1, 1]} : vector<9x32xf32> to vector<1x32xf32>
    %181 = vector.shape_cast %180 : vector<1x32xf32> to vector<1x1x32xf32>
    %182 = vector.extract_strided_slice %171 {offsets = [0, 1, 0], sizes = [8, 8, 32], strides = [1, 1, 1]} : vector<10x10x32xf32> to vector<8x8x32xf32>
    %183 = vector.broadcast %181 : vector<1x1x32xf32> to vector<8x8x32xf32>
    %184 = arith.mulf %182, %183 : vector<8x8x32xf32>
    %185 = arith.addf %179, %184 : vector<8x8x32xf32>
    %186 = vector.extract_strided_slice %172 {offsets = [2, 0], sizes = [1, 32], strides = [1, 1]} : vector<9x32xf32> to vector<1x32xf32>
    %187 = vector.shape_cast %186 : vector<1x32xf32> to vector<1x1x32xf32>
    %188 = vector.extract_strided_slice %171 {offsets = [0, 2, 0], sizes = [8, 8, 32], strides = [1, 1, 1]} : vector<10x10x32xf32> to vector<8x8x32xf32>
    %189 = vector.broadcast %187 : vector<1x1x32xf32> to vector<8x8x32xf32>
    %190 = arith.mulf %188, %189 : vector<8x8x32xf32>
    %191 = arith.addf %185, %190 : vector<8x8x32xf32>
    %192 = vector.extract_strided_slice %172 {offsets = [3, 0], sizes = [1, 32], strides = [1, 1]} : vector<9x32xf32> to vector<1x32xf32>
    %193 = vector.shape_cast %192 : vector<1x32xf32> to vector<1x1x32xf32>
    %194 = vector.extract_strided_slice %171 {offsets = [1, 0, 0], sizes = [8, 8, 32], strides = [1, 1, 1]} : vector<10x10x32xf32> to vector<8x8x32xf32>
    %195 = vector.broadcast %193 : vector<1x1x32xf32> to vector<8x8x32xf32>
    %196 = arith.mulf %194, %195 : vector<8x8x32xf32>
    %197 = arith.addf %191, %196 : vector<8x8x32xf32>
    %198 = vector.extract_strided_slice %172 {offsets = [4, 0], sizes = [1, 32], strides = [1, 1]} : vector<9x32xf32> to vector<1x32xf32>
    %199 = vector.shape_cast %198 : vector<1x32xf32> to vector<1x1x32xf32>
    %200 = vector.extract_strided_slice %171 {offsets = [1, 1, 0], sizes = [8, 8, 32], strides = [1, 1, 1]} : vector<10x10x32xf32> to vector<8x8x32xf32>
    %201 = vector.broadcast %199 : vector<1x1x32xf32> to vector<8x8x32xf32>
    %202 = arith.mulf %200, %201 : vector<8x8x32xf32>
    %203 = arith.addf %197, %202 : vector<8x8x32xf32>
    %204 = vector.extract_strided_slice %172 {offsets = [5, 0], sizes = [1, 32], strides = [1, 1]} : vector<9x32xf32> to vector<1x32xf32>
    %205 = vector.shape_cast %204 : vector<1x32xf32> to vector<1x1x32xf32>
    %206 = vector.extract_strided_slice %171 {offsets = [1, 2, 0], sizes = [8, 8, 32], strides = [1, 1, 1]} : vector<10x10x32xf32> to vector<8x8x32xf32>
    %207 = vector.broadcast %205 : vector<1x1x32xf32> to vector<8x8x32xf32>
    %208 = arith.mulf %206, %207 : vector<8x8x32xf32>
    %209 = arith.addf %203, %208 : vector<8x8x32xf32>
    %210 = vector.extract_strided_slice %172 {offsets = [6, 0], sizes = [1, 32], strides = [1, 1]} : vector<9x32xf32> to vector<1x32xf32>
    %211 = vector.shape_cast %210 : vector<1x32xf32> to vector<1x1x32xf32>
    %212 = vector.extract_strided_slice %171 {offsets = [2, 0, 0], sizes = [8, 8, 32], strides = [1, 1, 1]} : vector<10x10x32xf32> to vector<8x8x32xf32>
    %213 = vector.broadcast %211 : vector<1x1x32xf32> to vector<8x8x32xf32>
    %214 = arith.mulf %212, %213 : vector<8x8x32xf32>
    %215 = arith.addf %209, %214 : vector<8x8x32xf32>
    %216 = vector.extract_strided_slice %172 {offsets = [7, 0], sizes = [1, 32], strides = [1, 1]} : vector<9x32xf32> to vector<1x32xf32>
    %217 = vector.shape_cast %216 : vector<1x32xf32> to vector<1x1x32xf32>
    %218 = vector.extract_strided_slice %171 {offsets = [2, 1, 0], sizes = [8, 8, 32], strides = [1, 1, 1]} : vector<10x10x32xf32> to vector<8x8x32xf32>
    %219 = vector.broadcast %217 : vector<1x1x32xf32> to vector<8x8x32xf32>
    %220 = arith.mulf %218, %219 : vector<8x8x32xf32>
    %221 = arith.addf %215, %220 : vector<8x8x32xf32>
    %222 = vector.extract_strided_slice %172 {offsets = [8, 0], sizes = [1, 32], strides = [1, 1]} : vector<9x32xf32> to vector<1x32xf32>
    %223 = vector.shape_cast %222 : vector<1x32xf32> to vector<1x1x32xf32>
    %224 = vector.extract_strided_slice %171 {offsets = [2, 2, 0], sizes = [8, 8, 32], strides = [1, 1, 1]} : vector<10x10x32xf32> to vector<8x8x32xf32>
    %225 = vector.broadcast %223 : vector<1x1x32xf32> to vector<8x8x32xf32>
    %226 = arith.mulf %224, %225 : vector<8x8x32xf32>
    %227 = arith.addf %221, %226 : vector<8x8x32xf32>
    %c0_76 = arith.constant 0 : index
    %c0_77 = arith.constant 0 : index
    %228 = vector.load %arg14[%c0_76, %c0_77] : memref<1x32xf32, #tpu.memory_space<vmem>>, vector<1x32xf32>
    %229 = vector.shape_cast %228 : vector<1x32xf32> to vector<1x1x32xf32>
    %230 = vector.broadcast %229 : vector<1x1x32xf32> to vector<8x8x32xf32>
    %231 = arith.mulf %227, %230 : vector<8x8x32xf32>
    %c0_78 = arith.constant 0 : index
    %c0_79 = arith.constant 0 : index
    %232 = vector.load %arg15[%c0_78, %c0_79] : memref<1x32xf32, #tpu.memory_space<vmem>>, vector<1x32xf32>
    %233 = vector.shape_cast %232 : vector<1x32xf32> to vector<1x1x32xf32>
    %234 = vector.broadcast %233 : vector<1x1x32xf32> to vector<8x8x32xf32>
    %235 = arith.addf %231, %234 : vector<8x8x32xf32>
    %236 = vector.shape_cast %235 : vector<8x8x32xf32> to vector<64x32xf32>
    %c0_80 = arith.constant 0 : index
    %c0_81 = arith.constant 0 : index
    %237 = vector.load %arg16[%c0_80, %c0_81] : memref<1x32xf32, #tpu.memory_space<vmem>>, vector<1x32xf32>
    %c0_82 = arith.constant 0 : index
    %c0_83 = arith.constant 0 : index
    %238 = vector.load %arg17[%c0_82, %c0_83] : memref<1x32xf32, #tpu.memory_space<vmem>>, vector<1x32xf32>
    %cst_84 = arith.constant dense<0.000000e+00> : vector<64xf32>
    %239 = vector.multi_reduction <add>, %236, %cst_84 [1] : vector<64x32xf32> to vector<64xf32>
    %240 = vector.shape_cast %239 : vector<64xf32> to vector<64x1xf32>
    %cst_85 = arith.constant 3.200000e+01 : f32
    %241 = vector.broadcast %cst_85 : f32 to vector<64x1xf32>
    %242 = arith.divf %240, %241 : vector<64x1xf32>
    %243 = vector.broadcast %242 : vector<64x1xf32> to vector<64x32xf32>
    %244 = arith.subf %236, %243 : vector<64x32xf32>
    %245 = arith.mulf %244, %244 : vector<64x32xf32>
    %cst_86 = arith.constant dense<0.000000e+00> : vector<64xf32>
    %246 = vector.multi_reduction <add>, %245, %cst_86 [1] : vector<64x32xf32> to vector<64xf32>
    %247 = vector.shape_cast %246 : vector<64xf32> to vector<64x1xf32>
    %cst_87 = arith.constant 3.200000e+01 : f32
    %248 = vector.broadcast %cst_87 : f32 to vector<64x1xf32>
    %249 = arith.divf %247, %248 : vector<64x1xf32>
    %250 = vector.broadcast %242 : vector<64x1xf32> to vector<64x32xf32>
    %251 = arith.subf %236, %250 : vector<64x32xf32>
    %cst_88 = arith.constant 9.99999974E-6 : f32
    %252 = vector.broadcast %cst_88 : f32 to vector<64x1xf32>
    %253 = arith.addf %249, %252 : vector<64x1xf32>
    %254 = math.rsqrt %253 : vector<64x1xf32>
    %255 = vector.broadcast %254 : vector<64x1xf32> to vector<64x32xf32>
    %256 = arith.mulf %251, %255 : vector<64x32xf32>
    %257 = vector.broadcast %237 : vector<1x32xf32> to vector<64x32xf32>
    %258 = arith.mulf %256, %257 : vector<64x32xf32>
    %259 = vector.broadcast %238 : vector<1x32xf32> to vector<64x32xf32>
    %260 = arith.addf %258, %259 : vector<64x32xf32>
    %261 = arith.truncf %260 : vector<64x32xf32> to vector<64x32xbf16>
    %c0_89 = arith.constant 0 : index
    %c0_90 = arith.constant 0 : index
    %262 = vector.load %arg18[%c0_89, %c0_90] : memref<32x128xf32, #tpu.memory_space<vmem>>, vector<32x128xf32>
    %263 = arith.truncf %262 : vector<32x128xf32> to vector<32x128xbf16>
    %cst_91 = arith.constant dense<0.000000e+00> : vector<64x128xf32>
    %264 = tpu.matmul %261, %263, %cst_91 {dimension_numbers = #tpu.dot_dimension_numbers<[1], [0], [0], [1], [0, 0, 1, 1], [], []>} : vector<64x32xbf16>, vector<32x128xbf16>, vector<64x128xf32> -> vector<64x128xf32>
    %c0_92 = arith.constant 0 : index
    %c0_93 = arith.constant 0 : index
    %265 = vector.load %arg19[%c0_92, %c0_93] : memref<1x128xf32, #tpu.memory_space<vmem>>, vector<1x128xf32>
    %266 = vector.broadcast %265 : vector<1x128xf32> to vector<64x128xf32>
    %267 = arith.addf %264, %266 : vector<64x128xf32>
    %cst_94 = arith.constant 5.000000e-01 : f32
    %268 = vector.broadcast %cst_94 : f32 to vector<64x128xf32>
    %269 = arith.mulf %268, %267 : vector<64x128xf32>
    %cst_95 = arith.constant 0.707106769 : f32
    %270 = vector.broadcast %cst_95 : f32 to vector<64x128xf32>
    %271 = arith.mulf %267, %270 : vector<64x128xf32>
    %272 = math.erf %271 : vector<64x128xf32>
    %cst_96 = arith.constant 1.000000e+00 : f32
    %273 = vector.broadcast %cst_96 : f32 to vector<64x128xf32>
    %274 = arith.addf %273, %272 : vector<64x128xf32>
    %275 = arith.mulf %269, %274 : vector<64x128xf32>
    %276 = arith.truncf %275 : vector<64x128xf32> to vector<64x128xbf16>
    %c0_97 = arith.constant 0 : index
    %c0_98 = arith.constant 0 : index
    %277 = vector.load %arg20[%c0_97, %c0_98] : memref<128x32xf32, #tpu.memory_space<vmem>>, vector<128x32xf32>
    %278 = arith.truncf %277 : vector<128x32xf32> to vector<128x32xbf16>
    %cst_99 = arith.constant dense<0.000000e+00> : vector<64x32xf32>
    %279 = tpu.matmul %276, %278, %cst_99 {dimension_numbers = #tpu.dot_dimension_numbers<[1], [0], [0], [1], [0, 0, 1, 1], [], []>} : vector<64x128xbf16>, vector<128x32xbf16>, vector<64x32xf32> -> vector<64x32xf32>
    %c0_100 = arith.constant 0 : index
    %c0_101 = arith.constant 0 : index
    %280 = vector.load %arg21[%c0_100, %c0_101] : memref<1x32xf32, #tpu.memory_space<vmem>>, vector<1x32xf32>
    %281 = vector.broadcast %280 : vector<1x32xf32> to vector<64x32xf32>
    %282 = arith.addf %279, %281 : vector<64x32xf32>
    %283 = arith.addf %236, %282 : vector<64x32xf32>
    %c0_102 = arith.constant 0 : index
    %c0_103 = arith.constant 0 : index
    %c0_104 = arith.constant 0 : index
    %284 = vector.load %arg22[%c0_102, %c0_103, %c0_104] : memref<1x64x32xf32, #tpu.memory_space<vmem>>, vector<1x64x32xf32>
    %285 = vector.shape_cast %284 : vector<1x64x32xf32> to vector<64x32xf32>
    %286 = vector.shape_cast %283 : vector<64x32xf32> to vector<1x64x32xf32>
    tpu.vector_store %arg22[%c0_102, %c0_103, %c0_104], %286 {strides = array<i32>} : memref<1x64x32xf32, #tpu.memory_space<vmem>>, vector<1x64x32xf32>,
    return
  }
  func.func @transform_0(%arg0: i32) -> (i32, i32, i32) {
    %c0_i32 = arith.constant 0 : i32
    %c0_i32_0 = arith.constant 0 : i32
    %c0_i32_1 = arith.constant 0 : i32
    return %arg0, %c0_i32, %c0_i32_0 : i32, i32, i32
  }
  func.func @transform_1(%arg0: i32) -> (i32, i32, i32) {
    %c0_i32 = arith.constant 0 : i32
    %c0_i32_0 = arith.constant 0 : i32
    %c0_i32_1 = arith.constant 0 : i32
    %c0_i32_2 = arith.constant 0 : i32
    return %c0_i32, %c0_i32_0, %c0_i32_1 : i32, i32, i32
  }
  func.func @transform_2(%arg0: i32) -> (i32, i32) {
    %c0_i32 = arith.constant 0 : i32
    %c0_i32_0 = arith.constant 0 : i32
    %c0_i32_1 = arith.constant 0 : i32
    return %c0_i32, %c0_i32_0 : i32, i32
  }
  func.func @transform_3(%arg0: i32) -> (i32, i32) {
    %c0_i32 = arith.constant 0 : i32
    %c0_i32_0 = arith.constant 0 : i32
    %c0_i32_1 = arith.constant 0 : i32
    return %c0_i32, %c0_i32_0 : i32, i32
  }
  func.func @transform_4(%arg0: i32) -> (i32, i32) {
    %c0_i32 = arith.constant 0 : i32
    %c0_i32_0 = arith.constant 0 : i32
    %c0_i32_1 = arith.constant 0 : i32
    return %c0_i32, %c0_i32_0 : i32, i32
  }
  func.func @transform_5(%arg0: i32) -> (i32, i32) {
    %c0_i32 = arith.constant 0 : i32
    %c0_i32_0 = arith.constant 0 : i32
    %c0_i32_1 = arith.constant 0 : i32
    return %c0_i32, %c0_i32_0 : i32, i32
  }
  func.func @transform_6(%arg0: i32) -> (i32, i32) {
    %c0_i32 = arith.constant 0 : i32
    %c0_i32_0 = arith.constant 0 : i32
    %c0_i32_1 = arith.constant 0 : i32
    return %c0_i32, %c0_i32_0 : i32, i32
  }
  func.func @transform_7(%arg0: i32) -> (i32, i32) {
    %c0_i32 = arith.constant 0 : i32
    %c0_i32_0 = arith.constant 0 : i32
    %c0_i32_1 = arith.constant 0 : i32
    return %c0_i32, %c0_i32_0 : i32, i32
  }
  func.func @transform_8(%arg0: i32) -> (i32, i32) {
    %c0_i32 = arith.constant 0 : i32
    %c0_i32_0 = arith.constant 0 : i32
    %c0_i32_1 = arith.constant 0 : i32
    return %c0_i32, %c0_i32_0 : i32, i32
  }
  func.func @transform_9(%arg0: i32) -> (i32, i32) {
    %c0_i32 = arith.constant 0 : i32
    %c0_i32_0 = arith.constant 0 : i32
    %c0_i32_1 = arith.constant 0 : i32
    return %c0_i32, %c0_i32_0 : i32, i32
  }
  func.func @transform_10(%arg0: i32) -> (i32, i32) {
    %c0_i32 = arith.constant 0 : i32
    %c0_i32_0 = arith.constant 0 : i32
    %c0_i32_1 = arith.constant 0 : i32
    return %c0_i32, %c0_i32_0 : i32, i32
  }
  func.func @transform_11(%arg0: i32) -> (i32, i32) {
    %c0_i32 = arith.constant 0 : i32
    %c0_i32_0 = arith.constant 0 : i32
    %c0_i32_1 = arith.constant 0 : i32
    return %c0_i32, %c0_i32_0 : i32, i32
  }
  func.func @transform_12(%arg0: i32) -> (i32, i32) {
    %c0_i32 = arith.constant 0 : i32
    %c0_i32_0 = arith.constant 0 : i32
    %c0_i32_1 = arith.constant 0 : i32
    return %c0_i32, %c0_i32_0 : i32, i32
  }
  func.func @transform_13(%arg0: i32) -> (i32, i32) {
    %c0_i32 = arith.constant 0 : i32
    %c0_i32_0 = arith.constant 0 : i32
    %c0_i32_1 = arith.constant 0 : i32
    return %c0_i32, %c0_i32_0 : i32, i32
  }
  func.func @transform_14(%arg0: i32) -> (i32, i32) {
    %c0_i32 = arith.constant 0 : i32
    %c0_i32_0 = arith.constant 0 : i32
    %c0_i32_1 = arith.constant 0 : i32
    return %c0_i32, %c0_i32_0 : i32, i32
  }
  func.func @transform_15(%arg0: i32) -> (i32, i32) {
    %c0_i32 = arith.constant 0 : i32
    %c0_i32_0 = arith.constant 0 : i32
    %c0_i32_1 = arith.constant 0 : i32
    return %c0_i32, %c0_i32_0 : i32, i32
  }
  func.func @transform_16(%arg0: i32) -> (i32, i32) {
    %c0_i32 = arith.constant 0 : i32
    %c0_i32_0 = arith.constant 0 : i32
    %c0_i32_1 = arith.constant 0 : i32
    return %c0_i32, %c0_i32_0 : i32, i32
  }
  func.func @transform_17(%arg0: i32) -> (i32, i32) {
    %c0_i32 = arith.constant 0 : i32
    %c0_i32_0 = arith.constant 0 : i32
    %c0_i32_1 = arith.constant 0 : i32
    return %c0_i32, %c0_i32_0 : i32, i32
  }
  func.func @transform_18(%arg0: i32) -> (i32, i32) {
    %c0_i32 = arith.constant 0 : i32
    %c0_i32_0 = arith.constant 0 : i32
    %c0_i32_1 = arith.constant 0 : i32
    return %c0_i32, %c0_i32_0 : i32, i32
  }
  func.func @transform_19(%arg0: i32) -> (i32, i32) {
    %c0_i32 = arith.constant 0 : i32
    %c0_i32_0 = arith.constant 0 : i32
    %c0_i32_1 = arith.constant 0 : i32
    return %c0_i32, %c0_i32_0 : i32, i32
  }
  func.func @transform_20(%arg0: i32) -> (i32, i32) {
    %c0_i32 = arith.constant 0 : i32
    %c0_i32_0 = arith.constant 0 : i32
    %c0_i32_1 = arith.constant 0 : i32
    return %c0_i32, %c0_i32_0 : i32, i32
  }
  func.func @transform_21(%arg0: i32) -> (i32, i32, i32) {
    %c0_i32 = arith.constant 0 : i32
    %c0_i32_0 = arith.constant 0 : i32
    %c0_i32_1 = arith.constant 0 : i32
    return %arg0, %c0_i32, %c0_i32_0 : i32, i32, i32
  }
}

</mosaic_0001>

<llo_original>
// kernel: tinyvit_block_forward.1
$region0: #{tinyvit_block_forward.1}
  #allocation0 [shape = 'u32[]', space=smem, size = 0x4, offset = 0x4, fixed_abs, tag = 'smem constant byte address 0x4 - core index']
  #allocation1 [shape = 'u32[144,128]{1,0:T(1,128)}', space=vmem, size = 0x12000, scoped, tag = 'internal scratch']
  #allocation2 [shape = 'f32[10,10,32]{2,1,0:T(8,128)}', space=vmem, size = 0x14000, scoped, tag = 'scratch operand']
  %s0 = inlined_call_operand.vmem [shape: f32[2,64,32], index: 0, kind: input, shape index: {}]
  %s1 = inlined_call_operand.vmem [shape: f32[4,64,64], index: 1, kind: input, shape index: {}]
  %s2 = inlined_call_operand.hbm [shape: f32[1,32], index: 2, kind: input, shape index: {}]
  %s3 = inlined_call_operand.hbm [shape: f32[1,32], index: 3, kind: input, shape index: {}]
  %s4 = inlined_call_operand.vmem [shape: f32[32,32], index: 4, kind: input, shape index: {}]
  %s5 = inlined_call_operand.vmem [shape: f32[32,32], index: 5, kind: input, shape index: {}]
  %s6 = inlined_call_operand.vmem [shape: f32[32,32], index: 6, kind: input, shape index: {}]
  %s7 = inlined_call_operand.hbm [shape: f32[1,32], index: 7, kind: input, shape index: {}]
  %s8 = inlined_call_operand.hbm [shape: f32[1,32], index: 8, kind: input, shape index: {}]
  %s9 = inlined_call_operand.hbm [shape: f32[1,32], index: 9, kind: input, shape index: {}]
  %s10 = inlined_call_operand.hbm [shape: f32[32,32], index: 10, kind: input, shape index: {}]
  %s11 = inlined_call_operand.hbm [shape: f32[1,32], index: 11, kind: input, shape index: {}]
  %s12 = inlined_call_operand.hbm [shape: f32[9,32], index: 12, kind: input, shape index: {}]
  %s13 = inlined_call_operand.hbm [shape: f32[1,32], index: 13, kind: input, shape index: {}]
  %s14 = inlined_call_operand.hbm [shape: f32[1,32], index: 14, kind: input, shape index: {}]
  %s15 = inlined_call_operand.hbm [shape: f32[1,32], index: 15, kind: input, shape index: {}]
  %s16 = inlined_call_operand.hbm [shape: f32[1,32], index: 16, kind: input, shape index: {}]
  %s17 = inlined_call_operand.hbm [shape: f32[32,128], index: 17, kind: input, shape index: {}]
  %s18 = inlined_call_operand.hbm [shape: f32[1,128], index: 18, kind: input, shape index: {}]
  %s19 = inlined_call_operand.vmem [shape: f32[128,32], index: 19, kind: input, shape index: {}]
  %s20 = inlined_call_operand.hbm [shape: f32[1,32], index: 20, kind: input, shape index: {}]
  %s21 = inlined_call_operand.vmem [shape: f32[2,64,32], index: 21, kind: output, shape index: {}]
  %s22 = sld [smem:[#allocation0]]
  $region177: #{tinyvit_block_forward.1} parent=0
    _
  %s24 = ssub.s32 1, %s22
  %s25 = scalar_select 0, %s24, %s22
  $region1: #{tinyvit_block_forward.1} parent=0
    #allocation3 [shape = 'u8[512]{0}', space=vmem, size = 0x400, scoped, tag = 'input window, operand 2, single buffered']
    #allocation4 [shape = 's32[2]{0}', space=sflag, size = 0x8, scoped, tag = 'scoped memory for tinyvit_block_forward.1']
    #allocation5 [shape = 'u8[512]{0}', space=vmem, size = 0x400, scoped, tag = 'input window, operand 3, single buffered']
    #allocation6 [shape = 's32[1]{0}', space=sflag, size = 0x4, scoped, tag = 'scoped memory for tinyvit_block_forward.1']
    #allocation7 [shape = 'u8[512]{0}', space=vmem, size = 0x400, scoped, tag = 'input window, operand 7, single buffered']
    #allocation8 [shape = 'u8[512]{0}', space=vmem, size = 0x400, scoped, tag = 'input window, operand 8, single buffered']
    #allocation9 [shape = 's32[1]{0}', space=sflag, size = 0x4, scoped, tag = 'scoped memory for tinyvit_block_forward.1']
    #allocation10 [shape = 'u8[512]{0}', space=vmem, size = 0x400, scoped, tag = 'input window, operand 9, single buffered']
    #allocation11 [shape = 'u8[16384]{0}', space=vmem, size = 0x4000, scoped, tag = 'input window, operand 10, single buffered']
    #allocation12 [shape = 's32[1]{0}', space=sflag, size = 0x4, scoped, tag = 'scoped memory for tinyvit_block_forward.1']
    #allocation13 [shape = 'u8[512]{0}', space=vmem, size = 0x400, scoped, tag = 'input window, operand 11, single buffered']
    #allocation14 [shape = 'u8[8192]{0}', space=vmem, size = 0x2000, scoped, tag = 'input window, operand 12, single buffered']
    #allocation15 [shape = 's32[1]{0}', space=sflag, size = 0x4, scoped, tag = 'scoped memory for tinyvit_block_forward.1']
    #allocation16 [shape = 'u8[512]{0}', space=vmem, size = 0x400, scoped, tag = 'input window, operand 13, single buffered']
    #allocation17 [shape = 'u8[512]{0}', space=vmem, size = 0x400, scoped, tag = 'input window, operand 14, single buffered']
    #allocation18 [shape = 's32[1]{0}', space=sflag, size = 0x4, scoped, tag = 'scoped memory for tinyvit_block_forward.1']
    #allocation19 [shape = 'u8[512]{0}', space=vmem, size = 0x400, scoped, tag = 'input window, operand 15, single buffered']
    #allocation20 [shape = 'u8[512]{0}', space=vmem, size = 0x400, scoped, tag = 'input window, operand 16, single buffered']
    #allocation21 [shape = 's32[1]{0}', space=sflag, size = 0x4, scoped, tag = 'scoped memory for tinyvit_block_forward.1']
    #allocation22 [shape = 'u8[16384]{0}', space=vmem, size = 0x4000, scoped, tag = 'input window, operand 17, single buffered']
    #allocation23 [shape = 'u8[512]{0}', space=vmem, size = 0x400, scoped, tag = 'input window, operand 18, single buffered']
    #allocation24 [shape = 's32[1]{0}', space=sflag, size = 0x4, scoped, tag = 'scoped memory for tinyvit_block_forward.1']
    #allocation25 [shape = 'u8[512]{0}', space=vmem, size = 0x400, scoped, tag = 'input window, operand 20, single buffered']
    %26 = vsyncpa [#allocation4], 0
    %27 = vsyncpa [#allocation6], 0
    %28 = vsyncpa [#allocation9], 0
    %29 = vsyncpa [#allocation12], 0
    %30 = vsyncpa [#allocation15], 0
    %31 = vsyncpa [#allocation18], 0
    %32 = vsyncpa [#allocation21], 0
    %33 = vsyncpa [#allocation24], 0
    loop: start=0, step=1, limit=4
    $region2: #{tinyvit_block_forward.1} parent=1 // loop_pre_header
      _
    $region3: #{tinyvit_block_forward.1} parent=1 // loop_header
      %s35 = sphi 0, %s39
      %p36 = scmp.ge.s32.totalorder %s35, 4
      %s45 = sphi 0, %s47
      %s48 = sphi 0, %s45
      %s49 = sphi 0, %s48
      %s65 = sphi 0, %s49
      %s69 = sphi 0, %s69
      %s71 = sphi 0, %s69
      %s72 = sphi 0, %s71
      %s86 = sphi 0, %s72
      %s90 = sphi 0, %s90
      %s92 = sphi 0, %s90
      %s93 = sphi 0, %s92
      %s107 = sphi 0, %s93
      %s111 = sphi 0, %s111
      %s113 = sphi 0, %s111
      %s114 = sphi 0, %s113
      %s128 = sphi 0, %s114
      %s132 = sphi 0, %s132
      %s134 = sphi 0, %s132
      %s135 = sphi 0, %s134
      %s149 = sphi 0, %s135
      %s153 = sphi 0, %s153
      %s155 = sphi 0, %s153
      %s156 = sphi 0, %s155
      %s170 = sphi 0, %s156
      %s174 = sphi 0, %s174
      %s176 = sphi 0, %s174
      %s177 = sphi 0, %s176
      %s191 = sphi 0, %s177
      %s195 = sphi 0, %s195
      %s197 = sphi 0, %s195
      %s198 = sphi 0, %s197
      %s212 = sphi 0, %s198
      %s216 = sphi 0, %s216
      %s218 = sphi 0, %s216
      %s219 = sphi 0, %s218
      %s233 = sphi 0, %s219
      %s237 = sphi 0, %s237
      %s239 = sphi 0, %s237
      %s240 = sphi 0, %s239
      %s254 = sphi 0, %s240
      %s258 = sphi 0, %s258
      %s260 = sphi 0, %s258
      %s261 = sphi 0, %s260
      %s275 = sphi 0, %s261
      %s279 = sphi 0, %s279
      %s281 = sphi 0, %s279
      %s282 = sphi 0, %s281
      %s296 = sphi 0, %s282
      %s300 = sphi 0, %s300
      %s302 = sphi 0, %s300
      %s303 = sphi 0, %s302
      %s317 = sphi 0, %s303
      %s321 = sphi 0, %s321
      %s323 = sphi 0, %s321
      %s324 = sphi 0, %s323
      %s338 = sphi 0, %s324
      %s342 = sphi 0, %s342
      %s344 = sphi 0, %s342
      %s345 = sphi 0, %s344
      %s359 = sphi 0, %s345
      %s363 = sphi 0, %s363
      %s365 = sphi 0, %s363
      %s366 = sphi 0, %s365
      %s380 = sphi 0, %s366
      %s384 = sphi 0, %s384
      %s386 = sphi 0, %s384
      %s387 = sphi 0, %s386
      %s401 = sphi 0, %s387
      %s405 = sphi 0, %s405
      %s407 = sphi 0, %s405
      %s408 = sphi 0, %s407
      %s422 = sphi 0, %s408
      %s426 = sphi 0, %s426
      %s428 = sphi 0, %s426
      %s429 = sphi 0, %s428
      %s443 = sphi 0, %s429
      %s447 = sphi 0, %s447
      %s449 = sphi 0, %s447
      %s450 = sphi 0, %s449
      %s464 = sphi 0, %s450
      %s468 = sphi 0, %s468
      %s470 = sphi 0, %s468
      %s471 = sphi 0, %s470
      %s485 = sphi 0, %s471
      %s491 = sphi 0, %s493
      %s494 = sphi 0, %s491
      %s495 = sphi 0, %s494
      %s511 = sphi 0, %s495
    $region4: #{tinyvit_block_forward.1} parent=1 // loop_header_branch
      %38 = sbr.rel (%p36) target = $region8
    $region5: #{tinyvit_block_forward.1} parent=1 // loop_body
      %s40 = ssub.s32 %s35, 1
      %s41 = ssub.s32 %s35, 2
      %s42 = sadd.s32 %s35, 1
      %s43 = ssub.s32 %s35, %s42
      %p44 = scmp.eq.s32.totalorder %s43, 0
      %s46 = sadd.s32 %s45, 1
      %s47 = scalar_select %p44, %s45, %s46
      %p50 = pneg %p44
      %p51 = scmp.eq.s32.totalorder %s35, 1
      %p52 = por %p50, %p51
      %p53 = scmp.ne.s32.totalorder %s45, %s48
      %p54 = scmp.eq.s32.totalorder %s35, 0
      %p55 = por %p53, %p54
      %p56 = scmp.ne.s32.totalorder %s45, %s48
      %p57 = scmp.eq.s32.totalorder %s40, 1
      %p58 = por %p56, %p57
      %p59 = scmp.ne.s32.totalorder %s48, %s49
      %p60 = scmp.eq.s32.totalorder %s40, 0
      %p61 = por %p59, %p60
      %p62 = scmp.ne.s32.totalorder %s48, %s49
      %p63 = scmp.eq.s32.totalorder %s41, 1
      %p64 = por %p62, %p63
      %p66 = scmp.ne.s32.totalorder %s49, %s65
      %p67 = scmp.eq.s32.totalorder %s41, 0
      %p68 = por %p66, %p67
      %s70 = sadd.s32 %s69, 1
      %p73 = scmp.eq.s32.totalorder %s35, 1
      %p74 = scmp.ne.s32.totalorder %s69, %s71
      %p75 = scmp.eq.s32.totalorder %s35, 0
      %p76 = por %p74, %p75
      %p77 = scmp.ne.s32.totalorder %s69, %s71
      %p78 = scmp.eq.s32.totalorder %s40, 1
      %p79 = por %p77, %p78
      %p80 = scmp.ne.s32.totalorder %s71, %s72
      %p81 = scmp.eq.s32.totalorder %s40, 0
      %p82 = por %p80, %p81
      %p83 = scmp.ne.s32.totalorder %s71, %s72
      %p84 = scmp.eq.s32.totalorder %s41, 1
      %p85 = por %p83, %p84
      %p87 = scmp.ne.s32.totalorder %s72, %s86
      %p88 = scmp.eq.s32.totalorder %s41, 0
      %p89 = por %p87, %p88
      %s91 = sadd.s32 %s90, 1
      %p94 = scmp.eq.s32.totalorder %s35, 1
      %p95 = scmp.ne.s32.totalorder %s90, %s92
      %p96 = scmp.eq.s32.totalorder %s35, 0
      %p97 = por %p95, %p96
      %p98 = scmp.ne.s32.totalorder %s90, %s92
      %p99 = scmp.eq.s32.totalorder %s40, 1
      %p100 = por %p98, %p99
      %p101 = scmp.ne.s32.totalorder %s92, %s93
      %p102 = scmp.eq.s32.totalorder %s40, 0
      %p103 = por %p101, %p102
      %p104 = scmp.ne.s32.totalorder %s92, %s93
      %p105 = scmp.eq.s32.totalorder %s41, 1
      %p106 = por %p104, %p105
      %p108 = scmp.ne.s32.totalorder %s93, %s107
      %p109 = scmp.eq.s32.totalorder %s41, 0
      %p110 = por %p108, %p109
      %s112 = sadd.s32 %s111, 1
      %p115 = scmp.eq.s32.totalorder %s35, 1
      %p116 = scmp.ne.s32.totalorder %s111, %s113
      %p117 = scmp.eq.s32.totalorder %s35, 0
      %p118 = por %p116, %p117
      %p119 = scmp.ne.s32.totalorder %s111, %s113
      %p120 = scmp.eq.s32.totalorder %s40, 1
      %p121 = por %p119, %p120
      %p122 = scmp.ne.s32.totalorder %s113, %s114
      %p123 = scmp.eq.s32.totalorder %s40, 0
      %p124 = por %p122, %p123
      %p125 = scmp.ne.s32.totalorder %s113, %s114
      %p126 = scmp.eq.s32.totalorder %s41, 1
      %p127 = por %p125, %p126
      %p129 = scmp.ne.s32.totalorder %s114, %s128
      %p130 = scmp.eq.s32.totalorder %s41, 0
      %p131 = por %p129, %p130
      %s133 = sadd.s32 %s132, 1
      %p136 = scmp.eq.s32.totalorder %s35, 1
      %p137 = scmp.ne.s32.totalorder %s132, %s134
      %p138 = scmp.eq.s32.totalorder %s35, 0
      %p139 = por %p137, %p138
      %p140 = scmp.ne.s32.totalorder %s132, %s134
      %p141 = scmp.eq.s32.totalorder %s40, 1
      %p142 = por %p140, %p141
      %p143 = scmp.ne.s32.totalorder %s134, %s135
      %p144 = scmp.eq.s32.totalorder %s40, 0
      %p145 = por %p143, %p144
      %p146 = scmp.ne.s32.totalorder %s134, %s135
      %p147 = scmp.eq.s32.totalorder %s41, 1
      %p148 = por %p146, %p147
      %p150 = scmp.ne.s32.totalorder %s135, %s149
      %p151 = scmp.eq.s32.totalorder %s41, 0
      %p152 = por %p150, %p151
      %s154 = sadd.s32 %s153, 1
      %p157 = scmp.eq.s32.totalorder %s35, 1
      %p158 = scmp.ne.s32.totalorder %s153, %s155
      %p159 = scmp.eq.s32.totalorder %s35, 0
      %p160 = por %p158, %p159
      %p161 = scmp.ne.s32.totalorder %s153, %s155
      %p162 = scmp.eq.s32.totalorder %s40, 1
      %p163 = por %p161, %p162
      %p164 = scmp.ne.s32.totalorder %s155, %s156
      %p165 = scmp.eq.s32.totalorder %s40, 0
      %p166 = por %p164, %p165
      %p167 = scmp.ne.s32.totalorder %s155, %s156
      %p168 = scmp.eq.s32.totalorder %s41, 1
      %p169 = por %p167, %p168
      %p171 = scmp.ne.s32.totalorder %s156, %s170
      %p172 = scmp.eq.s32.totalorder %s41, 0
      %p173 = por %p171, %p172
      %s175 = sadd.s32 %s174, 1
      %p178 = scmp.eq.s32.totalorder %s35, 1
      %p179 = scmp.ne.s32.totalorder %s174, %s176
      %p180 = scmp.eq.s32.totalorder %s35, 0
      %p181 = por %p179, %p180
      %p182 = scmp.ne.s32.totalorder %s174, %s176
      %p183 = scmp.eq.s32.totalorder %s40, 1
      %p184 = por %p182, %p183
      %p185 = scmp.ne.s32.totalorder %s176, %s177
      %p186 = scmp.eq.s32.totalorder %s40, 0
      %p187 = por %p185, %p186
      %p188 = scmp.ne.s32.totalorder %s176, %s177
      %p189 = scmp.eq.s32.totalorder %s41, 1
      %p190 = por %p188, %p189
      %p192 = scmp.ne.s32.totalorder %s177, %s191
      %p193 = scmp.eq.s32.totalorder %s41, 0
      %p194 = por %p192, %p193
      %s196 = sadd.s32 %s195, 1
      %p199 = scmp.eq.s32.totalorder %s35, 1
      %p200 = scmp.ne.s32.totalorder %s195, %s197
      %p201 = scmp.eq.s32.totalorder %s35, 0
      %p202 = por %p200, %p201
      %p203 = scmp.ne.s32.totalorder %s195, %s197
      %p204 = scmp.eq.s32.totalorder %s40, 1
      %p205 = por %p203, %p204
      %p206 = scmp.ne.s32.totalorder %s197, %s198
      %p207 = scmp.eq.s32.totalorder %s40, 0
      %p208 = por %p206, %p207
      %p209 = scmp.ne.s32.totalorder %s197, %s198
      %p210 = scmp.eq.s32.totalorder %s41, 1
      %p211 = por %p209, %p210
      %p213 = scmp.ne.s32.totalorder %s198, %s212
      %p214 = scmp.eq.s32.totalorder %s41, 0
      %p215 = por %p213, %p214
      %s217 = sadd.s32 %s216, 1
      %p220 = scmp.eq.s32.totalorder %s35, 1
      %p221 = scmp.ne.s32.totalorder %s216, %s218
      %p222 = scmp.eq.s32.totalorder %s35, 0
      %p223 = por %p221, %p222
      %p224 = scmp.ne.s32.totalorder %s216, %s218
      %p225 = scmp.eq.s32.totalorder %s40, 1
      %p226 = por %p224, %p225
      %p227 = scmp.ne.s32.totalorder %s218, %s219
      %p228 = scmp.eq.s32.totalorder %s40, 0
      %p229 = por %p227, %p228
      %p230 = scmp.ne.s32.totalorder %s218, %s219
      %p231 = scmp.eq.s32.totalorder %s41, 1
      %p232 = por %p230, %p231
      %p234 = scmp.ne.s32.totalorder %s219, %s233
      %p235 = scmp.eq.s32.totalorder %s41, 0
      %p236 = por %p234, %p235
      %s238 = sadd.s32 %s237, 1
      %p241 = scmp.eq.s32.totalorder %s35, 1
      %p242 = scmp.ne.s32.totalorder %s237, %s239
      %p243 = scmp.eq.s32.totalorder %s35, 0
      %p244 = por %p242, %p243
      %p245 = scmp.ne.s32.totalorder %s237, %s239
      %p246 = scmp.eq.s32.totalorder %s40, 1
      %p247 = por %p245, %p246
      %p248 = scmp.ne.s32.totalorder %s239, %s240
      %p249 = scmp.eq.s32.totalorder %s40, 0
      %p250 = por %p248, %p249
      %p251 = scmp.ne.s32.totalorder %s239, %s240
      %p252 = scmp.eq.s32.totalorder %s41, 1
      %p253 = por %p251, %p252
      %p255 = scmp.ne.s32.totalorder %s240, %s254
      %p256 = scmp.eq.s32.totalorder %s41, 0
      %p257 = por %p255, %p256
      %s259 = sadd.s32 %s258, 1
      %p262 = scmp.eq.s32.totalorder %s35, 1
      %p263 = scmp.ne.s32.totalorder %s258, %s260
      %p264 = scmp.eq.s32.totalorder %s35, 0
      %p265 = por %p263, %p264
      %p266 = scmp.ne.s32.totalorder %s258, %s260
      %p267 = scmp.eq.s32.totalorder %s40, 1
      %p268 = por %p266, %p267
      %p269 = scmp.ne.s32.totalorder %s260, %s261
      %p270 = scmp.eq.s32.totalorder %s40, 0
      %p271 = por %p269, %p270
      %p272 = scmp.ne.s32.totalorder %s260, %s261
      %p273 = scmp.eq.s32.totalorder %s41, 1
      %p274 = por %p272, %p273
      %p276 = scmp.ne.s32.totalorder %s261, %s275
      %p277 = scmp.eq.s32.totalorder %s41, 0
      %p278 = por %p276, %p277
      %s280 = sadd.s32 %s279, 1
      %p283 = scmp.eq.s32.totalorder %s35, 1
      %p284 = scmp.ne.s32.totalorder %s279, %s281
      %p285 = scmp.eq.s32.totalorder %s35, 0
      %p286 = por %p284, %p285
      %p287 = scmp.ne.s32.totalorder %s279, %s281
      %p288 = scmp.eq.s32.totalorder %s40, 1
      %p289 = por %p287, %p288
      %p290 = scmp.ne.s32.totalorder %s281, %s282
      %p291 = scmp.eq.s32.totalorder %s40, 0
      %p292 = por %p290, %p291
      %p293 = scmp.ne.s32.totalorder %s281, %s282
      %p294 = scmp.eq.s32.totalorder %s41, 1
      %p295 = por %p293, %p294
      %p297 = scmp.ne.s32.totalorder %s282, %s296
      %p298 = scmp.eq.s32.totalorder %s41, 0
      %p299 = por %p297, %p298
      %s301 = sadd.s32 %s300, 1
      %p304 = scmp.eq.s32.totalorder %s35, 1
      %p305 = scmp.ne.s32.totalorder %s300, %s302
      %p306 = scmp.eq.s32.totalorder %s35, 0
      %p307 = por %p305, %p306
      %p308 = scmp.ne.s32.totalorder %s300, %s302
      %p309 = scmp.eq.s32.totalorder %s40, 1
      %p310 = por %p308, %p309
      %p311 = scmp.ne.s32.totalorder %s302, %s303
      %p312 = scmp.eq.s32.totalorder %s40, 0
      %p313 = por %p311, %p312
      %p314 = scmp.ne.s32.totalorder %s302, %s303
      %p315 = scmp.eq.s32.totalorder %s41, 1
      %p316 = por %p314, %p315
      %p318 = scmp.ne.s32.totalorder %s303, %s317
      %p319 = scmp.eq.s32.totalorder %s41, 0
      %p320 = por %p318, %p319
      %s322 = sadd.s32 %s321, 1
      %p325 = scmp.eq.s32.totalorder %s35, 1
      %p326 = scmp.ne.s32.totalorder %s321, %s323
      %p327 = scmp.eq.s32.totalorder %s35, 0
      %p328 = por %p326, %p327
      %p329 = scmp.ne.s32.totalorder %s321, %s323
      %p330 = scmp.eq.s32.totalorder %s40, 1
      %p331 = por %p329, %p330
      %p332 = scmp.ne.s32.totalorder %s323, %s324
      %p333 = scmp.eq.s32.totalorder %s40, 0
      %p334 = por %p332, %p333
      %p335 = scmp.ne.s32.totalorder %s323, %s324
      %p336 = scmp.eq.s32.totalorder %s41, 1
      %p337 = por %p335, %p336
      %p339 = scmp.ne.s32.totalorder %s324, %s338
      %p340 = scmp.eq.s32.totalorder %s41, 0
      %p341 = por %p339, %p340
      %s343 = sadd.s32 %s342, 1
      %p346 = scmp.eq.s32.totalorder %s35, 1
      %p347 = scmp.ne.s32.totalorder %s342, %s344
      %p348 = scmp.eq.s32.totalorder %s35, 0
      %p349 = por %p347, %p348
      %p350 = scmp.ne.s32.totalorder %s342, %s344
      %p351 = scmp.eq.s32.totalorder %s40, 1
      %p352 = por %p350, %p351
      %p353 = scmp.ne.s32.totalorder %s344, %s345
      %p354 = scmp.eq.s32.totalorder %s40, 0
      %p355 = por %p353, %p354
      %p356 = scmp.ne.s32.totalorder %s344, %s345
      %p357 = scmp.eq.s32.totalorder %s41, 1
      %p358 = por %p356, %p357
      %p360 = scmp.ne.s32.totalorder %s345, %s359
      %p361 = scmp.eq.s32.totalorder %s41, 0
      %p362 = por %p360, %p361
      %s364 = sadd.s32 %s363, 1
      %p367 = scmp.eq.s32.totalorder %s35, 1
      %p368 = scmp.ne.s32.totalorder %s363, %s365
      %p369 = scmp.eq.s32.totalorder %s35, 0
      %p370 = por %p368, %p369
      %p371 = scmp.ne.s32.totalorder %s363, %s365
      %p372 = scmp.eq.s32.totalorder %s40, 1
      %p373 = por %p371, %p372
      %p374 = scmp.ne.s32.totalorder %s365, %s366
      %p375 = scmp.eq.s32.totalorder %s40, 0
      %p376 = por %p374, %p375
      %p377 = scmp.ne.s32.totalorder %s365, %s366
      %p378 = scmp.eq.s32.totalorder %s41, 1
      %p379 = por %p377, %p378
      %p381 = scmp.ne.s32.totalorder %s366, %s380
      %p382 = scmp.eq.s32.totalorder %s41, 0
      %p383 = por %p381, %p382
      %s385 = sadd.s32 %s384, 1
      %p388 = scmp.eq.s32.totalorder %s35, 1
      %p389 = scmp.ne.s32.totalorder %s384, %s386
      %p390 = scmp.eq.s32.totalorder %s35, 0
      %p391 = por %p389, %p390
      %p392 = scmp.ne.s32.totalorder %s384, %s386
      %p393 = scmp.eq.s32.totalorder %s40, 1
      %p394 = por %p392, %p393
      %p395 = scmp.ne.s32.totalorder %s386, %s387
      %p396 = scmp.eq.s32.totalorder %s40, 0
      %p397 = por %p395, %p396
      %p398 = scmp.ne.s32.totalorder %s386, %s387
      %p399 = scmp.eq.s32.totalorder %s41, 1
      %p400 = por %p398, %p399
      %p402 = scmp.ne.s32.totalorder %s387, %s401
      %p403 = scmp.eq.s32.totalorder %s41, 0
      %p404 = por %p402, %p403
      %s406 = sadd.s32 %s405, 1
      %p409 = scmp.eq.s32.totalorder %s35, 1
      %p410 = scmp.ne.s32.totalorder %s405, %s407
      %p411 = scmp.eq.s32.totalorder %s35, 0
      %p412 = por %p410, %p411
      %p413 = scmp.ne.s32.totalorder %s405, %s407
      %p414 = scmp.eq.s32.totalorder %s40, 1
      %p415 = por %p413, %p414
      %p416 = scmp.ne.s32.totalorder %s407, %s408
      %p417 = scmp.eq.s32.totalorder %s40, 0
      %p418 = por %p416, %p417
      %p419 = scmp.ne.s32.totalorder %s407, %s408
      %p420 = scmp.eq.s32.totalorder %s41, 1
      %p421 = por %p419, %p420
      %p423 = scmp.ne.s32.totalorder %s408, %s422
      %p424 = scmp.eq.s32.totalorder %s41, 0
      %p425 = por %p423, %p424
      %s427 = sadd.s32 %s426, 1
      %p430 = scmp.eq.s32.totalorder %s35, 1
      %p431 = scmp.ne.s32.totalorder %s426, %s428
      %p432 = scmp.eq.s32.totalorder %s35, 0
      %p433 = por %p431, %p432
      %p434 = scmp.ne.s32.totalorder %s426, %s428
      %p435 = scmp.eq.s32.totalorder %s40, 1
      %p436 = por %p434, %p435
      %p437 = scmp.ne.s32.totalorder %s428, %s429
      %p438 = scmp.eq.s32.totalorder %s40, 0
      %p439 = por %p437, %p438
      %p440 = scmp.ne.s32.totalorder %s428, %s429
      %p441 = scmp.eq.s32.totalorder %s41, 1
      %p442 = por %p440, %p441
      %p444 = scmp.ne.s32.totalorder %s429, %s443
      %p445 = scmp.eq.s32.totalorder %s41, 0
      %p446 = por %p444, %p445
      %s448 = sadd.s32 %s447, 1
      %p451 = scmp.eq.s32.totalorder %s35, 1
      %p452 = scmp.ne.s32.totalorder %s447, %s449
      %p453 = scmp.eq.s32.totalorder %s35, 0
      %p454 = por %p452, %p453
      %p455 = scmp.ne.s32.totalorder %s447, %s449
      %p456 = scmp.eq.s32.totalorder %s40, 1
      %p457 = por %p455, %p456
      %p458 = scmp.ne.s32.totalorder %s449, %s450
      %p459 = scmp.eq.s32.totalorder %s40, 0
      %p460 = por %p458, %p459
      %p461 = scmp.ne.s32.totalorder %s449, %s450
      %p462 = scmp.eq.s32.totalorder %s41, 1
      %p463 = por %p461, %p462
      %p465 = scmp.ne.s32.totalorder %s450, %s464
      %p466 = scmp.eq.s32.totalorder %s41, 0
      %p467 = por %p465, %p466
      %s469 = sadd.s32 %s468, 1
      %p472 = scmp.eq.s32.totalorder %s35, 1
      %p473 = scmp.ne.s32.totalorder %s468, %s470
      %p474 = scmp.eq.s32.totalorder %s35, 0
      %p475 = por %p473, %p474
      %p476 = scmp.ne.s32.totalorder %s468, %s470
      %p477 = scmp.eq.s32.totalorder %s40, 1
      %p478 = por %p476, %p477
      %p479 = scmp.ne.s32.totalorder %s470, %s471
      %p480 = scmp.eq.s32.totalorder %s40, 0
      %p481 = por %p479, %p480
      %p482 = scmp.ne.s32.totalorder %s470, %s471
      %p483 = scmp.eq.s32.totalorder %s41, 1
      %p484 = por %p482, %p483
      %p486 = scmp.ne.s32.totalorder %s471, %s485
      %p487 = scmp.eq.s32.totalorder %s41, 0
      %p488 = por %p486, %p487
      %s489 = ssub.s32 %s35, %s42
      %p490 = scmp.eq.s32.totalorder %s489, 0
      %s492 = sadd.s32 %s491, 1
      %s493 = scalar_select %p490, %s491, %s492
      %p496 = pneg %p490
      %p497 = scmp.eq.s32.totalorder %s35, 1
      %p498 = por %p496, %p497
      %p499 = scmp.ne.s32.totalorder %s491, %s494
      %p500 = scmp.eq.s32.totalorder %s35, 0
      %p501 = por %p499, %p500
      %p502 = scmp.ne.s32.totalorder %s491, %s494
      %p503 = scmp.eq.s32.totalorder %s40, 1
      %p504 = por %p502, %p503
      %p505 = scmp.ne.s32.totalorder %s494, %s495
      %p506 = scmp.eq.s32.totalorder %s40, 0
      %p507 = por %p505, %p506
      %p508 = scmp.ne.s32.totalorder %s494, %s495
      %p509 = scmp.eq.s32.totalorder %s41, 1
      %p510 = por %p508, %p509
      %p512 = scmp.ne.s32.totalorder %s495, %s511
      %p513 = scmp.eq.s32.totalorder %s41, 0
      %p514 = por %p512, %p513
      %p515 = scmp.le.s32.totalorder 1, %s35
      %p516 = scmp.lt.s32.totalorder %s35, 3
      %p517 = pnand %p515, %p516
      %p518 = pneg %p517
      // Predicated region
      $region9: #{tinyvit_block_forward.1} parent=5 // pred_check
        _
      $region10: #{tinyvit_block_forward.1} parent=5 // pred_check_branch
        %520 = sbr.rel (%p517) target = $region12
      $region11: #{tinyvit_block_forward.1} parent=5 // pred_region
        %s521 = ssub.s32 %s35, 1
        // Predicated region
        $region13: #{tinyvit_block_forward.1} parent=11 // pred_check
          %p522 = pneg %p82
        $region14: #{tinyvit_block_forward.1} parent=11 // pred_check_branch
          %524 = sbr.rel (%p522) target = $region16
        $region15: #{tinyvit_block_forward.1} parent=11 // pred_region
          _
        $region16: #{tinyvit_block_forward.1} parent=11 // pred_fallthru
          _
        // Predicated region
        $region17: #{tinyvit_block_forward.1} parent=11 // pred_check
          %p525 = pneg %p103
        $region18: #{tinyvit_block_forward.1} parent=11 // pred_check_branch
          %527 = sbr.rel (%p525) target = $region20
        $region19: #{tinyvit_block_forward.1} parent=11 // pred_region
          %s529 = ssub.s32 16, 16
          %530 = vsyncadd [#allocation4], %s529
          %s532 = sshll.u32 [#allocation3], 4
          %s533 = int_to_ptr.vmem [resolvable:$true] %s532
          %535 = dma.hbm_to_vmem [thread:$0]  %s2, 16, %s533, [#allocation4]
        $region20: #{tinyvit_block_forward.1} parent=11 // pred_fallthru
          _
        // Predicated region
        $region21: #{tinyvit_block_forward.1} parent=11 // pred_check
          %p536 = pneg %p124
        $region22: #{tinyvit_block_forward.1} parent=11 // pred_check_branch
          %538 = sbr.rel (%p536) target = $region24
        $region23: #{tinyvit_block_forward.1} parent=11 // pred_region
          %s540 = ssub.s32 16, 16
          %541 = vsyncadd [#allocation6], %s540
          %s543 = sshll.u32 [#allocation5], 4
          %s544 = int_to_ptr.vmem [resolvable:$true] %s543
          %546 = dma.hbm_to_vmem [thread:$0]  %s3, 16, %s544, [#allocation6]
        $region24: #{tinyvit_block_forward.1} parent=11 // pred_fallthru
          _
        // Predicated region
        $region25: #{tinyvit_block_forward.1} parent=11 // pred_check
          %p547 = pneg %p145
        $region26: #{tinyvit_block_forward.1} parent=11 // pred_check_branch
          %549 = sbr.rel (%p547) target = $region28
        $region27: #{tinyvit_block_forward.1} parent=11 // pred_region
          _
        $region28: #{tinyvit_block_forward.1} parent=11 // pred_fallthru
          _
        // Predicated region
        $region29: #{tinyvit_block_forward.1} parent=11 // pred_check
          %p550 = pneg %p166
        $region30: #{tinyvit_block_forward.1} parent=11 // pred_check_branch
          %552 = sbr.rel (%p550) target = $region32
        $region31: #{tinyvit_block_forward.1} parent=11 // pred_region
          _
        $region32: #{tinyvit_block_forward.1} parent=11 // pred_fallthru
          _
        // Predicated region
        $region33: #{tinyvit_block_forward.1} parent=11 // pred_check
          %p553 = pneg %p187
        $region34: #{tinyvit_block_forward.1} parent=11 // pred_check_branch
          %555 = sbr.rel (%p553) target = $region36
        $region35: #{tinyvit_block_forward.1} parent=11 // pred_region
          _
        $region36: #{tinyvit_block_forward.1} parent=11 // pred_fallthru
          _
        // Predicated region
        $region37: #{tinyvit_block_forward.1} parent=11 // pred_check
          %p556 = pneg %p208
        $region38: #{tinyvit_block_forward.1} parent=11 // pred_check_branch
          %558 = sbr.rel (%p556) target = $region40
        $region39: #{tinyvit_block_forward.1} parent=11 // pred_region
          %s560 = ssub.s32 16, 16
          %561 = vsyncadd [#allocation6], %s560
          %s563 = sshll.u32 [#allocation7], 4
          %s564 = int_to_ptr.vmem [resolvable:$true] %s563
          %566 = dma.hbm_to_vmem [thread:$0]  %s7, 16, %s564, [#allocation6]
        $region40: #{tinyvit_block_forward.1} parent=11 // pred_fallthru
          _
        // Predicated region
        $region41: #{tinyvit_block_forward.1} parent=11 // pred_check
          %p567 = pneg %p229
        $region42: #{tinyvit_block_forward.1} parent=11 // pred_check_branch
          %569 = sbr.rel (%p567) target = $region44
        $region43: #{tinyvit_block_forward.1} parent=11 // pred_region
          %s571 = ssub.s32 16, 16
          %572 = vsyncadd [#allocation9], %s571
          %s574 = sshll.u32 [#allocation8], 4
          %s575 = int_to_ptr.vmem [resolvable:$true] %s574
          %577 = dma.hbm_to_vmem [thread:$0]  %s8, 16, %s575, [#allocation9]
        $region44: #{tinyvit_block_forward.1} parent=11 // pred_fallthru
          _
        // Predicated region
        $region45: #{tinyvit_block_forward.1} parent=11 // pred_check
          %p578 = pneg %p250
        $region46: #{tinyvit_block_forward.1} parent=11 // pred_check_branch
          %580 = sbr.rel (%p578) target = $region48
        $region47: #{tinyvit_block_forward.1} parent=11 // pred_region
          %s582 = ssub.s32 16, 16
          %583 = vsyncadd [#allocation9], %s582
          %s585 = sshll.u32 [#allocation10], 4
          %s586 = int_to_ptr.vmem [resolvable:$true] %s585
          %588 = dma.hbm_to_vmem [thread:$0]  %s9, 16, %s586, [#allocation9]
        $region48: #{tinyvit_block_forward.1} parent=11 // pred_fallthru
          _
        // Predicated region
        $region49: #{tinyvit_block_forward.1} parent=11 // pred_check
          %p589 = pneg %p271
        $region50: #{tinyvit_block_forward.1} parent=11 // pred_check_branch
          %591 = sbr.rel (%p589) target = $region52
        $region51: #{tinyvit_block_forward.1} parent=11 // pred_region
          %s593 = ssub.s32 512, 512
          %594 = vsyncadd [#allocation12], %s593
          %s595 = sshll.u32 [#allocation11], 4
          %s596 = int_to_ptr.vmem [resolvable:$true] %s595
          %601 = dma.hbm_to_vmem [thread:$0]  %s10, 512, %s596, [#allocation12], 128, 128, 8
        $region52: #{tinyvit_block_forward.1} parent=11 // pred_fallthru
          _
        // Predicated region
        $region53: #{tinyvit_block_forward.1} parent=11 // pred_check
          %p602 = pneg %p292
        $region54: #{tinyvit_block_forward.1} parent=11 // pred_check_branch
          %604 = sbr.rel (%p602) target = $region56
        $region55: #{tinyvit_block_forward.1} parent=11 // pred_region
          %s606 = ssub.s32 16, 16
          %607 = vsyncadd [#allocation12], %s606
          %s609 = sshll.u32 [#allocation13], 4
          %s610 = int_to_ptr.vmem [resolvable:$true] %s609
          %612 = dma.hbm_to_vmem [thread:$0]  %s11, 16, %s610, [#allocation12]
        $region56: #{tinyvit_block_forward.1} parent=11 // pred_fallthru
          _
        // Predicated region
        $region57: #{tinyvit_block_forward.1} parent=11 // pred_check
          %p613 = pneg %p313
        $region58: #{tinyvit_block_forward.1} parent=11 // pred_check_branch
          %615 = sbr.rel (%p613) target = $region60
        $region59: #{tinyvit_block_forward.1} parent=11 // pred_region
          %s617 = ssub.s32 256, 256
          %618 = vsyncadd [#allocation15], %s617
          %s619 = sshll.u32 [#allocation14], 4
          %s620 = int_to_ptr.vmem [resolvable:$true] %s619
          %625 = dma.hbm_to_vmem [thread:$0]  %s12, 256, %s620, [#allocation15], 128, 128, 8
        $region60: #{tinyvit_block_forward.1} parent=11 // pred_fallthru
          _
        // Predicated region
        $region61: #{tinyvit_block_forward.1} parent=11 // pred_check
          %p626 = pneg %p334
        $region62: #{tinyvit_block_forward.1} parent=11 // pred_check_branch
          %628 = sbr.rel (%p626) target = $region64
        $region63: #{tinyvit_block_forward.1} parent=11 // pred_region
          %s630 = ssub.s32 16, 16
          %631 = vsyncadd [#allocation15], %s630
          %s633 = sshll.u32 [#allocation16], 4
          %s634 = int_to_ptr.vmem [resolvable:$true] %s633
          %636 = dma.hbm_to_vmem [thread:$0]  %s13, 16, %s634, [#allocation15]
        $region64: #{tinyvit_block_forward.1} parent=11 // pred_fallthru
          _
        // Predicated region
        $region65: #{tinyvit_block_forward.1} parent=11 // pred_check
          %p637 = pneg %p355
        $region66: #{tinyvit_block_forward.1} parent=11 // pred_check_branch
          %639 = sbr.rel (%p637) target = $region68
        $region67: #{tinyvit_block_forward.1} parent=11 // pred_region
          %s641 = ssub.s32 16, 16
          %642 = vsyncadd [#allocation18], %s641
          %s644 = sshll.u32 [#allocation17], 4
          %s645 = int_to_ptr.vmem [resolvable:$true] %s644
          %647 = dma.hbm_to_vmem [thread:$0]  %s14, 16, %s645, [#allocation18]
        $region68: #{tinyvit_block_forward.1} parent=11 // pred_fallthru
          _
        // Predicated region
        $region69: #{tinyvit_block_forward.1} parent=11 // pred_check
          %p648 = pneg %p376
        $region70: #{tinyvit_block_forward.1} parent=11 // pred_check_branch
          %650 = sbr.rel (%p648) target = $region72
        $region71: #{tinyvit_block_forward.1} parent=11 // pred_region
          %s652 = ssub.s32 16, 16
          %653 = vsyncadd [#allocation18], %s652
          %s655 = sshll.u32 [#allocation19], 4
          %s656 = int_to_ptr.vmem [resolvable:$true] %s655
          %658 = dma.hbm_to_vmem [thread:$0]  %s15, 16, %s656, [#allocation18]
        $region72: #{tinyvit_block_forward.1} parent=11 // pred_fallthru
          _
        // Predicated region
        $region73: #{tinyvit_block_forward.1} parent=11 // pred_check
          %p659 = pneg %p397
        $region74: #{tinyvit_block_forward.1} parent=11 // pred_check_branch
          %661 = sbr.rel (%p659) target = $region76
        $region75: #{tinyvit_block_forward.1} parent=11 // pred_region
          %s663 = ssub.s32 16, 16
          %664 = vsyncadd [#allocation21], %s663
          %s666 = sshll.u32 [#allocation20], 4
          %s667 = int_to_ptr.vmem [resolvable:$true] %s666
          %669 = dma.hbm_to_vmem [thread:$0]  %s16, 16, %s667, [#allocation21]
        $region76: #{tinyvit_block_forward.1} parent=11 // pred_fallthru
          _
        // Predicated region
        $region77: #{tinyvit_block_forward.1} parent=11 // pred_check
          %p670 = pneg %p418
        $region78: #{tinyvit_block_forward.1} parent=11 // pred_check_branch
          %672 = sbr.rel (%p670) target = $region80
        $region79: #{tinyvit_block_forward.1} parent=11 // pred_region
          %s674 = ssub.s32 512, 512
          %675 = vsyncadd [#allocation21], %s674
          %s676 = sshll.u32 [#allocation22], 4
          %s677 = int_to_ptr.vmem [resolvable:$true] %s676
          %682 = dma.hbm_to_vmem [thread:$0]  %s17, 512, %s677, [#allocation21], 128, 128, 8
        $region80: #{tinyvit_block_forward.1} parent=11 // pred_fallthru
          _
        // Predicated region
        $region81: #{tinyvit_block_forward.1} parent=11 // pred_check
          %p683 = pneg %p439
        $region82: #{tinyvit_block_forward.1} parent=11 // pred_check_branch
          %685 = sbr.rel (%p683) target = $region84
        $region83: #{tinyvit_block_forward.1} parent=11 // pred_region
          %s687 = ssub.s32 16, 16
          %688 = vsyncadd [#allocation24], %s687
          %s690 = sshll.u32 [#allocation23], 4
          %s691 = int_to_ptr.vmem [resolvable:$true] %s690
          %693 = dma.hbm_to_vmem [thread:$0]  %s18, 16, %s691, [#allocation24]
        $region84: #{tinyvit_block_forward.1} parent=11 // pred_fallthru
          _
        // Predicated region
        $region85: #{tinyvit_block_forward.1} parent=11 // pred_check
          %p694 = pneg %p460
        $region86: #{tinyvit_block_forward.1} parent=11 // pred_check_branch
          %696 = sbr.rel (%p694) target = $region88
        $region87: #{tinyvit_block_forward.1} parent=11 // pred_region
          _
        $region88: #{tinyvit_block_forward.1} parent=11 // pred_fallthru
          _
        // Predicated region
        $region89: #{tinyvit_block_forward.1} parent=11 // pred_check
          %p697 = pneg %p481
        $region90: #{tinyvit_block_forward.1} parent=11 // pred_check_branch
          %699 = sbr.rel (%p697) target = $region92
        $region91: #{tinyvit_block_forward.1} parent=11 // pred_region
          %s701 = ssub.s32 16, 16
          %702 = vsyncadd [#allocation24], %s701
          %s704 = sshll.u32 [#allocation25], 4
          %s705 = int_to_ptr.vmem [resolvable:$true] %s704
          %707 = dma.hbm_to_vmem [thread:$0]  %s20, 16, %s705, [#allocation24]
        $region92: #{tinyvit_block_forward.1} parent=11 // pred_fallthru
          _
      $region12: #{tinyvit_block_forward.1} parent=5 // pred_fallthru
        _
      %p708 = scmp.lt.s32.totalorder %s35, 2
      // Predicated region
      $region93: #{tinyvit_block_forward.1} parent=5 // pred_check
        %p709 = pneg %p708
      $region94: #{tinyvit_block_forward.1} parent=5 // pred_check_branch
        %711 = sbr.rel (%p709) target = $region96
      $region95: #{tinyvit_block_forward.1} parent=5 // pred_region
        // Predicated region
        $region97: #{tinyvit_block_forward.1} parent=95 // pred_check
          %p712 = pneg %p55
        $region98: #{tinyvit_block_forward.1} parent=95 // pred_check_branch
          %714 = sbr.rel (%p712) target = $region100
        $region99: #{tinyvit_block_forward.1} parent=95 // pred_region
          %p715 = scmp.lt.s32.totalorder %s35, 1
          %s716 = scalar_select %p715, %s35, 1
          %s717 = smul.addr %s716, 8
          %s718 = smul.addr %s717, 8
          %s719 = scalar_lea.vmem %s0, %s718
        $region100: #{tinyvit_block_forward.1} parent=95 // pred_fallthru
          _
      $region96: #{tinyvit_block_forward.1} parent=5 // pred_fallthru
        _
      %p720 = scmp.le.s32.totalorder 1, %s35
      %p721 = scmp.lt.s32.totalorder %s35, 3
      %p722 = pnand %p720, %p721
      %p723 = pneg %p722
      // Predicated region
      $region101: #{tinyvit_block_forward.1} parent=5 // pred_check
        _
      $region102: #{tinyvit_block_forward.1} parent=5 // pred_check_branch
        %725 = sbr.rel (%p722) target = $region104
      $region103: #{tinyvit_block_forward.1} parent=5 // pred_region
        %s726 = ssub.s32 %s35, 1
        // Predicated region
        $region105: #{tinyvit_block_forward.1} parent=103 // pred_check
          %p727 = pneg %p103
        $region106: #{tinyvit_block_forward.1} parent=103 // pred_check_branch
          %729 = sbr.rel (%p727) target = $region108
        $region107: #{tinyvit_block_forward.1} parent=103 // pred_region
          %730 = dma.done [#allocation4], 16
        $region108: #{tinyvit_block_forward.1} parent=103 // pred_fallthru
          _
        // Predicated region
        $region109: #{tinyvit_block_forward.1} parent=103 // pred_check
          %p731 = pneg %p124
        $region110: #{tinyvit_block_forward.1} parent=103 // pred_check_branch
          %733 = sbr.rel (%p731) target = $region112
        $region111: #{tinyvit_block_forward.1} parent=103 // pred_region
          %734 = dma.done [#allocation6], 16
        $region112: #{tinyvit_block_forward.1} parent=103 // pred_fallthru
          _
        // Predicated region
        $region113: #{tinyvit_block_forward.1} parent=103 // pred_check
          %p735 = pneg %p208
        $region114: #{tinyvit_block_forward.1} parent=103 // pred_check_branch
          %737 = sbr.rel (%p735) target = $region116
        $region115: #{tinyvit_block_forward.1} parent=103 // pred_region
          %738 = dma.done [#allocation6], 16
        $region116: #{tinyvit_block_forward.1} parent=103 // pred_fallthru
          _
        // Predicated region
        $region117: #{tinyvit_block_forward.1} parent=103 // pred_check
          %p739 = pneg %p229
        $region118: #{tinyvit_block_forward.1} parent=103 // pred_check_branch
          %741 = sbr.rel (%p739) target = $region120
        $region119: #{tinyvit_block_forward.1} parent=103 // pred_region
          %742 = dma.done [#allocation9], 16
        $region120: #{tinyvit_block_forward.1} parent=103 // pred_fallthru
          _
        // Predicated region
        $region121: #{tinyvit_block_forward.1} parent=103 // pred_check
          %p743 = pneg %p250
        $region122: #{tinyvit_block_forward.1} parent=103 // pred_check_branch
          %745 = sbr.rel (%p743) target = $region124
        $region123: #{tinyvit_block_forward.1} parent=103 // pred_region
          %746 = dma.done [#allocation9], 16
        $region124: #{tinyvit_block_forward.1} parent=103 // pred_fallthru
          _
        // Predicated region
        $region125: #{tinyvit_block_forward.1} parent=103 // pred_check
          %p747 = pneg %p271
        $region126: #{tinyvit_block_forward.1} parent=103 // pred_check_branch
          %749 = sbr.rel (%p747) target = $region128
        $region127: #{tinyvit_block_forward.1} parent=103 // pred_region
          %750 = dma.done [#allocation12], 512
        $region128: #{tinyvit_block_forward.1} parent=103 // pred_fallthru
          _
        // Predicated region
        $region129: #{tinyvit_block_forward.1} parent=103 // pred_check
          %p751 = pneg %p292
        $region130: #{tinyvit_block_forward.1} parent=103 // pred_check_branch
          %753 = sbr.rel (%p751) target = $region132
        $region131: #{tinyvit_block_forward.1} parent=103 // pred_region
          %754 = dma.done [#allocation12], 16
        $region132: #{tinyvit_block_forward.1} parent=103 // pred_fallthru
          _
        // Predicated region
        $region133: #{tinyvit_block_forward.1} parent=103 // pred_check
          %p755 = pneg %p313
        $region134: #{tinyvit_block_forward.1} parent=103 // pred_check_branch
          %757 = sbr.rel (%p755) target = $region136
        $region135: #{tinyvit_block_forward.1} parent=103 // pred_region
          %758 = dma.done [#allocation15], 256
        $region136: #{tinyvit_block_forward.1} parent=103 // pred_fallthru
          _
        // Predicated region
        $region137: #{tinyvit_block_forward.1} parent=103 // pred_check
          %p759 = pneg %p334
        $region138: #{tinyvit_block_forward.1} parent=103 // pred_check_branch
          %761 = sbr.rel (%p759) target = $region140
        $region139: #{tinyvit_block_forward.1} parent=103 // pred_region
          %762 = dma.done [#allocation15], 16
        $region140: #{tinyvit_block_forward.1} parent=103 // pred_fallthru
          _
        // Predicated region
        $region141: #{tinyvit_block_forward.1} parent=103 // pred_check
          %p763 = pneg %p355
        $region142: #{tinyvit_block_forward.1} parent=103 // pred_check_branch
          %765 = sbr.rel (%p763) target = $region144
        $region143: #{tinyvit_block_forward.1} parent=103 // pred_region
          %766 = dma.done [#allocation18], 16
        $region144: #{tinyvit_block_forward.1} parent=103 // pred_fallthru
          _
        // Predicated region
        $region145: #{tinyvit_block_forward.1} parent=103 // pred_check
          %p767 = pneg %p376
        $region146: #{tinyvit_block_forward.1} parent=103 // pred_check_branch
          %769 = sbr.rel (%p767) target = $region148
        $region147: #{tinyvit_block_forward.1} parent=103 // pred_region
          %770 = dma.done [#allocation18], 16
        $region148: #{tinyvit_block_forward.1} parent=103 // pred_fallthru
          _
        // Predicated region
        $region149: #{tinyvit_block_forward.1} parent=103 // pred_check
          %p771 = pneg %p397
        $region150: #{tinyvit_block_forward.1} parent=103 // pred_check_branch
          %773 = sbr.rel (%p771) target = $region152
        $region151: #{tinyvit_block_forward.1} parent=103 // pred_region
          %774 = dma.done [#allocation21], 16
        $region152: #{tinyvit_block_forward.1} parent=103 // pred_fallthru
          _
        // Predicated region
        $region153: #{tinyvit_block_forward.1} parent=103 // pred_check
          %p775 = pneg %p418
        $region154: #{tinyvit_block_forward.1} parent=103 // pred_check_branch
          %777 = sbr.rel (%p775) target = $region156
        $region155: #{tinyvit_block_forward.1} parent=103 // pred_region
          %778 = dma.done [#allocation21], 512
        $region156: #{tinyvit_block_forward.1} parent=103 // pred_fallthru
          _
        // Predicated region
        $region157: #{tinyvit_block_forward.1} parent=103 // pred_check
          %p779 = pneg %p439
        $region158: #{tinyvit_block_forward.1} parent=103 // pred_check_branch
          %781 = sbr.rel (%p779) target = $region160
        $region159: #{tinyvit_block_forward.1} parent=103 // pred_region
          %782 = dma.done [#allocation24], 16
        $region160: #{tinyvit_block_forward.1} parent=103 // pred_fallthru
          _
        // Predicated region
        $region161: #{tinyvit_block_forward.1} parent=103 // pred_check
          %p783 = pneg %p481
        $region162: #{tinyvit_block_forward.1} parent=103 // pred_check_branch
          %785 = sbr.rel (%p783) target = $region164
        $region163: #{tinyvit_block_forward.1} parent=103 // pred_region
          %786 = dma.done [#allocation24], 16
        $region164: #{tinyvit_block_forward.1} parent=103 // pred_fallthru
          _
        %p787 = scmp.lt.s32.totalorder %s40, 1
        %s788 = scalar_select %p787, %s40, 1
        %s789 = smul.addr %s788, 8
        %s790 = smul.addr %s789, 8
        %s791 = scalar_lea.vmem %s0, %s790
        %p792 = pneg %p61
        %p793 = pneg %p58
        %p794 = pneg %p82
        %p795 = pneg %p79
        %p796 = pneg %p103
        %p797 = pneg %p100
        %p798 = pneg %p124
        %p799 = pneg %p121
        %p800 = pneg %p145
        %p801 = pneg %p142
        %p802 = pneg %p166
        %p803 = pneg %p163
        %p804 = pneg %p187
        %p805 = pneg %p184
        %p806 = pneg %p208
        %p807 = pneg %p205
        %p808 = pneg %p229
        %p809 = pneg %p226
        %p810 = pneg %p250
        %p811 = pneg %p247
        %p812 = pneg %p271
        %p813 = pneg %p268
        %p814 = pneg %p292
        %p815 = pneg %p289
        %p816 = pneg %p313
        %p817 = pneg %p310
        %p818 = pneg %p334
        %p819 = pneg %p331
        %p820 = pneg %p355
        %p821 = pneg %p352
        %p822 = pneg %p376
        %p823 = pneg %p373
        %p824 = pneg %p397
        %p825 = pneg %p394
        %p826 = pneg %p418
        %p827 = pneg %p415
        %p828 = pneg %p439
        %p829 = pneg %p436
        %p830 = pneg %p460
        %p831 = pneg %p457
        %p832 = pneg %p481
        %p833 = pneg %p478
        %p834 = pneg %p507
        %p835 = pneg %p504
        %p836 = scmp.lt.s32.totalorder %s40, 1
        %s837 = scalar_select %p836, %s40, 1
        %s838 = smul.addr %s837, 8
        %s839 = smul.addr %s838, 8
        %s840 = scalar_lea.vmem %s21, %s839
        %p841 = scmp.lt.s32.totalorder %s40, 1
        %s842 = scalar_select %p841, %s40, 1
        %s843 = smul.addr %s842, 8
        %s844 = smul.addr %s843, 8
        %s845 = scalar_lea.vmem %s0, %s844
        %p846 = scmp.lt.s32.totalorder %s40, 1
        %s847 = scalar_select %p846, %s40, 1
        %s848 = smul.addr %s847, 8
        %s849 = smul.addr %s848, 8
        %s850 = scalar_lea.vmem %s21, %s849
        %v852 = vld [vmem:[%s845] sm:$0xff]
        %v853 = vld [vmem:[%s845 + $0x8] sm:$0xff]
        %v854 = vld [vmem:[%s845 + $0x10] sm:$0xff]
        %v855 = vld [vmem:[%s845 + $0x18] sm:$0xff]
        %v856 = vld [vmem:[%s845 + $0x20] sm:$0xff]
        %v857 = vld [vmem:[%s845 + $0x28] sm:$0xff]
        %v858 = vld [vmem:[%s845 + $0x30] sm:$0xff]
        %v859 = vld [vmem:[%s845 + $0x38] sm:$0xff]
        %v860 = vld [vmem:[#allocation3] sm:$0x1]
        %v861 = vld [vmem:[#allocation5] sm:$0x1]
        %vm862 = vcmask 261120
        %v863 = vsel %vm862, %v852, 0.0
        %864 = vadd.xlane.f32.xlu0 %v863
        %v865 = vpop.xlane.xlu0 %864
        %v866 = vsel %vm862, %v853, 0.0
        %867 = vadd.xlane.f32.xlu0 %v866
        %v868 = vpop.xlane.xlu0 %867
        %v869 = vsel %vm862, %v854, 0.0
        %870 = vadd.xlane.f32.xlu0 %v869
        %v871 = vpop.xlane.xlu0 %870
        %v872 = vsel %vm862, %v855, 0.0
        %873 = vadd.xlane.f32.xlu0 %v872
        %v874 = vpop.xlane.xlu0 %873
        %v875 = vsel %vm862, %v856, 0.0
        %876 = vadd.xlane.f32.xlu0 %v875
        %v877 = vpop.xlane.xlu0 %876
        %v878 = vsel %vm862, %v857, 0.0
        %879 = vadd.xlane.f32.xlu0 %v878
        %v880 = vpop.xlane.xlu0 %879
        %v881 = vsel %vm862, %v858, 0.0
        %882 = vadd.xlane.f32.xlu0 %v881
        %v883 = vpop.xlane.xlu0 %882
        %v884 = vsel %vm862, %v859, 0.0
        %885 = vadd.xlane.f32.xlu0 %v884
        %v886 = vpop.xlane.xlu0 %885
        %v887 = vrcp.pop 32.0
        %v888 = vmul.f32 %v865, %v887
        %v889 = vmul.f32 %v868, %v887
        %v890 = vmul.f32 %v871, %v887
        %v891 = vmul.f32 %v874, %v887
        %v892 = vmul.f32 %v877, %v887
        %v893 = vmul.f32 %v880, %v887
        %v894 = vmul.f32 %v883, %v887
        %v895 = vmul.f32 %v886, %v887
        %v896 = vsub.f32 %v852, %v888
        %v897 = vsub.f32 %v853, %v889
        %v898 = vsub.f32 %v854, %v890
        %v899 = vsub.f32 %v855, %v891
        %v900 = vsub.f32 %v856, %v892
        %v901 = vsub.f32 %v857, %v893
        %v902 = vsub.f32 %v858, %v894
        %v903 = vsub.f32 %v859, %v895
        %v904 = vmul.f32 %v896, %v896
        %v905 = vmul.f32 %v897, %v897
        %v906 = vmul.f32 %v898, %v898
        %v907 = vmul.f32 %v899, %v899
        %v908 = vmul.f32 %v900, %v900
        %v909 = vmul.f32 %v901, %v901
        %v910 = vmul.f32 %v902, %v902
        %v911 = vmul.f32 %v903, %v903
        %v912 = vsel %vm862, %v904, 0.0
        %913 = vadd.xlane.f32.xlu0 %v912
        %v914 = vpop.xlane.xlu0 %913
        %v915 = vsel %vm862, %v905, 0.0
        %916 = vadd.xlane.f32.xlu0 %v915
        %v917 = vpop.xlane.xlu0 %916
        %v918 = vsel %vm862, %v906, 0.0
        %919 = vadd.xlane.f32.xlu0 %v918
        %v920 = vpop.xlane.xlu0 %919
        %v921 = vsel %vm862, %v907, 0.0
        %922 = vadd.xlane.f32.xlu0 %v921
        %v923 = vpop.xlane.xlu0 %922
        %v924 = vsel %vm862, %v908, 0.0
        %925 = vadd.xlane.f32.xlu0 %v924
        %v926 = vpop.xlane.xlu0 %925
        %v927 = vsel %vm862, %v909, 0.0
        %928 = vadd.xlane.f32.xlu0 %v927
        %v929 = vpop.xlane.xlu0 %928
        %v930 = vsel %vm862, %v910, 0.0
        %931 = vadd.xlane.f32.xlu0 %v930
        %v932 = vpop.xlane.xlu0 %931
        %v933 = vsel %vm862, %v911, 0.0
        %934 = vadd.xlane.f32.xlu0 %v933
        %v935 = vpop.xlane.xlu0 %934
        %v936 = vmul.f32 %v914, %v887
        %v937 = vmul.f32 %v917, %v887
        %v938 = vmul.f32 %v920, %v887
        %v939 = vmul.f32 %v923, %v887
        %v940 = vmul.f32 %v926, %v887
        %v941 = vmul.f32 %v929, %v887
        %v942 = vmul.f32 %v932, %v887
        %v943 = vmul.f32 %v935, %v887
        %v944 = vadd.f32 %v936, 1e-05
        %v945 = vadd.f32 %v937, 1e-05
        %v946 = vadd.f32 %v938, 1e-05
        %v947 = vadd.f32 %v939, 1e-05
        %v948 = vadd.f32 %v940, 1e-05
        %v949 = vadd.f32 %v941, 1e-05
        %v950 = vadd.f32 %v942, 1e-05
        %v951 = vadd.f32 %v943, 1e-05
        %v952 = vrsqrt.pop %v944
        %v953 = vrsqrt.pop %v945
        %v954 = vrsqrt.pop %v946
        %v955 = vrsqrt.pop %v947
        %v956 = vrsqrt.pop %v948
        %v957 = vrsqrt.pop %v949
        %v958 = vrsqrt.pop %v950
        %v959 = vrsqrt.pop %v951
        %v960 = vmul.f32 %v896, %v952
        %v961 = vmul.f32 %v897, %v953
        %v962 = vmul.f32 %v898, %v954
        %v963 = vmul.f32 %v899, %v955
        %v964 = vmul.f32 %v900, %v956
        %v965 = vmul.f32 %v901, %v957
        %v966 = vmul.f32 %v902, %v958
        %v967 = vmul.f32 %v903, %v959
        %v969 = vlaneseq
        %v970 = vshrl.u32 %v969, 7
        %v971 = vsub.s32 0, %v970
        %v972 = vrot.slane %v860, %v971
        %v974 = vmul.f32 %v960, %v972
        %v975 = vmul.f32 %v961, %v972
        %v976 = vmul.f32 %v962, %v972
        %v977 = vmul.f32 %v963, %v972
        %v978 = vmul.f32 %v964, %v972
        %v979 = vmul.f32 %v965, %v972
        %v980 = vmul.f32 %v966, %v972
        %v981 = vmul.f32 %v967, %v972
        %v983 = vlaneseq
        %v984 = vshrl.u32 %v983, 7
        %v985 = vsub.s32 0, %v984
        %v986 = vrot.slane %v861, %v985
        %v988 = vadd.f32 %v974, %v986
        %v989 = vadd.f32 %v975, %v986
        %v990 = vadd.f32 %v976, %v986
        %v991 = vadd.f32 %v977, %v986
        %v992 = vadd.f32 %v978, %v986
        %v993 = vadd.f32 %v979, %v986
        %v994 = vadd.f32 %v980, %v986
        %v995 = vadd.f32 %v981, %v986
        %v996 = vpack.c.bf16 %v989, %v988
        %v997 = vpack.c.bf16 %v991, %v990
        %v998 = vpack.c.bf16 %v993, %v992
        %v999 = vpack.c.bf16 %v995, %v994
        %v1000 = vld [vmem:[%s4] sm:$0xff]
        %v1001 = vld [vmem:[%s4 + $0x8] sm:$0xff]
        %v1002 = vld [vmem:[%s4 + $0x10] sm:$0xff]
        %v1003 = vld [vmem:[%s4 + $0x18] sm:$0xff]
        %v1004 = vpack.c.bf16 %v1001, %v1000
        %v1005 = vpack.c.bf16 %v1003, %v1002
        %v1006 = vld [vmem:[#allocation7] sm:$0x1]
        %v1008 = vlaneseq
        %v1009 = vshrl.u32 %v1008, 7
        %v1010 = vsub.s32 0, %v1009
        %v1011 = vrot.slane %v1006, %v1010
        %v1014 = vsel %vm862, %v996, 0
        %v1017 = vsel %vm862, %v997, 0
        %v1020 = vsel %vm862, %v998, 0
        %v1023 = vsel %vm862, %v999, 0
        %1025 = vmatprep.subr.bf16.mxu0 0
        %1026 = vmatpush1.bf16.msra.mxu0 0
        %1027 = vmatprep.subr.bf16.mxu0 0
        %1028 = vmatpush1.bf16.msra.mxu0 0
        %1029 = vmatprep.subr.bf16.mxu0 0
        %1030 = vmatpush1.bf16.msra.mxu0 0
        %1031 = vmatprep.subr.bf16.mxu0 0
        %1032 = vmatpush1.bf16.msra.mxu0 0
        %1033 = vmatprep.subr.bf16.mxu0 0
        %1034 = vmatpush1.bf16.msra.mxu0 0
        %1035 = vmatprep.subr.bf16.mxu0 0
        %1036 = vmatpush1.bf16.msra.mxu0 0
        %1037 = vmatprep.subr.bf16.mxu0 0
        %1038 = vmatpush1.bf16.msra.mxu0 %v1005
        %1039 = vmatprep.subr.bf16.mxu0 0
        %1040 = vmatpush1.bf16.msra.mxu0 %v1004
        %1041 = vmatprep.subr.bf16.mxu0 0
        %1042 = vmatpush2.bf16.msra.mxu0 0
        %1043 = vmatprep.subr.bf16.mxu0 0
        %1044 = vmatpush2.bf16.msra.mxu0 0
        %1045 = vmatprep.subr.bf16.mxu0 0
        %1046 = vmatpush2.bf16.msra.mxu0 0
        %1047 = vmatprep.subr.bf16.mxu0 0
        %1048 = vmatpush2.bf16.msra.mxu0 0
        %1049 = vmatprep.subr.bf16.mxu0 0
        %1050 = vmatpush2.bf16.msra.mxu0 0
        %1051 = vmatprep.subr.bf16.mxu0 0
        %1052 = vmatpush2.bf16.msra.mxu0 0
        %1053 = vmatprep.subr.bf16.mxu0 0
        %1054 = vmatpush2.bf16.msra.mxu0 0
        %1055 = vmatprep.subr.bf16.mxu0 0
        %1056 = vmatpush2.bf16.msra.mxu0 0
        %1057 = vmatprep.mubr.bf16.mxu0 0
        %1058 = vmatmul.mubr.bf16.gmra.mxu0 %v1014
        %v1059 = vpop.f32.mrf.mxu0
        %v1060 = vadd.f32 %v1011, %v1059
        %v1061 = vpop.f32.mrf.mxu0
        %v1062 = vpop.f32.mrf.mxu0
        %v1063 = vadd.f32 %v1011, %v1062
        %v1064 = vpop.f32.mrf.mxu0
        %1065 = vmatprep.mubr.bf16.mxu0 0
        %1066 = vmatmul.mubr.bf16.gmra.mxu0 %v1017
        %v1067 = vpop.f32.mrf.mxu0
        %v1068 = vadd.f32 %v1011, %v1067
        %v1069 = vpop.f32.mrf.mxu0
        %v1070 = vpop.f32.mrf.mxu0
        %v1071 = vadd.f32 %v1011, %v1070
        %v1072 = vpop.f32.mrf.mxu0
        %1073 = vmatprep.mubr.bf16.mxu0 0
        %1074 = vmatmul.mubr.bf16.gmra.mxu0 %v1020
        %v1075 = vpop.f32.mrf.mxu0
        %v1076 = vadd.f32 %v1011, %v1075
        %v1077 = vpop.f32.mrf.mxu0
        %v1078 = vpop.f32.mrf.mxu0
        %v1079 = vadd.f32 %v1011, %v1078
        %v1080 = vpop.f32.mrf.mxu0
        %1081 = vmatprep.mubr.bf16.mxu0 0
        %1082 = vmatmul.mubr.bf16.gmra.mxu0 %v1023
        %v1083 = vpop.f32.mrf.mxu0
        %v1084 = vadd.f32 %v1011, %v1083
        %v1085 = vpop.f32.mrf.mxu0
        %v1086 = vpop.f32.mrf.mxu0
        %v1087 = vadd.f32 %v1011, %v1086
        %v1088 = vpop.f32.mrf.mxu0
        %1089 = vdwg.mxu0
        %v1090 = vld [vmem:[%s5] sm:$0xff]
        %v1091 = vld [vmem:[%s5 + $0x8] sm:$0xff]
        %v1092 = vld [vmem:[%s5 + $0x10] sm:$0xff]
        %v1093 = vld [vmem:[%s5 + $0x18] sm:$0xff]
        %v1094 = vpack.c.bf16 %v1091, %v1090
        %v1095 = vpack.c.bf16 %v1093, %v1092
        %v1096 = vld [vmem:[#allocation8] sm:$0x1]
        %v1098 = vlaneseq
        %v1099 = vshrl.u32 %v1098, 7
        %v1100 = vsub.s32 0, %v1099
        %v1101 = vrot.slane %v1096, %v1100
        %1103 = vmatprep.subr.bf16.mxu0 0
        %1104 = vmatpush1.bf16.msra.mxu0 0
        %1105 = vmatprep.subr.bf16.mxu0 0
        %1106 = vmatpush1.bf16.msra.mxu0 0
        %1107 = vmatprep.subr.bf16.mxu0 0
        %1108 = vmatpush1.bf16.msra.mxu0 0
        %1109 = vmatprep.subr.bf16.mxu0 0
        %1110 = vmatpush1.bf16.msra.mxu0 0
        %1111 = vmatprep.subr.bf16.mxu0 0
        %1112 = vmatpush1.bf16.msra.mxu0 0
        %1113 = vmatprep.subr.bf16.mxu0 0
        %1114 = vmatpush1.bf16.msra.mxu0 0
        %1115 = vmatprep.subr.bf16.mxu0 0
        %1116 = vmatpush1.bf16.msra.mxu0 %v1095
        %1117 = vmatprep.subr.bf16.mxu0 0
        %1118 = vmatpush1.bf16.msra.mxu0 %v1094
        %1119 = vmatprep.subr.bf16.mxu0 0
        %1120 = vmatpush2.bf16.msra.mxu0 0
        %1121 = vmatprep.subr.bf16.mxu0 0
        %1122 = vmatpush2.bf16.msra.mxu0 0
        %1123 = vmatprep.subr.bf16.mxu0 0
        %1124 = vmatpush2.bf16.msra.mxu0 0
        %1125 = vmatprep.subr.bf16.mxu0 0
        %1126 = vmatpush2.bf16.msra.mxu0 0
        %1127 = vmatprep.subr.bf16.mxu0 0
        %1128 = vmatpush2.bf16.msra.mxu0 0
        %1129 = vmatprep.subr.bf16.mxu0 0
        %1130 = vmatpush2.bf16.msra.mxu0 0
        %1131 = vmatprep.subr.bf16.mxu0 0
        %1132 = vmatpush2.bf16.msra.mxu0 0
        %1133 = vmatprep.subr.bf16.mxu0 0
        %1134 = vmatpush2.bf16.msra.mxu0 0
        %1135 = vmatprep.mubr.bf16.mxu0 0
        %1136 = vmatmul.mubr.bf16.gmra.mxu0 %v1014
        %v1137 = vpop.f32.mrf.mxu0
        %v1138 = vadd.f32 %v1101, %v1137
        %v1139 = vpop.f32.mrf.mxu0
        %v1140 = vpop.f32.mrf.mxu0
        %v1141 = vadd.f32 %v1101, %v1140
        %v1142 = vpop.f32.mrf.mxu0
        %1143 = vmatprep.mubr.bf16.mxu0 0
        %1144 = vmatmul.mubr.bf16.gmra.mxu0 %v1017
        %v1145 = vpop.f32.mrf.mxu0
        %v1146 = vadd.f32 %v1101, %v1145
        %v1147 = vpop.f32.mrf.mxu0
        %v1148 = vpop.f32.mrf.mxu0
        %v1149 = vadd.f32 %v1101, %v1148
        %v1150 = vpop.f32.mrf.mxu0
        %1151 = vmatprep.mubr.bf16.mxu0 0
        %1152 = vmatmul.mubr.bf16.gmra.mxu0 %v1020
        %v1153 = vpop.f32.mrf.mxu0
        %v1154 = vadd.f32 %v1101, %v1153
        %v1155 = vpop.f32.mrf.mxu0
        %v1156 = vpop.f32.mrf.mxu0
        %v1157 = vadd.f32 %v1101, %v1156
        %v1158 = vpop.f32.mrf.mxu0
        %1159 = vmatprep.mubr.bf16.mxu0 0
        %1160 = vmatmul.mubr.bf16.gmra.mxu0 %v1023
        %v1161 = vpop.f32.mrf.mxu0
        %v1162 = vadd.f32 %v1101, %v1161
        %v1163 = vpop.f32.mrf.mxu0
        %v1164 = vpop.f32.mrf.mxu0
        %v1165 = vadd.f32 %v1101, %v1164
        %v1166 = vpop.f32.mrf.mxu0
        %1167 = vdwg.mxu0
        %v1168 = vld [vmem:[%s6] sm:$0xff]
        %v1169 = vld [vmem:[%s6 + $0x8] sm:$0xff]
        %v1170 = vld [vmem:[%s6 + $0x10] sm:$0xff]
        %v1171 = vld [vmem:[%s6 + $0x18] sm:$0xff]
        %v1172 = vpack.c.bf16 %v1169, %v1168
        %v1173 = vpack.c.bf16 %v1171, %v1170
        %v1174 = vld [vmem:[#allocation10] sm:$0x1]
        %v1176 = vlaneseq
        %v1177 = vshrl.u32 %v1176, 7
        %v1178 = vsub.s32 0, %v1177
        %v1179 = vrot.slane %v1174, %v1178
        %1181 = vmatprep.subr.bf16.mxu0 0
        %1182 = vmatpush1.bf16.msra.mxu0 0
        %1183 = vmatprep.subr.bf16.mxu0 0
        %1184 = vmatpush1.bf16.msra.mxu0 0
        %1185 = vmatprep.subr.bf16.mxu0 0
        %1186 = vmatpush1.bf16.msra.mxu0 0
        %1187 = vmatprep.subr.bf16.mxu0 0
        %1188 = vmatpush1.bf16.msra.mxu0 0
        %1189 = vmatprep.subr.bf16.mxu0 0
        %1190 = vmatpush1.bf16.msra.mxu0 0
        %1191 = vmatprep.subr.bf16.mxu0 0
        %1192 = vmatpush1.bf16.msra.mxu0 0
        %1193 = vmatprep.subr.bf16.mxu0 0
        %1194 = vmatpush1.bf16.msra.mxu0 %v1173
        %1195 = vmatprep.subr.bf16.mxu0 0
        %1196 = vmatpush1.bf16.msra.mxu0 %v1172
        %1197 = vmatprep.subr.bf16.mxu0 0
        %1198 = vmatpush2.bf16.msra.mxu0 0
        %1199 = vmatprep.subr.bf16.mxu0 0
        %1200 = vmatpush2.bf16.msra.mxu0 0
        %1201 = vmatprep.subr.bf16.mxu0 0
        %1202 = vmatpush2.bf16.msra.mxu0 0
        %1203 = vmatprep.subr.bf16.mxu0 0
        %1204 = vmatpush2.bf16.msra.mxu0 0
        %1205 = vmatprep.subr.bf16.mxu0 0
        %1206 = vmatpush2.bf16.msra.mxu0 0
        %1207 = vmatprep.subr.bf16.mxu0 0
        %1208 = vmatpush2.bf16.msra.mxu0 0
        %1209 = vmatprep.subr.bf16.mxu0 0
        %1210 = vmatpush2.bf16.msra.mxu0 0
        %1211 = vmatprep.subr.bf16.mxu0 0
        %1212 = vmatpush2.bf16.msra.mxu0 0
        %1213 = vmatprep.mubr.bf16.mxu0 0
        %1214 = vmatmul.mubr.bf16.gmra.mxu0 %v1014
        %v1215 = vpop.f32.mrf.mxu0
        %v1216 = vadd.f32 %v1179, %v1215
        %v1217 = vpop.f32.mrf.mxu0
        %v1218 = vpop.f32.mrf.mxu0
        %v1219 = vadd.f32 %v1179, %v1218
        %v1220 = vpop.f32.mrf.mxu0
        %1221 = vmatprep.mubr.bf16.mxu0 0
        %1222 = vmatmul.mubr.bf16.gmra.mxu0 %v1017
        %v1223 = vpop.f32.mrf.mxu0
        %v1224 = vadd.f32 %v1179, %v1223
        %v1225 = vpop.f32.mrf.mxu0
        %v1226 = vpop.f32.mrf.mxu0
        %v1227 = vadd.f32 %v1179, %v1226
        %v1228 = vpop.f32.mrf.mxu0
        %1229 = vmatprep.mubr.bf16.mxu0 0
        %1230 = vmatmul.mubr.bf16.gmra.mxu0 %v1020
        %v1231 = vpop.f32.mrf.mxu0
        %v1232 = vadd.f32 %v1179, %v1231
        %v1233 = vpop.f32.mrf.mxu0
        %v1234 = vpop.f32.mrf.mxu0
        %v1235 = vadd.f32 %v1179, %v1234
        %v1236 = vpop.f32.mrf.mxu0
        %1237 = vmatprep.mubr.bf16.mxu0 0
        %1238 = vmatmul.mubr.bf16.gmra.mxu0 %v1023
        %v1239 = vpop.f32.mrf.mxu0
        %v1240 = vadd.f32 %v1179, %v1239
        %v1241 = vpop.f32.mrf.mxu0
        %v1242 = vpop.f32.mrf.mxu0
        %v1243 = vadd.f32 %v1179, %v1242
        %v1244 = vpop.f32.mrf.mxu0
        %1245 = vdwg.mxu0
        %v1246 = vld [vmem:[#allocation11] sm:$0xff]
        %v1247 = vld [vmem:[#allocation11 + $0x8] sm:$0xff]
        %v1248 = vld [vmem:[#allocation11 + $0x10] sm:$0xff]
        %v1249 = vld [vmem:[#allocation11 + $0x18] sm:$0xff]
        %v1250 = vpack.c.bf16 %v1063, %v1060
        %v1251 = vpack.c.bf16 %v1071, %v1068
        %v1252 = vpack.c.bf16 %v1079, %v1076
        %v1253 = vpack.c.bf16 %v1087, %v1084
        %v1254 = vpack.c.bf16 %v1141, %v1138
        %v1255 = vpack.c.bf16 %v1149, %v1146
        %v1256 = vpack.c.bf16 %v1157, %v1154
        %v1257 = vpack.c.bf16 %v1165, %v1162
        %v1258 = vpack.c.bf16 %v1219, %v1216
        %v1259 = vpack.c.bf16 %v1227, %v1224
        %v1260 = vpack.c.bf16 %v1235, %v1232
        %v1261 = vpack.c.bf16 %v1243, %v1240
        %vm1262 = vcmask 64512
        %v1264 = vsel %vm1262, %v1250, 0
        %v1267 = vsel %vm1262, %v1251, 0
        %v1270 = vsel %vm1262, %v1252, 0
        %v1273 = vsel %vm1262, %v1253, 0
        %v1276 = vsel %vm1262, %v1254, 0
        %v1279 = vsel %vm1262, %v1255, 0
        %v1282 = vsel %vm1262, %v1256, 0
        %v1285 = vsel %vm1262, %v1257, 0
        %1287 = vmatprep.subr.bf16.mxu0 0
        %1288 = vmatpush1.bf16.xpose.msra.mxu0 0
        %1289 = vmatprep.subr.bf16.mxu0 0
        %1290 = vmatpush1.bf16.xpose.msra.mxu0 0
        %1291 = vmatprep.subr.bf16.mxu0 0
        %1292 = vmatpush1.bf16.xpose.msra.mxu0 0
        %1293 = vmatprep.subr.bf16.mxu0 0
        %1294 = vmatpush1.bf16.xpose.msra.mxu0 0
        %1295 = vmatprep.subr.bf16.mxu0 0
        %1296 = vmatpush1.bf16.xpose.msra.mxu0 %v1285
        %1297 = vmatprep.subr.bf16.mxu0 0
        %1298 = vmatpush1.bf16.xpose.msra.mxu0 %v1282
        %1299 = vmatprep.subr.bf16.mxu0 0
        %1300 = vmatpush1.bf16.xpose.msra.mxu0 %v1279
        %1301 = vmatprep.subr.bf16.mxu0 0
        %1302 = vmatpush1.bf16.xpose.msra.mxu0 %v1276
        %1303 = vmatprep.subr.bf16.mxu0 0
        %1304 = vmatpush2.bf16.xpose.msra.mxu0 0
        %1305 = vmatprep.subr.bf16.mxu0 0
        %1306 = vmatpush2.bf16.xpose.msra.mxu0 0
        %1307 = vmatprep.subr.bf16.mxu0 0
        %1308 = vmatpush2.bf16.xpose.msra.mxu0 0
        %1309 = vmatprep.subr.bf16.mxu0 0
        %1310 = vmatpush2.bf16.xpose.msra.mxu0 0
        %1311 = vmatprep.subr.bf16.mxu0 0
        %1312 = vmatpush2.bf16.xpose.msra.mxu0 0
        %1313 = vmatprep.subr.bf16.mxu0 0
        %1314 = vmatpush2.bf16.xpose.msra.mxu0 0
        %1315 = vmatprep.subr.bf16.mxu0 0
        %1316 = vmatpush2.bf16.xpose.msra.mxu0 0
        %1317 = vmatprep.subr.bf16.mxu0 0
        %1318 = vmatpush2.bf16.xpose.msra.mxu0 0
        %1319 = vmatprep.mubr.bf16.mxu0 0
        %1320 = vmatmul.mubr.bf16.gmra.mxu0 %v1264
        %v1321 = vpop.f32.mrf.mxu0
        %v1322 = vadd.f32 0.0, %v1321
        %v1323 = vpop.f32.mrf.mxu0
        %v1324 = vpop.f32.mrf.mxu0
        %v1325 = vadd.f32 0.0, %v1324
        %v1326 = vpop.f32.mrf.mxu0
        %1327 = vmatprep.mubr.bf16.mxu0 0
        %1328 = vmatmul.mubr.bf16.gmra.mxu0 %v1267
        %v1329 = vpop.f32.mrf.mxu0
        %v1330 = vadd.f32 0.0, %v1329
        %v1331 = vpop.f32.mrf.mxu0
        %v1332 = vpop.f32.mrf.mxu0
        %v1333 = vadd.f32 0.0, %v1332
        %v1334 = vpop.f32.mrf.mxu0
        %1335 = vmatprep.mubr.bf16.mxu0 0
        %1336 = vmatmul.mubr.bf16.gmra.mxu0 %v1270
        %v1337 = vpop.f32.mrf.mxu0
        %v1338 = vadd.f32 0.0, %v1337
        %v1339 = vpop.f32.mrf.mxu0
        %v1340 = vpop.f32.mrf.mxu0
        %v1341 = vadd.f32 0.0, %v1340
        %v1342 = vpop.f32.mrf.mxu0
        %1343 = vmatprep.mubr.bf16.mxu0 0
        %1344 = vmatmul.mubr.bf16.gmra.mxu0 %v1273
        %v1345 = vpop.f32.mrf.mxu0
        %v1346 = vadd.f32 0.0, %v1345
        %v1347 = vpop.f32.mrf.mxu0
        %v1348 = vpop.f32.mrf.mxu0
        %v1349 = vadd.f32 0.0, %v1348
        %v1350 = vpop.f32.mrf.mxu0
        %1351 = vdwg.mxu0
        %v1352 = vmul.f32 %v1322, 0.35355338
        %v1353 = vmul.f32 %v1325, 0.35355338
        %v1354 = vmul.f32 %v1330, 0.35355338
        %v1355 = vmul.f32 %v1333, 0.35355338
        %v1356 = vmul.f32 %v1338, 0.35355338
        %v1357 = vmul.f32 %v1341, 0.35355338
        %v1358 = vmul.f32 %v1346, 0.35355338
        %v1359 = vmul.f32 %v1349, 0.35355338
        %v1360 = vld [vmem:[%s1] sm:$0xff]
        %v1361 = vld [vmem:[%s1 + $0x8] sm:$0xff]
        %v1362 = vld [vmem:[%s1 + $0x10] sm:$0xff]
        %v1363 = vld [vmem:[%s1 + $0x18] sm:$0xff]
        %v1364 = vld [vmem:[%s1 + $0x20] sm:$0xff]
        %v1365 = vld [vmem:[%s1 + $0x28] sm:$0xff]
        %v1366 = vld [vmem:[%s1 + $0x30] sm:$0xff]
        %v1367 = vld [vmem:[%s1 + $0x38] sm:$0xff]
        %v1368 = vadd.f32 %v1352, %v1360
        %v1369 = vadd.f32 %v1353, %v1361
        %v1370 = vadd.f32 %v1354, %v1362
        %v1371 = vadd.f32 %v1355, %v1363
        %v1372 = vadd.f32 %v1356, %v1364
        %v1373 = vadd.f32 %v1357, %v1365
        %v1374 = vadd.f32 %v1358, %v1366
        %v1375 = vadd.f32 %v1359, %v1367
        %vm1376 = vcmask 523264
        %v1377 = vsel %vm1376, %v1368, -inf
        %1378 = vmax.xlane.f32.xlu0 %v1377
        %v1379 = vpop.xlane.xlu0 %1378
        %v1380 = vsel %vm1376, %v1369, -inf
        %1381 = vmax.xlane.f32.xlu0 %v1380
        %v1382 = vpop.xlane.xlu0 %1381
        %v1383 = vsel %vm1376, %v1370, -inf
        %1384 = vmax.xlane.f32.xlu0 %v1383
        %v1385 = vpop.xlane.xlu0 %1384
        %v1386 = vsel %vm1376, %v1371, -inf
        %1387 = vmax.xlane.f32.xlu0 %v1386
        %v1388 = vpop.xlane.xlu0 %1387
        %v1389 = vsel %vm1376, %v1372, -inf
        %1390 = vmax.xlane.f32.xlu0 %v1389
        %v1391 = vpop.xlane.xlu0 %1390
        %v1392 = vsel %vm1376, %v1373, -inf
        %1393 = vmax.xlane.f32.xlu0 %v1392
        %v1394 = vpop.xlane.xlu0 %1393
        %v1395 = vsel %vm1376, %v1374, -inf
        %1396 = vmax.xlane.f32.xlu0 %v1395
        %v1397 = vpop.xlane.xlu0 %1396
        %v1398 = vsel %vm1376, %v1375, -inf
        %1399 = vmax.xlane.f32.xlu0 %v1398
        %v1400 = vpop.xlane.xlu0 %1399
        %v1401 = vsub.f32 %v1368, %v1379
        %v1402 = vsub.f32 %v1369, %v1382
        %v1403 = vsub.f32 %v1370, %v1385
        %v1404 = vsub.f32 %v1371, %v1388
        %v1405 = vsub.f32 %v1372, %v1391
        %v1406 = vsub.f32 %v1373, %v1394
        %v1407 = vsub.f32 %v1374, %v1397
        %v1408 = vsub.f32 %v1375, %v1400
        %v1409 = vmul.f32 %v1401, 1.442695
        %v1410 = vpow.pop %v1409
        %v1411 = vmul.f32 %v1402, 1.442695
        %v1412 = vpow.pop %v1411
        %v1413 = vmul.f32 %v1403, 1.442695
        %v1414 = vpow.pop %v1413
        %v1415 = vmul.f32 %v1404, 1.442695
        %v1416 = vpow.pop %v1415
        %v1417 = vmul.f32 %v1405, 1.442695
        %v1418 = vpow.pop %v1417
        %v1419 = vmul.f32 %v1406, 1.442695
        %v1420 = vpow.pop %v1419
        %v1421 = vmul.f32 %v1407, 1.442695
        %v1422 = vpow.pop %v1421
        %v1423 = vmul.f32 %v1408, 1.442695
        %v1424 = vpow.pop %v1423
        %v1425 = vsel %vm1376, %v1410, 0.0
        %1426 = vadd.xlane.f32.xlu0 %v1425
        %v1427 = vpop.xlane.xlu0 %1426
        %v1428 = vsel %vm1376, %v1412, 0.0
        %1429 = vadd.xlane.f32.xlu0 %v1428
        %v1430 = vpop.xlane.xlu0 %1429
        %v1431 = vsel %vm1376, %v1414, 0.0
        %1432 = vadd.xlane.f32.xlu0 %v1431
        %v1433 = vpop.xlane.xlu0 %1432
        %v1434 = vsel %vm1376, %v1416, 0.0
        %1435 = vadd.xlane.f32.xlu0 %v1434
        %v1436 = vpop.xlane.xlu0 %1435
        %v1437 = vsel %vm1376, %v1418, 0.0
        %1438 = vadd.xlane.f32.xlu0 %v1437
        %v1439 = vpop.xlane.xlu0 %1438
        %v1440 = vsel %vm1376, %v1420, 0.0
        %1441 = vadd.xlane.f32.xlu0 %v1440
        %v1442 = vpop.xlane.xlu0 %1441
        %v1443 = vsel %vm1376, %v1422, 0.0
        %1444 = vadd.xlane.f32.xlu0 %v1443
        %v1445 = vpop.xlane.xlu0 %1444
        %v1446 = vsel %vm1376, %v1424, 0.0
        %1447 = vadd.xlane.f32.xlu0 %v1446
        %v1448 = vpop.xlane.xlu0 %1447
        %v1449 = vrcp.pop %v1427
        %v1450 = vrcp.pop %v1430
        %v1451 = vrcp.pop %v1433
        %v1452 = vrcp.pop %v1436
        %v1453 = vrcp.pop %v1439
        %v1454 = vrcp.pop %v1442
        %v1455 = vrcp.pop %v1445
        %v1456 = vrcp.pop %v1448
        %v1457 = vmul.f32 %v1410, %v1449
        %v1458 = vmul.f32 %v1412, %v1450
        %v1459 = vmul.f32 %v1414, %v1451
        %v1460 = vmul.f32 %v1416, %v1452
        %v1461 = vmul.f32 %v1418, %v1453
        %v1462 = vmul.f32 %v1420, %v1454
        %v1463 = vmul.f32 %v1422, %v1455
        %v1464 = vmul.f32 %v1424, %v1456
        %v1465 = vpack.c.bf16 %v1458, %v1457
        %v1466 = vpack.c.bf16 %v1460, %v1459
        %v1467 = vpack.c.bf16 %v1462, %v1461
        %v1468 = vpack.c.bf16 %v1464, %v1463
        %v1470 = vsel %vm1376, %v1465, 0
        %v1473 = vsel %vm1376, %v1466, 0
        %v1476 = vsel %vm1376, %v1467, 0
        %v1479 = vsel %vm1376, %v1468, 0
        %1481 = vmatprep.subr.bf16.mxu0 0
        %1482 = vmatpush1.bf16.msra.mxu0 0
        %1483 = vmatprep.subr.bf16.mxu0 0
        %1484 = vmatpush1.bf16.msra.mxu0 0
        %1485 = vmatprep.subr.bf16.mxu0 0
        %1486 = vmatpush1.bf16.msra.mxu0 0
        %1487 = vmatprep.subr.bf16.mxu0 0
        %1488 = vmatpush1.bf16.msra.mxu0 0
        %1489 = vmatprep.subr.bf16.mxu0 0
        %1490 = vmatpush1.bf16.msra.mxu0 %v1261
        %1491 = vmatprep.subr.bf16.mxu0 0
        %1492 = vmatpush1.bf16.msra.mxu0 %v1260
        %1493 = vmatprep.subr.bf16.mxu0 0
        %1494 = vmatpush1.bf16.msra.mxu0 %v1259
        %1495 = vmatprep.subr.bf16.mxu0 0
        %1496 = vmatpush1.bf16.msra.mxu0 %v1258
        %1497 = vmatprep.subr.bf16.mxu0 0
        %1498 = vmatpush2.bf16.msra.mxu0 0
        %1499 = vmatprep.subr.bf16.mxu0 0
        %1500 = vmatpush2.bf16.msra.mxu0 0
        %1501 = vmatprep.subr.bf16.mxu0 0
        %1502 = vmatpush2.bf16.msra.mxu0 0
        %1503 = vmatprep.subr.bf16.mxu0 0
        %1504 = vmatpush2.bf16.msra.mxu0 0
        %1505 = vmatprep.subr.bf16.mxu0 0
        %1506 = vmatpush2.bf16.msra.mxu0 0
        %1507 = vmatprep.subr.bf16.mxu0 0
        %1508 = vmatpush2.bf16.msra.mxu0 0
        %1509 = vmatprep.subr.bf16.mxu0 0
        %1510 = vmatpush2.bf16.msra.mxu0 0
        %1511 = vmatprep.subr.bf16.mxu0 0
        %1512 = vmatpush2.bf16.msra.mxu0 0
        %1513 = vmatprep.mubr.bf16.mxu0 0
        %1514 = vmatmul.mubr.bf16.gmra.mxu0 %v1470
        %v1515 = vpop.f32.mrf.mxu0
        %v1516 = vadd.f32 0.0, %v1515
        %v1517 = vpop.f32.mrf.mxu0
        %v1518 = vpop.f32.mrf.mxu0
        %v1519 = vadd.f32 0.0, %v1518
        %v1520 = vpop.f32.mrf.mxu0
        %1521 = vmatprep.mubr.bf16.mxu0 0
        %1522 = vmatmul.mubr.bf16.gmra.mxu0 %v1473
        %v1523 = vpop.f32.mrf.mxu0
        %v1524 = vadd.f32 0.0, %v1523
        %v1525 = vpop.f32.mrf.mxu0
        %v1526 = vpop.f32.mrf.mxu0
        %v1527 = vadd.f32 0.0, %v1526
        %v1528 = vpop.f32.mrf.mxu0
        %1529 = vmatprep.mubr.bf16.mxu0 0
        %1530 = vmatmul.mubr.bf16.gmra.mxu0 %v1476
        %v1531 = vpop.f32.mrf.mxu0
        %v1532 = vadd.f32 0.0, %v1531
        %v1533 = vpop.f32.mrf.mxu0
        %v1534 = vpop.f32.mrf.mxu0
        %v1535 = vadd.f32 0.0, %v1534
        %v1536 = vpop.f32.mrf.mxu0
        %1537 = vmatprep.mubr.bf16.mxu0 0
        %1538 = vmatmul.mubr.bf16.gmra.mxu0 %v1479
        %v1539 = vpop.f32.mrf.mxu0
        %v1540 = vadd.f32 0.0, %v1539
        %v1541 = vpop.f32.mrf.mxu0
        %v1542 = vpop.f32.mrf.mxu0
        %v1543 = vadd.f32 0.0, %v1542
        %v1544 = vpop.f32.mrf.mxu0
        %1545 = vdwg.mxu0
        %v1546 = vpack.c.bf16 %v1519, %v1516
        %v1547 = vpack.c.bf16 %v1527, %v1524
        %v1548 = vpack.c.bf16 %v1535, %v1532
        %v1549 = vpack.c.bf16 %v1543, %v1540
        %v1550 = vpack.c.bf16 %v1246, %v1246
        %1555 = vrot.lane.b32.xlu0 %v1250, 120
        %v1556 = vpop.permute.xlu0 %1555
        %1557 = vrot.lane.b32.xlu0 %v1251, 120
        %v1558 = vpop.permute.xlu0 %1557
        %1559 = vrot.lane.b32.xlu0 %v1252, 120
        %v1560 = vpop.permute.xlu0 %1559
        %1561 = vrot.lane.b32.xlu0 %v1253, 120
        %v1562 = vpop.permute.xlu0 %1561
        %1567 = vrot.lane.b32.xlu0 %v1254, 120
        %v1568 = vpop.permute.xlu0 %1567
        %1569 = vrot.lane.b32.xlu0 %v1255, 120
        %v1570 = vpop.permute.xlu0 %1569
        %1571 = vrot.lane.b32.xlu0 %v1256, 120
        %v1572 = vpop.permute.xlu0 %1571
        %1573 = vrot.lane.b32.xlu0 %v1257, 120
        %v1574 = vpop.permute.xlu0 %1573
        %v1576 = vsel %vm1262, %v1556, 0
        %v1579 = vsel %vm1262, %v1558, 0
        %v1582 = vsel %vm1262, %v1560, 0
        %v1585 = vsel %vm1262, %v1562, 0
        %v1588 = vsel %vm1262, %v1568, 0
        %v1591 = vsel %vm1262, %v1570, 0
        %v1594 = vsel %vm1262, %v1572, 0
        %v1597 = vsel %vm1262, %v1574, 0
        %1599 = vmatprep.subr.bf16.mxu0 0
        %1600 = vmatpush1.bf16.xpose.msra.mxu0 0
        %1601 = vmatprep.subr.bf16.mxu0 0
        %1602 = vmatpush1.bf16.xpose.msra.mxu0 0
        %1603 = vmatprep.subr.bf16.mxu0 0
        %1604 = vmatpush1.bf16.xpose.msra.mxu0 0
        %1605 = vmatprep.subr.bf16.mxu0 0
        %1606 = vmatpush1.bf16.xpose.msra.mxu0 0
        %1607 = vmatprep.subr.bf16.mxu0 0
        %1608 = vmatpush1.bf16.xpose.msra.mxu0 %v1597
        %1609 = vmatprep.subr.bf16.mxu0 0
        %1610 = vmatpush1.bf16.xpose.msra.mxu0 %v1594
        %1611 = vmatprep.subr.bf16.mxu0 0
        %1612 = vmatpush1.bf16.xpose.msra.mxu0 %v1591
        %1613 = vmatprep.subr.bf16.mxu0 0
        %1614 = vmatpush1.bf16.xpose.msra.mxu0 %v1588
        %1615 = vmatprep.subr.bf16.mxu0 0
        %1616 = vmatpush2.bf16.xpose.msra.mxu0 0
        %1617 = vmatprep.subr.bf16.mxu0 0
        %1618 = vmatpush2.bf16.xpose.msra.mxu0 0
        %1619 = vmatprep.subr.bf16.mxu0 0
        %1620 = vmatpush2.bf16.xpose.msra.mxu0 0
        %1621 = vmatprep.subr.bf16.mxu0 0
        %1622 = vmatpush2.bf16.xpose.msra.mxu0 0
        %1623 = vmatprep.subr.bf16.mxu0 0
        %1624 = vmatpush2.bf16.xpose.msra.mxu0 0
        %1625 = vmatprep.subr.bf16.mxu0 0
        %1626 = vmatpush2.bf16.xpose.msra.mxu0 0
        %1627 = vmatprep.subr.bf16.mxu0 0
        %1628 = vmatpush2.bf16.xpose.msra.mxu0 0
        %1629 = vmatprep.subr.bf16.mxu0 0
        %1630 = vmatpush2.bf16.xpose.msra.mxu0 0
        %1631 = vmatprep.mubr.bf16.mxu0 0
        %1632 = vmatmul.mubr.bf16.gmra.mxu0 %v1576
        %v1633 = vpop.f32.mrf.mxu0
        %v1634 = vadd.f32 0.0, %v1633
        %v1635 = vpop.f32.mrf.mxu0
        %v1636 = vpop.f32.mrf.mxu0
        %v1637 = vadd.f32 0.0, %v1636
        %v1638 = vpop.f32.mrf.mxu0
        %1639 = vmatprep.mubr.bf16.mxu0 0
        %1640 = vmatmul.mubr.bf16.gmra.mxu0 %v1579
        %v1641 = vpop.f32.mrf.mxu0
        %v1642 = vadd.f32 0.0, %v1641
        %v1643 = vpop.f32.mrf.mxu0
        %v1644 = vpop.f32.mrf.mxu0
        %v1645 = vadd.f32 0.0, %v1644
        %v1646 = vpop.f32.mrf.mxu0
        %1647 = vmatprep.mubr.bf16.mxu0 0
        %1648 = vmatmul.mubr.bf16.gmra.mxu0 %v1582
        %v1649 = vpop.f32.mrf.mxu0
        %v1650 = vadd.f32 0.0, %v1649
        %v1651 = vpop.f32.mrf.mxu0
        %v1652 = vpop.f32.mrf.mxu0
        %v1653 = vadd.f32 0.0, %v1652
        %v1654 = vpop.f32.mrf.mxu0
        %1655 = vmatprep.mubr.bf16.mxu0 0
        %1656 = vmatmul.mubr.bf16.gmra.mxu0 %v1585
        %v1657 = vpop.f32.mrf.mxu0
        %v1658 = vadd.f32 0.0, %v1657
        %v1659 = vpop.f32.mrf.mxu0
        %v1660 = vpop.f32.mrf.mxu0
        %v1661 = vadd.f32 0.0, %v1660
        %v1662 = vpop.f32.mrf.mxu0
        %1663 = vdwg.mxu0
        %v1664 = vmul.f32 %v1634, 0.35355338
        %v1665 = vmul.f32 %v1637, 0.35355338
        %v1666 = vmul.f32 %v1642, 0.35355338
        %v1667 = vmul.f32 %v1645, 0.35355338
        %v1668 = vmul.f32 %v1650, 0.35355338
        %v1669 = vmul.f32 %v1653, 0.35355338
        %v1670 = vmul.f32 %v1658, 0.35355338
        %v1671 = vmul.f32 %v1661, 0.35355338
        %s1672 = scalar_lea.vmem %s1, 64
        %v1673 = vld [vmem:[%s1672] sm:$0xff]
        %v1674 = vld [vmem:[%s1672 + $0x8] sm:$0xff]
        %v1675 = vld [vmem:[%s1672 + $0x10] sm:$0xff]
        %v1676 = vld [vmem:[%s1672 + $0x18] sm:$0xff]
        %v1677 = vld [vmem:[%s1672 + $0x20] sm:$0xff]
        %v1678 = vld [vmem:[%s1672 + $0x28] sm:$0xff]
        %v1679 = vld [vmem:[%s1672 + $0x30] sm:$0xff]
        %v1680 = vld [vmem:[%s1672 + $0x38] sm:$0xff]
        %v1681 = vadd.f32 %v1664, %v1673
        %v1682 = vadd.f32 %v1665, %v1674
        %v1683 = vadd.f32 %v1666, %v1675
        %v1684 = vadd.f32 %v1667, %v1676
        %v1685 = vadd.f32 %v1668, %v1677
        %v1686 = vadd.f32 %v1669, %v1678
        %v1687 = vadd.f32 %v1670, %v1679
        %v1688 = vadd.f32 %v1671, %v1680
        %v1689 = vsel %vm1376, %v1681, -inf
        %1690 = vmax.xlane.f32.xlu0 %v1689
        %v1691 = vpop.xlane.xlu0 %1690
        %v1692 = vsel %vm1376, %v1682, -inf
        %1693 = vmax.xlane.f32.xlu0 %v1692
        %v1694 = vpop.xlane.xlu0 %1693
        %v1695 = vsel %vm1376, %v1683, -inf
        %1696 = vmax.xlane.f32.xlu0 %v1695
        %v1697 = vpop.xlane.xlu0 %1696
        %v1698 = vsel %vm1376, %v1684, -inf
        %1699 = vmax.xlane.f32.xlu0 %v1698
        %v1700 = vpop.xlane.xlu0 %1699
        %v1701 = vsel %vm1376, %v1685, -inf
        %1702 = vmax.xlane.f32.xlu0 %v1701
        %v1703 = vpop.xlane.xlu0 %1702
        %v1704 = vsel %vm1376, %v1686, -inf
        %1705 = vmax.xlane.f32.xlu0 %v1704
        %v1706 = vpop.xlane.xlu0 %1705
        %v1707 = vsel %vm1376, %v1687, -inf
        %1708 = vmax.xlane.f32.xlu0 %v1707
        %v1709 = vpop.xlane.xlu0 %1708
        %v1710 = vsel %vm1376, %v1688, -inf
        %1711 = vmax.xlane.f32.xlu0 %v1710
        %v1712 = vpop.xlane.xlu0 %1711
        %v1713 = vsub.f32 %v1681, %v1691
        %v1714 = vsub.f32 %v1682, %v1694
        %v1715 = vsub.f32 %v1683, %v1697
        %v1716 = vsub.f32 %v1684, %v1700
        %v1717 = vsub.f32 %v1685, %v1703
        %v1718 = vsub.f32 %v1686, %v1706
        %v1719 = vsub.f32 %v1687, %v1709
        %v1720 = vsub.f32 %v1688, %v1712
        %v1721 = vmul.f32 %v1713, 1.442695
        %v1722 = vpow.pop %v1721
        %v1723 = vmul.f32 %v1714, 1.442695
        %v1724 = vpow.pop %v1723
        %v1725 = vmul.f32 %v1715, 1.442695
        %v1726 = vpow.pop %v1725
        %v1727 = vmul.f32 %v1716, 1.442695
        %v1728 = vpow.pop %v1727
        %v1729 = vmul.f32 %v1717, 1.442695
        %v1730 = vpow.pop %v1729
        %v1731 = vmul.f32 %v1718, 1.442695
        %v1732 = vpow.pop %v1731
        %v1733 = vmul.f32 %v1719, 1.442695
        %v1734 = vpow.pop %v1733
        %v1735 = vmul.f32 %v1720, 1.442695
        %v1736 = vpow.pop %v1735
        %v1737 = vsel %vm1376, %v1722, 0.0
        %1738 = vadd.xlane.f32.xlu0 %v1737
        %v1739 = vpop.xlane.xlu0 %1738
        %v1740 = vsel %vm1376, %v1724, 0.0
        %1741 = vadd.xlane.f32.xlu0 %v1740
        %v1742 = vpop.xlane.xlu0 %1741
        %v1743 = vsel %vm1376, %v1726, 0.0
        %1744 = vadd.xlane.f32.xlu0 %v1743
        %v1745 = vpop.xlane.xlu0 %1744
        %v1746 = vsel %vm1376, %v1728, 0.0
        %1747 = vadd.xlane.f32.xlu0 %v1746
        %v1748 = vpop.xlane.xlu0 %1747
        %v1749 = vsel %vm1376, %v1730, 0.0
        %1750 = vadd.xlane.f32.xlu0 %v1749
        %v1751 = vpop.xlane.xlu0 %1750
        %v1752 = vsel %vm1376, %v1732, 0.0
        %1753 = vadd.xlane.f32.xlu0 %v1752
        %v1754 = vpop.xlane.xlu0 %1753
        %v1755 = vsel %vm1376, %v1734, 0.0
        %1756 = vadd.xlane.f32.xlu0 %v1755
        %v1757 = vpop.xlane.xlu0 %1756
        %v1758 = vsel %vm1376, %v1736, 0.0
        %1759 = vadd.xlane.f32.xlu0 %v1758
        %v1760 = vpop.xlane.xlu0 %1759
        %v1761 = vrcp.pop %v1739
        %v1762 = vrcp.pop %v1742
        %v1763 = vrcp.pop %v1745
        %v1764 = vrcp.pop %v1748
        %v1765 = vrcp.pop %v1751
        %v1766 = vrcp.pop %v1754
        %v1767 = vrcp.pop %v1757
        %v1768 = vrcp.pop %v1760
        %v1769 = vmul.f32 %v1722, %v1761
        %v1770 = vmul.f32 %v1724, %v1762
        %v1771 = vmul.f32 %v1726, %v1763
        %v1772 = vmul.f32 %v1728, %v1764
        %v1773 = vmul.f32 %v1730, %v1765
        %v1774 = vmul.f32 %v1732, %v1766
        %v1775 = vmul.f32 %v1734, %v1767
        %v1776 = vmul.f32 %v1736, %v1768
        %v1777 = vpack.c.bf16 %v1770, %v1769
        %v1778 = vpack.c.bf16 %v1772, %v1771
        %v1779 = vpack.c.bf16 %v1774, %v1773
        %v1780 = vpack.c.bf16 %v1776, %v1775
        %1785 = vrot.lane.b32.xlu0 %v1258, 120
        %v1786 = vpop.permute.xlu0 %1785
        %1787 = vrot.lane.b32.xlu0 %v1259, 120
        %v1788 = vpop.permute.xlu0 %1787
        %1789 = vrot.lane.b32.xlu0 %v1260, 120
        %v1790 = vpop.permute.xlu0 %1789
        %1791 = vrot.lane.b32.xlu0 %v1261, 120
        %v1792 = vpop.permute.xlu0 %1791
        %v1798 = vsel %vm1376, %v1777, 0
        %v1801 = vsel %vm1376, %v1778, 0
        %v1804 = vsel %vm1376, %v1779, 0
        %v1807 = vsel %vm1376, %v1780, 0
        %1809 = vmatprep.subr.bf16.mxu0 0
        %1810 = vmatpush1.bf16.msra.mxu0 0
        %1811 = vmatprep.subr.bf16.mxu0 0
        %1812 = vmatpush1.bf16.msra.mxu0 0
        %1813 = vmatprep.subr.bf16.mxu0 0
        %1814 = vmatpush1.bf16.msra.mxu0 0
        %1815 = vmatprep.subr.bf16.mxu0 0
        %1816 = vmatpush1.bf16.msra.mxu0 0
        %1817 = vmatprep.subr.bf16.mxu0 0
        %1818 = vmatpush1.bf16.msra.mxu0 %v1792
        %1819 = vmatprep.subr.bf16.mxu0 0
        %1820 = vmatpush1.bf16.msra.mxu0 %v1790
        %1821 = vmatprep.subr.bf16.mxu0 0
        %1822 = vmatpush1.bf16.msra.mxu0 %v1788
        %1823 = vmatprep.subr.bf16.mxu0 0
        %1824 = vmatpush1.bf16.msra.mxu0 %v1786
        %1825 = vmatprep.subr.bf16.mxu0 0
        %1826 = vmatpush2.bf16.msra.mxu0 0
        %1827 = vmatprep.subr.bf16.mxu0 0
        %1828 = vmatpush2.bf16.msra.mxu0 0
        %1829 = vmatprep.subr.bf16.mxu0 0
        %1830 = vmatpush2.bf16.msra.mxu0 0
        %1831 = vmatprep.subr.bf16.mxu0 0
        %1832 = vmatpush2.bf16.msra.mxu0 0
        %1833 = vmatprep.subr.bf16.mxu0 0
        %1834 = vmatpush2.bf16.msra.mxu0 0
        %1835 = vmatprep.subr.bf16.mxu0 0
        %1836 = vmatpush2.bf16.msra.mxu0 0
        %1837 = vmatprep.subr.bf16.mxu0 0
        %1838 = vmatpush2.bf16.msra.mxu0 0
        %1839 = vmatprep.subr.bf16.mxu0 0
        %1840 = vmatpush2.bf16.msra.mxu0 0
        %1841 = vmatprep.mubr.bf16.mxu0 0
        %1842 = vmatmul.mubr.bf16.gmra.mxu0 %v1798
        %v1843 = vpop.f32.mrf.mxu0
        %v1844 = vadd.f32 0.0, %v1843
        %v1845 = vpop.f32.mrf.mxu0
        %v1846 = vpop.f32.mrf.mxu0
        %v1847 = vadd.f32 0.0, %v1846
        %v1848 = vpop.f32.mrf.mxu0
        %1849 = vmatprep.mubr.bf16.mxu0 0
        %1850 = vmatmul.mubr.bf16.gmra.mxu0 %v1801
        %v1851 = vpop.f32.mrf.mxu0
        %v1852 = vadd.f32 0.0, %v1851
        %v1853 = vpop.f32.mrf.mxu0
        %v1854 = vpop.f32.mrf.mxu0
        %v1855 = vadd.f32 0.0, %v1854
        %v1856 = vpop.f32.mrf.mxu0
        %1857 = vmatprep.mubr.bf16.mxu0 0
        %1858 = vmatmul.mubr.bf16.gmra.mxu0 %v1804
        %v1859 = vpop.f32.mrf.mxu0
        %v1860 = vadd.f32 0.0, %v1859
        %v1861 = vpop.f32.mrf.mxu0
        %v1862 = vpop.f32.mrf.mxu0
        %v1863 = vadd.f32 0.0, %v1862
        %v1864 = vpop.f32.mrf.mxu0
        %1865 = vmatprep.mubr.bf16.mxu0 0
        %1866 = vmatmul.mubr.bf16.gmra.mxu0 %v1807
        %v1867 = vpop.f32.mrf.mxu0
        %v1868 = vadd.f32 0.0, %v1867
        %v1869 = vpop.f32.mrf.mxu0
        %v1870 = vpop.f32.mrf.mxu0
        %v1871 = vadd.f32 0.0, %v1870
        %v1872 = vpop.f32.mrf.mxu0
        %1873 = vdwg.mxu0
        %v1874 = vpack.c.bf16 %v1847, %v1844
        %v1875 = vpack.c.bf16 %v1855, %v1852
        %v1876 = vpack.c.bf16 %v1863, %v1860
        %v1877 = vpack.c.bf16 %v1871, %v1868
        %v1878 = vpack.c.bf16 %v1247, %v1247
        %v1880 = vsel %vm1262, %v1874, 0
        %v1883 = vsel %vm1262, %v1875, 0
        %v1886 = vsel %vm1262, %v1876, 0
        %v1889 = vsel %vm1262, %v1877, 0
        %vm1891 = vcmask 1043456
        %v1893 = vsel %vm1891, %v1878, 0
        %1895 = vmatprep.subr.bf16.mxu0 0
        %1896 = vmatpush1.bf16.msra.mxu0 0
        %1897 = vmatprep.subr.bf16.mxu0 0
        %1898 = vmatpush1.bf16.msra.mxu0 0
        %1899 = vmatprep.subr.bf16.mxu0 0
        %1900 = vmatpush1.bf16.msra.mxu0 0
        %1901 = vmatprep.subr.bf16.mxu0 0
        %1902 = vmatpush1.bf16.msra.mxu0 0
        %1903 = vmatprep.subr.bf16.mxu0 0
        %1904 = vmatpush1.bf16.msra.mxu0 0
        %1905 = vmatprep.subr.bf16.mxu0 0
        %1906 = vmatpush1.bf16.msra.mxu0 0
        %1907 = vmatprep.subr.bf16.mxu0 0
        %1908 = vmatpush1.bf16.msra.mxu0 0
        %1909 = vmatprep.subr.bf16.mxu0 0
        %1910 = vmatpush1.bf16.msra.mxu0 %v1893
        %1911 = vmatprep.subr.bf16.mxu0 0
        %1912 = vmatpush2.bf16.msra.mxu0 0
        %1913 = vmatprep.subr.bf16.mxu0 0
        %1914 = vmatpush2.bf16.msra.mxu0 0
        %1915 = vmatprep.subr.bf16.mxu0 0
        %1916 = vmatpush2.bf16.msra.mxu0 0
        %1917 = vmatprep.subr.bf16.mxu0 0
        %1918 = vmatpush2.bf16.msra.mxu0 0
        %1919 = vmatprep.subr.bf16.mxu0 0
        %1920 = vmatpush2.bf16.msra.mxu0 0
        %1921 = vmatprep.subr.bf16.mxu0 0
        %1922 = vmatpush2.bf16.msra.mxu0 0
        %1923 = vmatprep.subr.bf16.mxu0 0
        %1924 = vmatpush2.bf16.msra.mxu0 0
        %1925 = vmatprep.subr.bf16.mxu0 0
        %1926 = vmatpush2.bf16.msra.mxu0 0
        %1927 = vmatprep.mubr.bf16.mxu0 0
        %1928 = vmatmul.mubr.bf16.gmra.mxu0 %v1880
        %v1929 = vpop.f32.mrf.mxu0
        %v1930 = vadd.f32 0.0, %v1929
        %v1931 = vpop.f32.mrf.mxu0
        %v1932 = vpop.f32.mrf.mxu0
        %v1933 = vadd.f32 0.0, %v1932
        %v1934 = vpop.f32.mrf.mxu0
        %1935 = vmatprep.mubr.bf16.mxu0 0
        %1936 = vmatmul.mubr.bf16.gmra.mxu0 %v1883
        %v1937 = vpop.f32.mrf.mxu0
        %v1938 = vadd.f32 0.0, %v1937
        %v1939 = vpop.f32.mrf.mxu0
        %v1940 = vpop.f32.mrf.mxu0
        %v1941 = vadd.f32 0.0, %v1940
        %v1942 = vpop.f32.mrf.mxu0
        %1943 = vmatprep.mubr.bf16.mxu0 0
        %1944 = vmatmul.mubr.bf16.gmra.mxu0 %v1886
        %v1945 = vpop.f32.mrf.mxu0
        %v1946 = vadd.f32 0.0, %v1945
        %v1947 = vpop.f32.mrf.mxu0
        %v1948 = vpop.f32.mrf.mxu0
        %v1949 = vadd.f32 0.0, %v1948
        %v1950 = vpop.f32.mrf.mxu0
        %1951 = vmatprep.mubr.bf16.mxu0 0
        %1952 = vmatmul.mubr.bf16.gmra.mxu0 %v1889
        %v1953 = vpop.f32.mrf.mxu0
        %v1954 = vadd.f32 0.0, %v1953
        %v1955 = vpop.f32.mrf.mxu0
        %v1956 = vpop.f32.mrf.mxu0
        %v1957 = vadd.f32 0.0, %v1956
        %v1958 = vpop.f32.mrf.mxu0
        %1959 = vdwg.mxu0
        %v1961 = vsel %vm1262, %v1546, 0
        %v1964 = vsel %vm1262, %v1547, 0
        %v1967 = vsel %vm1262, %v1548, 0
        %v1970 = vsel %vm1262, %v1549, 0
        %v1973 = vsel %vm1891, %v1550, 0
        %1975 = vmatprep.subr.bf16.mxu0 0
        %1976 = vmatpush1.bf16.msra.mxu0 0
        %1977 = vmatprep.subr.bf16.mxu0 0
        %1978 = vmatpush1.bf16.msra.mxu0 0
        %1979 = vmatprep.subr.bf16.mxu0 0
        %1980 = vmatpush1.bf16.msra.mxu0 0
        %1981 = vmatprep.subr.bf16.mxu0 0
        %1982 = vmatpush1.bf16.msra.mxu0 0
        %1983 = vmatprep.subr.bf16.mxu0 0
        %1984 = vmatpush1.bf16.msra.mxu0 0
        %1985 = vmatprep.subr.bf16.mxu0 0
        %1986 = vmatpush1.bf16.msra.mxu0 0
        %1987 = vmatprep.subr.bf16.mxu0 0
        %1988 = vmatpush1.bf16.msra.mxu0 0
        %1989 = vmatprep.subr.bf16.mxu0 0
        %1990 = vmatpush1.bf16.msra.mxu0 %v1973
        %1991 = vmatprep.subr.bf16.mxu0 0
        %1992 = vmatpush2.bf16.msra.mxu0 0
        %1993 = vmatprep.subr.bf16.mxu0 0
        %1994 = vmatpush2.bf16.msra.mxu0 0
        %1995 = vmatprep.subr.bf16.mxu0 0
        %1996 = vmatpush2.bf16.msra.mxu0 0
        %1997 = vmatprep.subr.bf16.mxu0 0
        %1998 = vmatpush2.bf16.msra.mxu0 0
        %1999 = vmatprep.subr.bf16.mxu0 0
        %2000 = vmatpush2.bf16.msra.mxu0 0
        %2001 = vmatprep.subr.bf16.mxu0 0
        %2002 = vmatpush2.bf16.msra.mxu0 0
        %2003 = vmatprep.subr.bf16.mxu0 0
        %2004 = vmatpush2.bf16.msra.mxu0 0
        %2005 = vmatprep.subr.bf16.mxu0 0
        %2006 = vmatpush2.bf16.msra.mxu0 0
        %2007 = vmatprep.mubr.bf16.mxu0 0
        %2008 = vmatmul.mubr.bf16.gmra.mxu0 %v1961
        %v2009 = vpop.f32.mrf.mxu0
        %v2010 = vadd.f32 %v1930, %v2009
        %v2011 = vpop.f32.mrf.mxu0
        %v2012 = vpop.f32.mrf.mxu0
        %v2013 = vadd.f32 %v1933, %v2012
        %v2014 = vpop.f32.mrf.mxu0
        %2015 = vmatprep.mubr.bf16.mxu0 0
        %2016 = vmatmul.mubr.bf16.gmra.mxu0 %v1964
        %v2017 = vpop.f32.mrf.mxu0
        %v2018 = vadd.f32 %v1938, %v2017
        %v2019 = vpop.f32.mrf.mxu0
        %v2020 = vpop.f32.mrf.mxu0
        %v2021 = vadd.f32 %v1941, %v2020
        %v2022 = vpop.f32.mrf.mxu0
        %2023 = vmatprep.mubr.bf16.mxu0 0
        %2024 = vmatmul.mubr.bf16.gmra.mxu0 %v1967
        %v2025 = vpop.f32.mrf.mxu0
        %v2026 = vadd.f32 %v1946, %v2025
        %v2027 = vpop.f32.mrf.mxu0
        %v2028 = vpop.f32.mrf.mxu0
        %v2029 = vadd.f32 %v1949, %v2028
        %v2030 = vpop.f32.mrf.mxu0
        %2031 = vmatprep.mubr.bf16.mxu0 0
        %2032 = vmatmul.mubr.bf16.gmra.mxu0 %v1970
        %v2033 = vpop.f32.mrf.mxu0
        %v2034 = vadd.f32 %v1954, %v2033
        %v2035 = vpop.f32.mrf.mxu0
        %v2036 = vpop.f32.mrf.mxu0
        %v2037 = vadd.f32 %v1957, %v2036
        %v2038 = vpop.f32.mrf.mxu0
        %2039 = vdwg.mxu0
        %2040 = vrot.lane.b32.xlu0 %v1250, 112
        %v2041 = vpop.permute.xlu0 %2040
        %2042 = vrot.lane.b32.xlu0 %v1251, 112
        %v2043 = vpop.permute.xlu0 %2042
        %2044 = vrot.lane.b32.xlu0 %v1252, 112
        %v2045 = vpop.permute.xlu0 %2044
        %2046 = vrot.lane.b32.xlu0 %v1253, 112
        %v2047 = vpop.permute.xlu0 %2046
        %2048 = vrot.lane.b32.xlu0 %v1254, 112
        %v2049 = vpop.permute.xlu0 %2048
        %2050 = vrot.lane.b32.xlu0 %v1255, 112
        %v2051 = vpop.permute.xlu0 %2050
        %2052 = vrot.lane.b32.xlu0 %v1256, 112
        %v2053 = vpop.permute.xlu0 %2052
        %2054 = vrot.lane.b32.xlu0 %v1257, 112
        %v2055 = vpop.permute.xlu0 %2054
        %v2057 = vsel %vm1262, %v2041, 0
        %v2060 = vsel %vm1262, %v2043, 0
        %v2063 = vsel %vm1262, %v2045, 0
        %v2066 = vsel %vm1262, %v2047, 0
        %v2069 = vsel %vm1262, %v2049, 0
        %v2072 = vsel %vm1262, %v2051, 0
        %v2075 = vsel %vm1262, %v2053, 0
        %v2078 = vsel %vm1262, %v2055, 0
        %2080 = vmatprep.subr.bf16.mxu0 0
        %2081 = vmatpush1.bf16.xpose.msra.mxu0 0
        %2082 = vmatprep.subr.bf16.mxu0 0
        %2083 = vmatpush1.bf16.xpose.msra.mxu0 0
        %2084 = vmatprep.subr.bf16.mxu0 0
        %2085 = vmatpush1.bf16.xpose.msra.mxu0 0
        %2086 = vmatprep.subr.bf16.mxu0 0
        %2087 = vmatpush1.bf16.xpose.msra.mxu0 0
        %2088 = vmatprep.subr.bf16.mxu0 0
        %2089 = vmatpush1.bf16.xpose.msra.mxu0 %v2078
        %2090 = vmatprep.subr.bf16.mxu0 0
        %2091 = vmatpush1.bf16.xpose.msra.mxu0 %v2075
        %2092 = vmatprep.subr.bf16.mxu0 0
        %2093 = vmatpush1.bf16.xpose.msra.mxu0 %v2072
        %2094 = vmatprep.subr.bf16.mxu0 0
        %2095 = vmatpush1.bf16.xpose.msra.mxu0 %v2069
        %2096 = vmatprep.subr.bf16.mxu0 0
        %2097 = vmatpush2.bf16.xpose.msra.mxu0 0
        %2098 = vmatprep.subr.bf16.mxu0 0
        %2099 = vmatpush2.bf16.xpose.msra.mxu0 0
        %2100 = vmatprep.subr.bf16.mxu0 0
        %2101 = vmatpush2.bf16.xpose.msra.mxu0 0
        %2102 = vmatprep.subr.bf16.mxu0 0
        %2103 = vmatpush2.bf16.xpose.msra.mxu0 0
        %2104 = vmatprep.subr.bf16.mxu0 0
        %2105 = vmatpush2.bf16.xpose.msra.mxu0 0
        %2106 = vmatprep.subr.bf16.mxu0 0
        %2107 = vmatpush2.bf16.xpose.msra.mxu0 0
        %2108 = vmatprep.subr.bf16.mxu0 0
        %2109 = vmatpush2.bf16.xpose.msra.mxu0 0
        %2110 = vmatprep.subr.bf16.mxu0 0
        %2111 = vmatpush2.bf16.xpose.msra.mxu0 0
        %2112 = vmatprep.mubr.bf16.mxu0 0
        %2113 = vmatmul.mubr.bf16.gmra.mxu0 %v2057
        %v2114 = vpop.f32.mrf.mxu0
        %v2115 = vadd.f32 0.0, %v2114
        %v2116 = vpop.f32.mrf.mxu0
        %v2117 = vpop.f32.mrf.mxu0
        %v2118 = vadd.f32 0.0, %v2117
        %v2119 = vpop.f32.mrf.mxu0
        %2120 = vmatprep.mubr.bf16.mxu0 0
        %2121 = vmatmul.mubr.bf16.gmra.mxu0 %v2060
        %v2122 = vpop.f32.mrf.mxu0
        %v2123 = vadd.f32 0.0, %v2122
        %v2124 = vpop.f32.mrf.mxu0
        %v2125 = vpop.f32.mrf.mxu0
        %v2126 = vadd.f32 0.0, %v2125
        %v2127 = vpop.f32.mrf.mxu0
        %2128 = vmatprep.mubr.bf16.mxu0 0
        %2129 = vmatmul.mubr.bf16.gmra.mxu0 %v2063
        %v2130 = vpop.f32.mrf.mxu0
        %v2131 = vadd.f32 0.0, %v2130
        %v2132 = vpop.f32.mrf.mxu0
        %v2133 = vpop.f32.mrf.mxu0
        %v2134 = vadd.f32 0.0, %v2133
        %v2135 = vpop.f32.mrf.mxu0
        %2136 = vmatprep.mubr.bf16.mxu0 0
        %2137 = vmatmul.mubr.bf16.gmra.mxu0 %v2066
        %v2138 = vpop.f32.mrf.mxu0
        %v2139 = vadd.f32 0.0, %v2138
        %v2140 = vpop.f32.mrf.mxu0
        %v2141 = vpop.f32.mrf.mxu0
        %v2142 = vadd.f32 0.0, %v2141
        %v2143 = vpop.f32.mrf.mxu0
        %2144 = vdwg.mxu0
        %v2145 = vmul.f32 %v2115, 0.35355338
        %v2146 = vmul.f32 %v2118, 0.35355338
        %v2147 = vmul.f32 %v2123, 0.35355338
        %v2148 = vmul.f32 %v2126, 0.35355338
        %v2149 = vmul.f32 %v2131, 0.35355338
        %v2150 = vmul.f32 %v2134, 0.35355338
        %v2151 = vmul.f32 %v2139, 0.35355338
        %v2152 = vmul.f32 %v2142, 0.35355338
        %s2153 = scalar_lea.vmem %s1, 128
        %v2154 = vld [vmem:[%s2153] sm:$0xff]
        %v2155 = vld [vmem:[%s2153 + $0x8] sm:$0xff]
        %v2156 = vld [vmem:[%s2153 + $0x10] sm:$0xff]
        %v2157 = vld [vmem:[%s2153 + $0x18] sm:$0xff]
        %v2158 = vld [vmem:[%s2153 + $0x20] sm:$0xff]
        %v2159 = vld [vmem:[%s2153 + $0x28] sm:$0xff]
        %v2160 = vld [vmem:[%s2153 + $0x30] sm:$0xff]
        %v2161 = vld [vmem:[%s2153 + $0x38] sm:$0xff]
        %v2162 = vadd.f32 %v2145, %v2154
        %v2163 = vadd.f32 %v2146, %v2155
        %v2164 = vadd.f32 %v2147, %v2156
        %v2165 = vadd.f32 %v2148, %v2157
        %v2166 = vadd.f32 %v2149, %v2158
        %v2167 = vadd.f32 %v2150, %v2159
        %v2168 = vadd.f32 %v2151, %v2160
        %v2169 = vadd.f32 %v2152, %v2161
        %v2170 = vsel %vm1376, %v2162, -inf
        %2171 = vmax.xlane.f32.xlu0 %v2170
        %v2172 = vpop.xlane.xlu0 %2171
        %v2173 = vsel %vm1376, %v2163, -inf
        %2174 = vmax.xlane.f32.xlu0 %v2173
        %v2175 = vpop.xlane.xlu0 %2174
        %v2176 = vsel %vm1376, %v2164, -inf
        %2177 = vmax.xlane.f32.xlu0 %v2176
        %v2178 = vpop.xlane.xlu0 %2177
        %v2179 = vsel %vm1376, %v2165, -inf
        %2180 = vmax.xlane.f32.xlu0 %v2179
        %v2181 = vpop.xlane.xlu0 %2180
        %v2182 = vsel %vm1376, %v2166, -inf
        %2183 = vmax.xlane.f32.xlu0 %v2182
        %v2184 = vpop.xlane.xlu0 %2183
        %v2185 = vsel %vm1376, %v2167, -inf
        %2186 = vmax.xlane.f32.xlu0 %v2185
        %v2187 = vpop.xlane.xlu0 %2186
        %v2188 = vsel %vm1376, %v2168, -inf
        %2189 = vmax.xlane.f32.xlu0 %v2188
        %v2190 = vpop.xlane.xlu0 %2189
        %v2191 = vsel %vm1376, %v2169, -inf
        %2192 = vmax.xlane.f32.xlu0 %v2191
        %v2193 = vpop.xlane.xlu0 %2192
        %v2194 = vsub.f32 %v2162, %v2172
        %v2195 = vsub.f32 %v2163, %v2175
        %v2196 = vsub.f32 %v2164, %v2178
        %v2197 = vsub.f32 %v2165, %v2181
        %v2198 = vsub.f32 %v2166, %v2184
        %v2199 = vsub.f32 %v2167, %v2187
        %v2200 = vsub.f32 %v2168, %v2190
        %v2201 = vsub.f32 %v2169, %v2193
        %v2202 = vmul.f32 %v2194, 1.442695
        %v2203 = vpow.pop %v2202
        %v2204 = vmul.f32 %v2195, 1.442695
        %v2205 = vpow.pop %v2204
        %v2206 = vmul.f32 %v2196, 1.442695
        %v2207 = vpow.pop %v2206
        %v2208 = vmul.f32 %v2197, 1.442695
        %v2209 = vpow.pop %v2208
        %v2210 = vmul.f32 %v2198, 1.442695
        %v2211 = vpow.pop %v2210
        %v2212 = vmul.f32 %v2199, 1.442695
        %v2213 = vpow.pop %v2212
        %v2214 = vmul.f32 %v2200, 1.442695
        %v2215 = vpow.pop %v2214
        %v2216 = vmul.f32 %v2201, 1.442695
        %v2217 = vpow.pop %v2216
        %v2218 = vsel %vm1376, %v2203, 0.0
        %2219 = vadd.xlane.f32.xlu0 %v2218
        %v2220 = vpop.xlane.xlu0 %2219
        %v2221 = vsel %vm1376, %v2205, 0.0
        %2222 = vadd.xlane.f32.xlu0 %v2221
        %v2223 = vpop.xlane.xlu0 %2222
        %v2224 = vsel %vm1376, %v2207, 0.0
        %2225 = vadd.xlane.f32.xlu0 %v2224
        %v2226 = vpop.xlane.xlu0 %2225
        %v2227 = vsel %vm1376, %v2209, 0.0
        %2228 = vadd.xlane.f32.xlu0 %v2227
        %v2229 = vpop.xlane.xlu0 %2228
        %v2230 = vsel %vm1376, %v2211, 0.0
        %2231 = vadd.xlane.f32.xlu0 %v2230
        %v2232 = vpop.xlane.xlu0 %2231
        %v2233 = vsel %vm1376, %v2213, 0.0
        %2234 = vadd.xlane.f32.xlu0 %v2233
        %v2235 = vpop.xlane.xlu0 %2234
        %v2236 = vsel %vm1376, %v2215, 0.0
        %2237 = vadd.xlane.f32.xlu0 %v2236
        %v2238 = vpop.xlane.xlu0 %2237
        %v2239 = vsel %vm1376, %v2217, 0.0
        %2240 = vadd.xlane.f32.xlu0 %v2239
        %v2241 = vpop.xlane.xlu0 %2240
        %v2242 = vrcp.pop %v2220
        %v2243 = vrcp.pop %v2223
        %v2244 = vrcp.pop %v2226
        %v2245 = vrcp.pop %v2229
        %v2246 = vrcp.pop %v2232
        %v2247 = vrcp.pop %v2235
        %v2248 = vrcp.pop %v2238
        %v2249 = vrcp.pop %v2241
        %v2250 = vmul.f32 %v2203, %v2242
        %v2251 = vmul.f32 %v2205, %v2243
        %v2252 = vmul.f32 %v2207, %v2244
        %v2253 = vmul.f32 %v2209, %v2245
        %v2254 = vmul.f32 %v2211, %v2246
        %v2255 = vmul.f32 %v2213, %v2247
        %v2256 = vmul.f32 %v2215, %v2248
        %v2257 = vmul.f32 %v2217, %v2249
        %v2258 = vpack.c.bf16 %v2251, %v2250
        %v2259 = vpack.c.bf16 %v2253, %v2252
        %v2260 = vpack.c.bf16 %v2255, %v2254
        %v2261 = vpack.c.bf16 %v2257, %v2256
        %2262 = vrot.lane.b32.xlu0 %v1258, 112
        %v2263 = vpop.permute.xlu0 %2262
        %2264 = vrot.lane.b32.xlu0 %v1259, 112
        %v2265 = vpop.permute.xlu0 %2264
        %2266 = vrot.lane.b32.xlu0 %v1260, 112
        %v2267 = vpop.permute.xlu0 %2266
        %2268 = vrot.lane.b32.xlu0 %v1261, 112
        %v2269 = vpop.permute.xlu0 %2268
        %v2275 = vsel %vm1376, %v2258, 0
        %v2278 = vsel %vm1376, %v2259, 0
        %v2281 = vsel %vm1376, %v2260, 0
        %v2284 = vsel %vm1376, %v2261, 0
        %2286 = vmatprep.subr.bf16.mxu0 0
        %2287 = vmatpush1.bf16.msra.mxu0 0
        %2288 = vmatprep.subr.bf16.mxu0 0
        %2289 = vmatpush1.bf16.msra.mxu0 0
        %2290 = vmatprep.subr.bf16.mxu0 0
        %2291 = vmatpush1.bf16.msra.mxu0 0
        %2292 = vmatprep.subr.bf16.mxu0 0
        %2293 = vmatpush1.bf16.msra.mxu0 0
        %2294 = vmatprep.subr.bf16.mxu0 0
        %2295 = vmatpush1.bf16.msra.mxu0 %v2269
        %2296 = vmatprep.subr.bf16.mxu0 0
        %2297 = vmatpush1.bf16.msra.mxu0 %v2267
        %2298 = vmatprep.subr.bf16.mxu0 0
        %2299 = vmatpush1.bf16.msra.mxu0 %v2265
        %2300 = vmatprep.subr.bf16.mxu0 0
        %2301 = vmatpush1.bf16.msra.mxu0 %v2263
        %2302 = vmatprep.subr.bf16.mxu0 0
        %2303 = vmatpush2.bf16.msra.mxu0 0
        %2304 = vmatprep.subr.bf16.mxu0 0
        %2305 = vmatpush2.bf16.msra.mxu0 0
        %2306 = vmatprep.subr.bf16.mxu0 0
        %2307 = vmatpush2.bf16.msra.mxu0 0
        %2308 = vmatprep.subr.bf16.mxu0 0
        %2309 = vmatpush2.bf16.msra.mxu0 0
        %2310 = vmatprep.subr.bf16.mxu0 0
        %2311 = vmatpush2.bf16.msra.mxu0 0
        %2312 = vmatprep.subr.bf16.mxu0 0
        %2313 = vmatpush2.bf16.msra.mxu0 0
        %2314 = vmatprep.subr.bf16.mxu0 0
        %2315 = vmatpush2.bf16.msra.mxu0 0
        %2316 = vmatprep.subr.bf16.mxu0 0
        %2317 = vmatpush2.bf16.msra.mxu0 0
        %2318 = vmatprep.mubr.bf16.mxu0 0
        %2319 = vmatmul.mubr.bf16.gmra.mxu0 %v2275
        %v2320 = vpop.f32.mrf.mxu0
        %v2321 = vadd.f32 0.0, %v2320
        %v2322 = vpop.f32.mrf.mxu0
        %v2323 = vpop.f32.mrf.mxu0
        %v2324 = vadd.f32 0.0, %v2323
        %v2325 = vpop.f32.mrf.mxu0
        %2326 = vmatprep.mubr.bf16.mxu0 0
        %2327 = vmatmul.mubr.bf16.gmra.mxu0 %v2278
        %v2328 = vpop.f32.mrf.mxu0
        %v2329 = vadd.f32 0.0, %v2328
        %v2330 = vpop.f32.mrf.mxu0
        %v2331 = vpop.f32.mrf.mxu0
        %v2332 = vadd.f32 0.0, %v2331
        %v2333 = vpop.f32.mrf.mxu0
        %2334 = vmatprep.mubr.bf16.mxu0 0
        %2335 = vmatmul.mubr.bf16.gmra.mxu0 %v2281
        %v2336 = vpop.f32.mrf.mxu0
        %v2337 = vadd.f32 0.0, %v2336
        %v2338 = vpop.f32.mrf.mxu0
        %v2339 = vpop.f32.mrf.mxu0
        %v2340 = vadd.f32 0.0, %v2339
        %v2341 = vpop.f32.mrf.mxu0
        %2342 = vmatprep.mubr.bf16.mxu0 0
        %2343 = vmatmul.mubr.bf16.gmra.mxu0 %v2284
        %v2344 = vpop.f32.mrf.mxu0
        %v2345 = vadd.f32 0.0, %v2344
        %v2346 = vpop.f32.mrf.mxu0
        %v2347 = vpop.f32.mrf.mxu0
        %v2348 = vadd.f32 0.0, %v2347
        %v2349 = vpop.f32.mrf.mxu0
        %2350 = vdwg.mxu0
        %v2351 = vpack.c.bf16 %v2324, %v2321
        %v2352 = vpack.c.bf16 %v2332, %v2329
        %v2353 = vpack.c.bf16 %v2340, %v2337
        %v2354 = vpack.c.bf16 %v2348, %v2345
        %v2355 = vpack.c.bf16 %v1248, %v1248
        %v2357 = vsel %vm1262, %v2351, 0
        %v2360 = vsel %vm1262, %v2352, 0
        %v2363 = vsel %vm1262, %v2353, 0
        %v2366 = vsel %vm1262, %v2354, 0
        %v2369 = vsel %vm1891, %v2355, 0
        %2371 = vmatprep.subr.bf16.mxu0 0
        %2372 = vmatpush1.bf16.msra.mxu0 0
        %2373 = vmatprep.subr.bf16.mxu0 0
        %2374 = vmatpush1.bf16.msra.mxu0 0
        %2375 = vmatprep.subr.bf16.mxu0 0
        %2376 = vmatpush1.bf16.msra.mxu0 0
        %2377 = vmatprep.subr.bf16.mxu0 0
        %2378 = vmatpush1.bf16.msra.mxu0 0
        %2379 = vmatprep.subr.bf16.mxu0 0
        %2380 = vmatpush1.bf16.msra.mxu0 0
        %2381 = vmatprep.subr.bf16.mxu0 0
        %2382 = vmatpush1.bf16.msra.mxu0 0
        %2383 = vmatprep.subr.bf16.mxu0 0
        %2384 = vmatpush1.bf16.msra.mxu0 0
        %2385 = vmatprep.subr.bf16.mxu0 0
        %2386 = vmatpush1.bf16.msra.mxu0 %v2369
        %2387 = vmatprep.subr.bf16.mxu0 0
        %2388 = vmatpush2.bf16.msra.mxu0 0
        %2389 = vmatprep.subr.bf16.mxu0 0
        %2390 = vmatpush2.bf16.msra.mxu0 0
        %2391 = vmatprep.subr.bf16.mxu0 0
        %2392 = vmatpush2.bf16.msra.mxu0 0
        %2393 = vmatprep.subr.bf16.mxu0 0
        %2394 = vmatpush2.bf16.msra.mxu0 0
        %2395 = vmatprep.subr.bf16.mxu0 0
        %2396 = vmatpush2.bf16.msra.mxu0 0
        %2397 = vmatprep.subr.bf16.mxu0 0
        %2398 = vmatpush2.bf16.msra.mxu0 0
        %2399 = vmatprep.subr.bf16.mxu0 0
        %2400 = vmatpush2.bf16.msra.mxu0 0
        %2401 = vmatprep.subr.bf16.mxu0 0
        %2402 = vmatpush2.bf16.msra.mxu0 0
        %2403 = vmatprep.mubr.bf16.mxu0 0
        %2404 = vmatmul.mubr.bf16.gmra.mxu0 %v2357
        %v2405 = vpop.f32.mrf.mxu0
        %v2406 = vadd.f32 0.0, %v2405
        %v2407 = vpop.f32.mrf.mxu0
        %v2408 = vpop.f32.mrf.mxu0
        %v2409 = vadd.f32 0.0, %v2408
        %v2410 = vpop.f32.mrf.mxu0
        %2411 = vmatprep.mubr.bf16.mxu0 0
        %2412 = vmatmul.mubr.bf16.gmra.mxu0 %v2360
        %v2413 = vpop.f32.mrf.mxu0
        %v2414 = vadd.f32 0.0, %v2413
        %v2415 = vpop.f32.mrf.mxu0
        %v2416 = vpop.f32.mrf.mxu0
        %v2417 = vadd.f32 0.0, %v2416
        %v2418 = vpop.f32.mrf.mxu0
        %2419 = vmatprep.mubr.bf16.mxu0 0
        %2420 = vmatmul.mubr.bf16.gmra.mxu0 %v2363
        %v2421 = vpop.f32.mrf.mxu0
        %v2422 = vadd.f32 0.0, %v2421
        %v2423 = vpop.f32.mrf.mxu0
        %v2424 = vpop.f32.mrf.mxu0
        %v2425 = vadd.f32 0.0, %v2424
        %v2426 = vpop.f32.mrf.mxu0
        %2427 = vmatprep.mubr.bf16.mxu0 0
        %2428 = vmatmul.mubr.bf16.gmra.mxu0 %v2366
        %v2429 = vpop.f32.mrf.mxu0
        %v2430 = vadd.f32 0.0, %v2429
        %v2431 = vpop.f32.mrf.mxu0
        %v2432 = vpop.f32.mrf.mxu0
        %v2433 = vadd.f32 0.0, %v2432
        %v2434 = vpop.f32.mrf.mxu0
        %2435 = vdwg.mxu0
        %v2436 = vadd.f32 %v2010, %v2406
        %v2437 = vadd.f32 %v2013, %v2409
        %v2438 = vadd.f32 %v2018, %v2414
        %v2439 = vadd.f32 %v2021, %v2417
        %v2440 = vadd.f32 %v2026, %v2422
        %v2441 = vadd.f32 %v2029, %v2425
        %v2442 = vadd.f32 %v2034, %v2430
        %v2443 = vadd.f32 %v2037, %v2433
        %2444 = vrot.lane.b32.xlu0 %v1250, 104
        %v2445 = vpop.permute.xlu0 %2444
        %2446 = vrot.lane.b32.xlu0 %v1251, 104
        %v2447 = vpop.permute.xlu0 %2446
        %2448 = vrot.lane.b32.xlu0 %v1252, 104
        %v2449 = vpop.permute.xlu0 %2448
        %2450 = vrot.lane.b32.xlu0 %v1253, 104
        %v2451 = vpop.permute.xlu0 %2450
        %2452 = vrot.lane.b32.xlu0 %v1254, 104
        %v2453 = vpop.permute.xlu0 %2452
        %2454 = vrot.lane.b32.xlu0 %v1255, 104
        %v2455 = vpop.permute.xlu0 %2454
        %2456 = vrot.lane.b32.xlu0 %v1256, 104
        %v2457 = vpop.permute.xlu0 %2456
        %2458 = vrot.lane.b32.xlu0 %v1257, 104
        %v2459 = vpop.permute.xlu0 %2458
        %v2461 = vsel %vm1262, %v2445, 0
        %v2464 = vsel %vm1262, %v2447, 0
        %v2467 = vsel %vm1262, %v2449, 0
        %v2470 = vsel %vm1262, %v2451, 0
        %v2473 = vsel %vm1262, %v2453, 0
        %v2476 = vsel %vm1262, %v2455, 0
        %v2479 = vsel %vm1262, %v2457, 0
        %v2482 = vsel %vm1262, %v2459, 0
        %2484 = vmatprep.subr.bf16.mxu0 0
        %2485 = vmatpush1.bf16.xpose.msra.mxu0 0
        %2486 = vmatprep.subr.bf16.mxu0 0
        %2487 = vmatpush1.bf16.xpose.msra.mxu0 0
        %2488 = vmatprep.subr.bf16.mxu0 0
        %2489 = vmatpush1.bf16.xpose.msra.mxu0 0
        %2490 = vmatprep.subr.bf16.mxu0 0
        %2491 = vmatpush1.bf16.xpose.msra.mxu0 0
        %2492 = vmatprep.subr.bf16.mxu0 0
        %2493 = vmatpush1.bf16.xpose.msra.mxu0 %v2482
        %2494 = vmatprep.subr.bf16.mxu0 0
        %2495 = vmatpush1.bf16.xpose.msra.mxu0 %v2479
        %2496 = vmatprep.subr.bf16.mxu0 0
        %2497 = vmatpush1.bf16.xpose.msra.mxu0 %v2476
        %2498 = vmatprep.subr.bf16.mxu0 0
        %2499 = vmatpush1.bf16.xpose.msra.mxu0 %v2473
        %2500 = vmatprep.subr.bf16.mxu0 0
        %2501 = vmatpush2.bf16.xpose.msra.mxu0 0
        %2502 = vmatprep.subr.bf16.mxu0 0
        %2503 = vmatpush2.bf16.xpose.msra.mxu0 0
        %2504 = vmatprep.subr.bf16.mxu0 0
        %2505 = vmatpush2.bf16.xpose.msra.mxu0 0
        %2506 = vmatprep.subr.bf16.mxu0 0
        %2507 = vmatpush2.bf16.xpose.msra.mxu0 0
        %2508 = vmatprep.subr.bf16.mxu0 0
        %2509 = vmatpush2.bf16.xpose.msra.mxu0 0
        %2510 = vmatprep.subr.bf16.mxu0 0
        %2511 = vmatpush2.bf16.xpose.msra.mxu0 0
        %2512 = vmatprep.subr.bf16.mxu0 0
        %2513 = vmatpush2.bf16.xpose.msra.mxu0 0
        %2514 = vmatprep.subr.bf16.mxu0 0
        %2515 = vmatpush2.bf16.xpose.msra.mxu0 0
        %2516 = vmatprep.mubr.bf16.mxu0 0
        %2517 = vmatmul.mubr.bf16.gmra.mxu0 %v2461
        %v2518 = vpop.f32.mrf.mxu0
        %v2519 = vadd.f32 0.0, %v2518
        %v2520 = vpop.f32.mrf.mxu0
        %v2521 = vpop.f32.mrf.mxu0
        %v2522 = vadd.f32 0.0, %v2521
        %v2523 = vpop.f32.mrf.mxu0
        %2524 = vmatprep.mubr.bf16.mxu0 0
        %2525 = vmatmul.mubr.bf16.gmra.mxu0 %v2464
        %v2526 = vpop.f32.mrf.mxu0
        %v2527 = vadd.f32 0.0, %v2526
        %v2528 = vpop.f32.mrf.mxu0
        %v2529 = vpop.f32.mrf.mxu0
        %v2530 = vadd.f32 0.0, %v2529
        %v2531 = vpop.f32.mrf.mxu0
        %2532 = vmatprep.mubr.bf16.mxu0 0
        %2533 = vmatmul.mubr.bf16.gmra.mxu0 %v2467
        %v2534 = vpop.f32.mrf.mxu0
        %v2535 = vadd.f32 0.0, %v2534
        %v2536 = vpop.f32.mrf.mxu0
        %v2537 = vpop.f32.mrf.mxu0
        %v2538 = vadd.f32 0.0, %v2537
        %v2539 = vpop.f32.mrf.mxu0
        %2540 = vmatprep.mubr.bf16.mxu0 0
        %2541 = vmatmul.mubr.bf16.gmra.mxu0 %v2470
        %v2542 = vpop.f32.mrf.mxu0
        %v2543 = vadd.f32 0.0, %v2542
        %v2544 = vpop.f32.mrf.mxu0
        %v2545 = vpop.f32.mrf.mxu0
        %v2546 = vadd.f32 0.0, %v2545
        %v2547 = vpop.f32.mrf.mxu0
        %2548 = vdwg.mxu0
        %v2549 = vmul.f32 %v2519, 0.35355338
        %v2550 = vmul.f32 %v2522, 0.35355338
        %v2551 = vmul.f32 %v2527, 0.35355338
        %v2552 = vmul.f32 %v2530, 0.35355338
        %v2553 = vmul.f32 %v2535, 0.35355338
        %v2554 = vmul.f32 %v2538, 0.35355338
        %v2555 = vmul.f32 %v2543, 0.35355338
        %v2556 = vmul.f32 %v2546, 0.35355338
        %s2557 = scalar_lea.vmem %s1, 192
        %v2558 = vld [vmem:[%s2557] sm:$0xff]
        %v2559 = vld [vmem:[%s2557 + $0x8] sm:$0xff]
        %v2560 = vld [vmem:[%s2557 + $0x10] sm:$0xff]
        %v2561 = vld [vmem:[%s2557 + $0x18] sm:$0xff]
        %v2562 = vld [vmem:[%s2557 + $0x20] sm:$0xff]
        %v2563 = vld [vmem:[%s2557 + $0x28] sm:$0xff]
        %v2564 = vld [vmem:[%s2557 + $0x30] sm:$0xff]
        %v2565 = vld [vmem:[%s2557 + $0x38] sm:$0xff]
        %v2566 = vadd.f32 %v2549, %v2558
        %v2567 = vadd.f32 %v2550, %v2559
        %v2568 = vadd.f32 %v2551, %v2560
        %v2569 = vadd.f32 %v2552, %v2561
        %v2570 = vadd.f32 %v2553, %v2562
        %v2571 = vadd.f32 %v2554, %v2563
        %v2572 = vadd.f32 %v2555, %v2564
        %v2573 = vadd.f32 %v2556, %v2565
        %v2574 = vsel %vm1376, %v2566, -inf
        %2575 = vmax.xlane.f32.xlu0 %v2574
        %v2576 = vpop.xlane.xlu0 %2575
        %v2577 = vsel %vm1376, %v2567, -inf
        %2578 = vmax.xlane.f32.xlu0 %v2577
        %v2579 = vpop.xlane.xlu0 %2578
        %v2580 = vsel %vm1376, %v2568, -inf
        %2581 = vmax.xlane.f32.xlu0 %v2580
        %v2582 = vpop.xlane.xlu0 %2581
        %v2583 = vsel %vm1376, %v2569, -inf
        %2584 = vmax.xlane.f32.xlu0 %v2583
        %v2585 = vpop.xlane.xlu0 %2584
        %v2586 = vsel %vm1376, %v2570, -inf
        %2587 = vmax.xlane.f32.xlu0 %v2586
        %v2588 = vpop.xlane.xlu0 %2587
        %v2589 = vsel %vm1376, %v2571, -inf
        %2590 = vmax.xlane.f32.xlu0 %v2589
        %v2591 = vpop.xlane.xlu0 %2590
        %v2592 = vsel %vm1376, %v2572, -inf
        %2593 = vmax.xlane.f32.xlu0 %v2592
        %v2594 = vpop.xlane.xlu0 %2593
        %v2595 = vsel %vm1376, %v2573, -inf
        %2596 = vmax.xlane.f32.xlu0 %v2595
        %v2597 = vpop.xlane.xlu0 %2596
        %v2598 = vsub.f32 %v2566, %v2576
        %v2599 = vsub.f32 %v2567, %v2579
        %v2600 = vsub.f32 %v2568, %v2582
        %v2601 = vsub.f32 %v2569, %v2585
        %v2602 = vsub.f32 %v2570, %v2588
        %v2603 = vsub.f32 %v2571, %v2591
        %v2604 = vsub.f32 %v2572, %v2594
        %v2605 = vsub.f32 %v2573, %v2597
        %v2606 = vmul.f32 %v2598, 1.442695
        %v2607 = vpow.pop %v2606
        %v2608 = vmul.f32 %v2599, 1.442695
        %v2609 = vpow.pop %v2608
        %v2610 = vmul.f32 %v2600, 1.442695
        %v2611 = vpow.pop %v2610
        %v2612 = vmul.f32 %v2601, 1.442695
        %v2613 = vpow.pop %v2612
        %v2614 = vmul.f32 %v2602, 1.442695
        %v2615 = vpow.pop %v2614
        %v2616 = vmul.f32 %v2603, 1.442695
        %v2617 = vpow.pop %v2616
        %v2618 = vmul.f32 %v2604, 1.442695
        %v2619 = vpow.pop %v2618
        %v2620 = vmul.f32 %v2605, 1.442695
        %v2621 = vpow.pop %v2620
        %v2622 = vsel %vm1376, %v2607, 0.0
        %2623 = vadd.xlane.f32.xlu0 %v2622
        %v2624 = vpop.xlane.xlu0 %2623
        %v2625 = vsel %vm1376, %v2609, 0.0
        %2626 = vadd.xlane.f32.xlu0 %v2625
        %v2627 = vpop.xlane.xlu0 %2626
        %v2628 = vsel %vm1376, %v2611, 0.0
        %2629 = vadd.xlane.f32.xlu0 %v2628
        %v2630 = vpop.xlane.xlu0 %2629
        %v2631 = vsel %vm1376, %v2613, 0.0
        %2632 = vadd.xlane.f32.xlu0 %v2631
        %v2633 = vpop.xlane.xlu0 %2632
        %v2634 = vsel %vm1376, %v2615, 0.0
        %2635 = vadd.xlane.f32.xlu0 %v2634
        %v2636 = vpop.xlane.xlu0 %2635
        %v2637 = vsel %vm1376, %v2617, 0.0
        %2638 = vadd.xlane.f32.xlu0 %v2637
        %v2639 = vpop.xlane.xlu0 %2638
        %v2640 = vsel %vm1376, %v2619, 0.0
        %2641 = vadd.xlane.f32.xlu0 %v2640
        %v2642 = vpop.xlane.xlu0 %2641
        %v2643 = vsel %vm1376, %v2621, 0.0
        %2644 = vadd.xlane.f32.xlu0 %v2643
        %v2645 = vpop.xlane.xlu0 %2644
        %v2646 = vrcp.pop %v2624
        %v2647 = vrcp.pop %v2627
        %v2648 = vrcp.pop %v2630
        %v2649 = vrcp.pop %v2633
        %v2650 = vrcp.pop %v2636
        %v2651 = vrcp.pop %v2639
        %v2652 = vrcp.pop %v2642
        %v2653 = vrcp.pop %v2645
        %v2654 = vmul.f32 %v2607, %v2646
        %v2655 = vmul.f32 %v2609, %v2647
        %v2656 = vmul.f32 %v2611, %v2648
        %v2657 = vmul.f32 %v2613, %v2649
        %v2658 = vmul.f32 %v2615, %v2650
        %v2659 = vmul.f32 %v2617, %v2651
        %v2660 = vmul.f32 %v2619, %v2652
        %v2661 = vmul.f32 %v2621, %v2653
        %v2662 = vpack.c.bf16 %v2655, %v2654
        %v2663 = vpack.c.bf16 %v2657, %v2656
        %v2664 = vpack.c.bf16 %v2659, %v2658
        %v2665 = vpack.c.bf16 %v2661, %v2660
        %2666 = vrot.lane.b32.xlu0 %v1258, 104
        %v2667 = vpop.permute.xlu0 %2666
        %2668 = vrot.lane.b32.xlu0 %v1259, 104
        %v2669 = vpop.permute.xlu0 %2668
        %2670 = vrot.lane.b32.xlu0 %v1260, 104
        %v2671 = vpop.permute.xlu0 %2670
        %2672 = vrot.lane.b32.xlu0 %v1261, 104
        %v2673 = vpop.permute.xlu0 %2672
        %v2679 = vsel %vm1376, %v2662, 0
        %v2682 = vsel %vm1376, %v2663, 0
        %v2685 = vsel %vm1376, %v2664, 0
        %v2688 = vsel %vm1376, %v2665, 0
        %2690 = vmatprep.subr.bf16.mxu0 0
        %2691 = vmatpush1.bf16.msra.mxu0 0
        %2692 = vmatprep.subr.bf16.mxu0 0
        %2693 = vmatpush1.bf16.msra.mxu0 0
        %2694 = vmatprep.subr.bf16.mxu0 0
        %2695 = vmatpush1.bf16.msra.mxu0 0
        %2696 = vmatprep.subr.bf16.mxu0 0
        %2697 = vmatpush1.bf16.msra.mxu0 0
        %2698 = vmatprep.subr.bf16.mxu0 0
        %2699 = vmatpush1.bf16.msra.mxu0 %v2673
        %2700 = vmatprep.subr.bf16.mxu0 0
        %2701 = vmatpush1.bf16.msra.mxu0 %v2671
        %2702 = vmatprep.subr.bf16.mxu0 0
        %2703 = vmatpush1.bf16.msra.mxu0 %v2669
        %2704 = vmatprep.subr.bf16.mxu0 0
        %2705 = vmatpush1.bf16.msra.mxu0 %v2667
        %2706 = vmatprep.subr.bf16.mxu0 0
        %2707 = vmatpush2.bf16.msra.mxu0 0
        %2708 = vmatprep.subr.bf16.mxu0 0
        %2709 = vmatpush2.bf16.msra.mxu0 0
        %2710 = vmatprep.subr.bf16.mxu0 0
        %2711 = vmatpush2.bf16.msra.mxu0 0
        %2712 = vmatprep.subr.bf16.mxu0 0
        %2713 = vmatpush2.bf16.msra.mxu0 0
        %2714 = vmatprep.subr.bf16.mxu0 0
        %2715 = vmatpush2.bf16.msra.mxu0 0
        %2716 = vmatprep.subr.bf16.mxu0 0
        %2717 = vmatpush2.bf16.msra.mxu0 0
        %2718 = vmatprep.subr.bf16.mxu0 0
        %2719 = vmatpush2.bf16.msra.mxu0 0
        %2720 = vmatprep.subr.bf16.mxu0 0
        %2721 = vmatpush2.bf16.msra.mxu0 0
        %2722 = vmatprep.mubr.bf16.mxu0 0
        %2723 = vmatmul.mubr.bf16.gmra.mxu0 %v2679
        %v2724 = vpop.f32.mrf.mxu0
        %v2725 = vadd.f32 0.0, %v2724
        %v2726 = vpop.f32.mrf.mxu0
        %v2727 = vpop.f32.mrf.mxu0
        %v2728 = vadd.f32 0.0, %v2727
        %v2729 = vpop.f32.mrf.mxu0
        %2730 = vmatprep.mubr.bf16.mxu0 0
        %2731 = vmatmul.mubr.bf16.gmra.mxu0 %v2682
        %v2732 = vpop.f32.mrf.mxu0
        %v2733 = vadd.f32 0.0, %v2732
        %v2734 = vpop.f32.mrf.mxu0
        %v2735 = vpop.f32.mrf.mxu0
        %v2736 = vadd.f32 0.0, %v2735
        %v2737 = vpop.f32.mrf.mxu0
        %2738 = vmatprep.mubr.bf16.mxu0 0
        %2739 = vmatmul.mubr.bf16.gmra.mxu0 %v2685
        %v2740 = vpop.f32.mrf.mxu0
        %v2741 = vadd.f32 0.0, %v2740
        %v2742 = vpop.f32.mrf.mxu0
        %v2743 = vpop.f32.mrf.mxu0
        %v2744 = vadd.f32 0.0, %v2743
        %v2745 = vpop.f32.mrf.mxu0
        %2746 = vmatprep.mubr.bf16.mxu0 0
        %2747 = vmatmul.mubr.bf16.gmra.mxu0 %v2688
        %v2748 = vpop.f32.mrf.mxu0
        %v2749 = vadd.f32 0.0, %v2748
        %v2750 = vpop.f32.mrf.mxu0
        %v2751 = vpop.f32.mrf.mxu0
        %v2752 = vadd.f32 0.0, %v2751
        %v2753 = vpop.f32.mrf.mxu0
        %2754 = vdwg.mxu0
        %v2755 = vpack.c.bf16 %v2728, %v2725
        %v2756 = vpack.c.bf16 %v2736, %v2733
        %v2757 = vpack.c.bf16 %v2744, %v2741
        %v2758 = vpack.c.bf16 %v2752, %v2749
        %v2759 = vpack.c.bf16 %v1249, %v1249
        %v2761 = vsel %vm1262, %v2755, 0
        %v2764 = vsel %vm1262, %v2756, 0
        %v2767 = vsel %vm1262, %v2757, 0
        %v2770 = vsel %vm1262, %v2758, 0
        %v2773 = vsel %vm1891, %v2759, 0
        %2775 = vmatprep.subr.bf16.mxu0 0
        %2776 = vmatpush1.bf16.msra.mxu0 0
        %2777 = vmatprep.subr.bf16.mxu0 0
        %2778 = vmatpush1.bf16.msra.mxu0 0
        %2779 = vmatprep.subr.bf16.mxu0 0
        %2780 = vmatpush1.bf16.msra.mxu0 0
        %2781 = vmatprep.subr.bf16.mxu0 0
        %2782 = vmatpush1.bf16.msra.mxu0 0
        %2783 = vmatprep.subr.bf16.mxu0 0
        %2784 = vmatpush1.bf16.msra.mxu0 0
        %2785 = vmatprep.subr.bf16.mxu0 0
        %2786 = vmatpush1.bf16.msra.mxu0 0
        %2787 = vmatprep.subr.bf16.mxu0 0
        %2788 = vmatpush1.bf16.msra.mxu0 0
        %2789 = vmatprep.subr.bf16.mxu0 0
        %2790 = vmatpush1.bf16.msra.mxu0 %v2773
        %2791 = vmatprep.subr.bf16.mxu0 0
        %2792 = vmatpush2.bf16.msra.mxu0 0
        %2793 = vmatprep.subr.bf16.mxu0 0
        %2794 = vmatpush2.bf16.msra.mxu0 0
        %2795 = vmatprep.subr.bf16.mxu0 0
        %2796 = vmatpush2.bf16.msra.mxu0 0
        %2797 = vmatprep.subr.bf16.mxu0 0
        %2798 = vmatpush2.bf16.msra.mxu0 0
        %2799 = vmatprep.subr.bf16.mxu0 0
        %2800 = vmatpush2.bf16.msra.mxu0 0
        %2801 = vmatprep.subr.bf16.mxu0 0
        %2802 = vmatpush2.bf16.msra.mxu0 0
        %2803 = vmatprep.subr.bf16.mxu0 0
        %2804 = vmatpush2.bf16.msra.mxu0 0
        %2805 = vmatprep.subr.bf16.mxu0 0
        %2806 = vmatpush2.bf16.msra.mxu0 0
        %2807 = vmatprep.mubr.bf16.mxu0 0
        %2808 = vmatmul.mubr.bf16.gmra.mxu0 %v2761
        %v2809 = vpop.f32.mrf.mxu0
        %v2810 = vadd.f32 0.0, %v2809
        %v2811 = vpop.f32.mrf.mxu0
        %v2812 = vpop.f32.mrf.mxu0
        %v2813 = vadd.f32 0.0, %v2812
        %v2814 = vpop.f32.mrf.mxu0
        %2815 = vmatprep.mubr.bf16.mxu0 0
        %2816 = vmatmul.mubr.bf16.gmra.mxu0 %v2764
        %v2817 = vpop.f32.mrf.mxu0
        %v2818 = vadd.f32 0.0, %v2817
        %v2819 = vpop.f32.mrf.mxu0
        %v2820 = vpop.f32.mrf.mxu0
        %v2821 = vadd.f32 0.0, %v2820
        %v2822 = vpop.f32.mrf.mxu0
        %2823 = vmatprep.mubr.bf16.mxu0 0
        %2824 = vmatmul.mubr.bf16.gmra.mxu0 %v2767
        %v2825 = vpop.f32.mrf.mxu0
        %v2826 = vadd.f32 0.0, %v2825
        %v2827 = vpop.f32.mrf.mxu0
        %v2828 = vpop.f32.mrf.mxu0
        %v2829 = vadd.f32 0.0, %v2828
        %v2830 = vpop.f32.mrf.mxu0
        %2831 = vmatprep.mubr.bf16.mxu0 0
        %2832 = vmatmul.mubr.bf16.gmra.mxu0 %v2770
        %v2833 = vpop.f32.mrf.mxu0
        %v2834 = vadd.f32 0.0, %v2833
        %v2835 = vpop.f32.mrf.mxu0
        %v2836 = vpop.f32.mrf.mxu0
        %v2837 = vadd.f32 0.0, %v2836
        %v2838 = vpop.f32.mrf.mxu0
        %2839 = vdwg.mxu0
        %v2840 = vadd.f32 %v2436, %v2810
        %v2841 = vadd.f32 %v2437, %v2813
        %v2842 = vadd.f32 %v2438, %v2818
        %v2843 = vadd.f32 %v2439, %v2821
        %v2844 = vadd.f32 %v2440, %v2826
        %v2845 = vadd.f32 %v2441, %v2829
        %v2846 = vadd.f32 %v2442, %v2834
        %v2847 = vadd.f32 %v2443, %v2837
        %v2848 = vadd.f32 %v852, %v2840
        %v2849 = vadd.f32 %v853, %v2841
        %v2850 = vadd.f32 %v854, %v2842
        %v2851 = vadd.f32 %v855, %v2843
        %v2852 = vadd.f32 %v856, %v2844
        %v2853 = vadd.f32 %v857, %v2845
        %v2854 = vadd.f32 %v858, %v2846
        %v2855 = vadd.f32 %v859, %v2847
        %v2856 = vld [vmem:[#allocation13] sm:$0x1]
        %v2858 = vlaneseq
        %v2859 = vshrl.u32 %v2858, 7
        %v2860 = vsub.s32 0, %v2859
        %v2861 = vrot.slane %v2856, %v2860
        %v2863 = vadd.f32 %v2848, %v2861
        %v2864 = vadd.f32 %v2849, %v2861
        %v2865 = vadd.f32 %v2850, %v2861
        %v2866 = vadd.f32 %v2851, %v2861
        %v2867 = vadd.f32 %v2852, %v2861
        %v2868 = vadd.f32 %v2853, %v2861
        %v2869 = vadd.f32 %v2854, %v2861
        %v2870 = vadd.f32 %v2855, %v2861
        %2871 = vst.msk [vmem:[#allocation2] sm:$0xff] %vm862, 0.0
        %vm2872 = vcmask 254976
        %2873 = vst.msk [vmem:[#allocation2 + $0x8] sm:$0x3] %vm2872, 0.0
        %2874 = vst.msk [vmem:[#allocation2 + $0x10] sm:$0xff] %vm862, 0.0
        %2875 = vst.msk [vmem:[#allocation2 + $0x18] sm:$0x3] %vm2872, 0.0
        %2876 = vst.msk [vmem:[#allocation2 + $0x20] sm:$0xff] %vm862, 0.0
        %2877 = vst.msk [vmem:[#allocation2 + $0x28] sm:$0x3] %vm2872, 0.0
        %2878 = vst.msk [vmem:[#allocation2 + $0x30] sm:$0xff] %vm862, 0.0
        %2879 = vst.msk [vmem:[#allocation2 + $0x38] sm:$0x3] %vm2872, 0.0
        %2880 = vst.msk [vmem:[#allocation2 + $0x40] sm:$0xff] %vm862, 0.0
        %2881 = vst.msk [vmem:[#allocation2 + $0x48] sm:$0x3] %vm2872, 0.0
        %2882 = vst.msk [vmem:[#allocation2 + $0x50] sm:$0xff] %vm862, 0.0
        %2883 = vst.msk [vmem:[#allocation2 + $0x58] sm:$0x3] %vm2872, 0.0
        %2884 = vst.msk [vmem:[#allocation2 + $0x60] sm:$0xff] %vm862, 0.0
        %2885 = vst.msk [vmem:[#allocation2 + $0x68] sm:$0x3] %vm2872, 0.0
        %2886 = vst.msk [vmem:[#allocation2 + $0x70] sm:$0xff] %vm862, 0.0
        %2887 = vst.msk [vmem:[#allocation2 + $0x78] sm:$0x3] %vm2872, 0.0
        %2888 = vst.msk [vmem:[#allocation2 + $0x80] sm:$0xff] %vm862, 0.0
        %2889 = vst.msk [vmem:[#allocation2 + $0x88] sm:$0x3] %vm2872, 0.0
        %2890 = vst.msk [vmem:[#allocation2 + $0x90] sm:$0xff] %vm862, 0.0
        %2891 = vst.msk [vmem:[#allocation2 + $0x98] sm:$0x3] %vm2872, 0.0
        %s2892 = scalar_lea.vmem [#allocation2], 16
        %2893 = vst.msk [vmem:[%s2892 + $0x1] sm:$0xff] %vm862, %v2863
        %2894 = vst.msk [vmem:[%s2892 + $0x11] sm:$0xff] %vm862, %v2864
        %2895 = vst.msk [vmem:[%s2892 + $0x21] sm:$0xff] %vm862, %v2865
        %2896 = vst.msk [vmem:[%s2892 + $0x31] sm:$0xff] %vm862, %v2866
        %2897 = vst.msk [vmem:[%s2892 + $0x41] sm:$0xff] %vm862, %v2867
        %2898 = vst.msk [vmem:[%s2892 + $0x51] sm:$0xff] %vm862, %v2868
        %2899 = vst.msk [vmem:[%s2892 + $0x61] sm:$0xff] %vm862, %v2869
        %2900 = vst.msk [vmem:[%s2892 + $0x71] sm:$0xff] %vm862, %v2870
        %v2901 = vld [vmem:[#allocation2] sm:$0xff]
        %v2902 = vld [vmem:[#allocation2 + $0x8] sm:$0x3]
        %v2903 = vld [vmem:[#allocation2 + $0x10] sm:$0xff]
        %v2904 = vld [vmem:[#allocation2 + $0x18] sm:$0x3]
        %v2905 = vld [vmem:[#allocation2 + $0x20] sm:$0xff]
        %v2906 = vld [vmem:[#allocation2 + $0x28] sm:$0x3]
        %v2907 = vld [vmem:[#allocation2 + $0x30] sm:$0xff]
        %v2908 = vld [vmem:[#allocation2 + $0x38] sm:$0x3]
        %v2909 = vld [vmem:[#allocation2 + $0x40] sm:$0xff]
        %v2910 = vld [vmem:[#allocation2 + $0x48] sm:$0x3]
        %v2911 = vld [vmem:[#allocation2 + $0x50] sm:$0xff]
        %v2912 = vld [vmem:[#allocation2 + $0x58] sm:$0x3]
        %v2913 = vld [vmem:[#allocation2 + $0x60] sm:$0xff]
        %v2914 = vld [vmem:[#allocation2 + $0x68] sm:$0x3]
        %v2915 = vld [vmem:[#allocation2 + $0x70] sm:$0xff]
        %v2916 = vld [vmem:[#allocation2 + $0x78] sm:$0x3]
        %v2917 = vld [vmem:[#allocation2 + $0x80] sm:$0xff]
        %v2918 = vld [vmem:[#allocation2 + $0x88] sm:$0x3]
        %v2919 = vld [vmem:[#allocation2 + $0x90] sm:$0xff]
        %v2920 = vld [vmem:[#allocation2 + $0x98] sm:$0x3]
        %v2921 = vld [vmem:[#allocation14] sm:$0xff]
        %v2922 = vld [vmem:[#allocation14 + $0x8] sm:$0x1]
        %v2923 = vlaneseq
        %v2924 = vshrl.u32 %v2923, 7
        %v2925 = vsub.s32 0, %v2924
        %v2926 = vrot.slane %v2921, %v2925
        %v2927 = vmul.f32 %v2901, %v2926
        %v2928 = vmul.f32 %v2903, %v2926
        %v2929 = vmul.f32 %v2905, %v2926
        %v2930 = vmul.f32 %v2907, %v2926
        %v2931 = vmul.f32 %v2909, %v2926
        %v2932 = vmul.f32 %v2911, %v2926
        %v2933 = vmul.f32 %v2913, %v2926
        %v2934 = vmul.f32 %v2915, %v2926
        %v2935 = vadd.f32 %v2927, 0.0
        %v2936 = vadd.f32 %v2928, 0.0
        %v2937 = vadd.f32 %v2929, 0.0
        %v2938 = vadd.f32 %v2930, 0.0
        %v2939 = vadd.f32 %v2931, 0.0
        %v2940 = vadd.f32 %v2932, 0.0
        %v2941 = vadd.f32 %v2933, 0.0
        %v2942 = vadd.f32 %v2934, 0.0
        %v2943 = vlaneseq
        %v2944 = vshrl.u32 %v2943, 7
        %v2945 = vsub.s32 1, %v2944
        %v2946 = vrot.slane %v2921, %v2945
        %v2947 = vmul.f32 %v2901, %v2946
        %v2948 = vmul.f32 %v2902, %v2946
        %v2949 = vmul.f32 %v2903, %v2946
        %v2950 = vmul.f32 %v2904, %v2946
        %v2951 = vmul.f32 %v2905, %v2946
        %v2952 = vmul.f32 %v2906, %v2946
        %v2953 = vmul.f32 %v2907, %v2946
        %v2954 = vmul.f32 %v2908, %v2946
        %v2955 = vmul.f32 %v2909, %v2946
        %v2956 = vmul.f32 %v2910, %v2946
        %v2957 = vmul.f32 %v2911, %v2946
        %v2958 = vmul.f32 %v2912, %v2946
        %v2959 = vmul.f32 %v2913, %v2946
        %v2960 = vmul.f32 %v2914, %v2946
        %v2961 = vmul.f32 %v2915, %v2946
        %v2962 = vmul.f32 %v2916, %v2946
        %vm2979 = vcmask 1046528
        %v2980 = vrot.slane %v2947, 1
        %v2981 = vrot.slane %v2948, 1
        %v2982 = vsel %vm2979, %v2980, %v2981
        %v2983 = vrot.slane %v2949, 1
        %v2984 = vrot.slane %v2950, 1
        %v2985 = vsel %vm2979, %v2983, %v2984
        %v2986 = vrot.slane %v2951, 1
        %v2987 = vrot.slane %v2952, 1
        %v2988 = vsel %vm2979, %v2986, %v2987
        %v2989 = vrot.slane %v2953, 1
        %v2990 = vrot.slane %v2954, 1
        %v2991 = vsel %vm2979, %v2989, %v2990
        %v2992 = vrot.slane %v2955, 1
        %v2993 = vrot.slane %v2956, 1
        %v2994 = vsel %vm2979, %v2992, %v2993
        %v2995 = vrot.slane %v2957, 1
        %v2996 = vrot.slane %v2958, 1
        %v2997 = vsel %vm2979, %v2995, %v2996
        %v2998 = vrot.slane %v2959, 1
        %v2999 = vrot.slane %v2960, 1
        %v3000 = vsel %vm2979, %v2998, %v2999
        %v3001 = vrot.slane %v2961, 1
        %v3002 = vrot.slane %v2962, 1
        %v3003 = vsel %vm2979, %v3001, %v3002
        %v3012 = vadd.f32 %v2935, %v2982
        %v3013 = vadd.f32 %v2936, %v2985
        %v3014 = vadd.f32 %v2937, %v2988
        %v3015 = vadd.f32 %v2938, %v2991
        %v3016 = vadd.f32 %v2939, %v2994
        %v3017 = vadd.f32 %v2940, %v2997
        %v3018 = vadd.f32 %v2941, %v3000
        %v3019 = vadd.f32 %v2942, %v3003
        %v3020 = vlaneseq
        %v3021 = vshrl.u32 %v3020, 7
        %v3022 = vsub.s32 2, %v3021
        %v3023 = vrot.slane %v2921, %v3022
        %v3024 = vmul.f32 %v2901, %v3023
        %v3025 = vmul.f32 %v2902, %v3023
        %v3026 = vmul.f32 %v2903, %v3023
        %v3027 = vmul.f32 %v2904, %v3023
        %v3028 = vmul.f32 %v2905, %v3023
        %v3029 = vmul.f32 %v2906, %v3023
        %v3030 = vmul.f32 %v2907, %v3023
        %v3031 = vmul.f32 %v2908, %v3023
        %v3032 = vmul.f32 %v2909, %v3023
        %v3033 = vmul.f32 %v2910, %v3023
        %v3034 = vmul.f32 %v2911, %v3023
        %v3035 = vmul.f32 %v2912, %v3023
        %v3036 = vmul.f32 %v2913, %v3023
        %v3037 = vmul.f32 %v2914, %v3023
        %v3038 = vmul.f32 %v2915, %v3023
        %v3039 = vmul.f32 %v2916, %v3023
        %vm3056 = vcmask 1045504
        %v3057 = vrot.slane %v3024, 2
        %v3058 = vrot.slane %v3025, 2
        %v3059 = vsel %vm3056, %v3057, %v3058
        %v3060 = vrot.slane %v3026, 2
        %v3061 = vrot.slane %v3027, 2
        %v3062 = vsel %vm3056, %v3060, %v3061
        %v3063 = vrot.slane %v3028, 2
        %v3064 = vrot.slane %v3029, 2
        %v3065 = vsel %vm3056, %v3063, %v3064
        %v3066 = vrot.slane %v3030, 2
        %v3067 = vrot.slane %v3031, 2
        %v3068 = vsel %vm3056, %v3066, %v3067
        %v3069 = vrot.slane %v3032, 2
        %v3070 = vrot.slane %v3033, 2
        %v3071 = vsel %vm3056, %v3069, %v3070
        %v3072 = vrot.slane %v3034, 2
        %v3073 = vrot.slane %v3035, 2
        %v3074 = vsel %vm3056, %v3072, %v3073
        %v3075 = vrot.slane %v3036, 2
        %v3076 = vrot.slane %v3037, 2
        %v3077 = vsel %vm3056, %v3075, %v3076
        %v3078 = vrot.slane %v3038, 2
        %v3079 = vrot.slane %v3039, 2
        %v3080 = vsel %vm3056, %v3078, %v3079
        %v3089 = vadd.f32 %v3012, %v3059
        %v3090 = vadd.f32 %v3013, %v3062
        %v3091 = vadd.f32 %v3014, %v3065
        %v3092 = vadd.f32 %v3015, %v3068
        %v3093 = vadd.f32 %v3016, %v3071
        %v3094 = vadd.f32 %v3017, %v3074
        %v3095 = vadd.f32 %v3018, %v3077
        %v3096 = vadd.f32 %v3019, %v3080
        %v3097 = vlaneseq
        %v3098 = vshrl.u32 %v3097, 7
        %v3099 = vsub.s32 3, %v3098
        %v3100 = vrot.slane %v2921, %v3099
        %v3101 = vmul.f32 %v2903, %v3100
        %v3102 = vmul.f32 %v2905, %v3100
        %v3103 = vmul.f32 %v2907, %v3100
        %v3104 = vmul.f32 %v2909, %v3100
        %v3105 = vmul.f32 %v2911, %v3100
        %v3106 = vmul.f32 %v2913, %v3100
        %v3107 = vmul.f32 %v2915, %v3100
        %v3108 = vmul.f32 %v2917, %v3100
        %v3109 = vadd.f32 %v3089, %v3101
        %v3110 = vadd.f32 %v3090, %v3102
        %v3111 = vadd.f32 %v3091, %v3103
        %v3112 = vadd.f32 %v3092, %v3104
        %v3113 = vadd.f32 %v3093, %v3105
        %v3114 = vadd.f32 %v3094, %v3106
        %v3115 = vadd.f32 %v3095, %v3107
        %v3116 = vadd.f32 %v3096, %v3108
        %v3117 = vlaneseq
        %v3118 = vshrl.u32 %v3117, 7
        %v3119 = vsub.s32 4, %v3118
        %v3120 = vrot.slane %v2921, %v3119
        %v3121 = vmul.f32 %v2903, %v3120
        %v3122 = vmul.f32 %v2904, %v3120
        %v3123 = vmul.f32 %v2905, %v3120
        %v3124 = vmul.f32 %v2906, %v3120
        %v3125 = vmul.f32 %v2907, %v3120
        %v3126 = vmul.f32 %v2908, %v3120
        %v3127 = vmul.f32 %v2909, %v3120
        %v3128 = vmul.f32 %v2910, %v3120
        %v3129 = vmul.f32 %v2911, %v3120
        %v3130 = vmul.f32 %v2912, %v3120
        %v3131 = vmul.f32 %v2913, %v3120
        %v3132 = vmul.f32 %v2914, %v3120
        %v3133 = vmul.f32 %v2915, %v3120
        %v3134 = vmul.f32 %v2916, %v3120
        %v3135 = vmul.f32 %v2917, %v3120
        %v3136 = vmul.f32 %v2918, %v3120
        %v3153 = vrot.slane %v3121, 1
        %v3154 = vrot.slane %v3122, 1
        %v3155 = vsel %vm2979, %v3153, %v3154
        %v3156 = vrot.slane %v3123, 1
        %v3157 = vrot.slane %v3124, 1
        %v3158 = vsel %vm2979, %v3156, %v3157
        %v3159 = vrot.slane %v3125, 1
        %v3160 = vrot.slane %v3126, 1
        %v3161 = vsel %vm2979, %v3159, %v3160
        %v3162 = vrot.slane %v3127, 1
        %v3163 = vrot.slane %v3128, 1
        %v3164 = vsel %vm2979, %v3162, %v3163
        %v3165 = vrot.slane %v3129, 1
        %v3166 = vrot.slane %v3130, 1
        %v3167 = vsel %vm2979, %v3165, %v3166
        %v3168 = vrot.slane %v3131, 1
        %v3169 = vrot.slane %v3132, 1
        %v3170 = vsel %vm2979, %v3168, %v3169
        %v3171 = vrot.slane %v3133, 1
        %v3172 = vrot.slane %v3134, 1
        %v3173 = vsel %vm2979, %v3171, %v3172
        %v3174 = vrot.slane %v3135, 1
        %v3175 = vrot.slane %v3136, 1
        %v3176 = vsel %vm2979, %v3174, %v3175
        %v3185 = vadd.f32 %v3109, %v3155
        %v3186 = vadd.f32 %v3110, %v3158
        %v3187 = vadd.f32 %v3111, %v3161
        %v3188 = vadd.f32 %v3112, %v3164
        %v3189 = vadd.f32 %v3113, %v3167
        %v3190 = vadd.f32 %v3114, %v3170
        %v3191 = vadd.f32 %v3115, %v3173
        %v3192 = vadd.f32 %v3116, %v3176
        %v3193 = vlaneseq
        %v3194 = vshrl.u32 %v3193, 7
        %v3195 = vsub.s32 5, %v3194
        %v3196 = vrot.slane %v2921, %v3195
        %v3197 = vmul.f32 %v2903, %v3196
        %v3198 = vmul.f32 %v2904, %v3196
        %v3199 = vmul.f32 %v2905, %v3196
        %v3200 = vmul.f32 %v2906, %v3196
        %v3201 = vmul.f32 %v2907, %v3196
        %v3202 = vmul.f32 %v2908, %v3196
        %v3203 = vmul.f32 %v2909, %v3196
        %v3204 = vmul.f32 %v2910, %v3196
        %v3205 = vmul.f32 %v2911, %v3196
        %v3206 = vmul.f32 %v2912, %v3196
        %v3207 = vmul.f32 %v2913, %v3196
        %v3208 = vmul.f32 %v2914, %v3196
        %v3209 = vmul.f32 %v2915, %v3196
        %v3210 = vmul.f32 %v2916, %v3196
        %v3211 = vmul.f32 %v2917, %v3196
        %v3212 = vmul.f32 %v2918, %v3196
        %v3229 = vrot.slane %v3197, 2
        %v3230 = vrot.slane %v3198, 2
        %v3231 = vsel %vm3056, %v3229, %v3230
        %v3232 = vrot.slane %v3199, 2
        %v3233 = vrot.slane %v3200, 2
        %v3234 = vsel %vm3056, %v3232, %v3233
        %v3235 = vrot.slane %v3201, 2
        %v3236 = vrot.slane %v3202, 2
        %v3237 = vsel %vm3056, %v3235, %v3236
        %v3238 = vrot.slane %v3203, 2
        %v3239 = vrot.slane %v3204, 2
        %v3240 = vsel %vm3056, %v3238, %v3239
        %v3241 = vrot.slane %v3205, 2
        %v3242 = vrot.slane %v3206, 2
        %v3243 = vsel %vm3056, %v3241, %v3242
        %v3244 = vrot.slane %v3207, 2
        %v3245 = vrot.slane %v3208, 2
        %v3246 = vsel %vm3056, %v3244, %v3245
        %v3247 = vrot.slane %v3209, 2
        %v3248 = vrot.slane %v3210, 2
        %v3249 = vsel %vm3056, %v3247, %v3248
        %v3250 = vrot.slane %v3211, 2
        %v3251 = vrot.slane %v3212, 2
        %v3252 = vsel %vm3056, %v3250, %v3251
        %v3261 = vadd.f32 %v3185, %v3231
        %v3262 = vadd.f32 %v3186, %v3234
        %v3263 = vadd.f32 %v3187, %v3237
        %v3264 = vadd.f32 %v3188, %v3240
        %v3265 = vadd.f32 %v3189, %v3243
        %v3266 = vadd.f32 %v3190, %v3246
        %v3267 = vadd.f32 %v3191, %v3249
        %v3268 = vadd.f32 %v3192, %v3252
        %v3269 = vlaneseq
        %v3270 = vshrl.u32 %v3269, 7
        %v3271 = vsub.s32 6, %v3270
        %v3272 = vrot.slane %v2921, %v3271
        %v3273 = vmul.f32 %v2905, %v3272
        %v3274 = vmul.f32 %v2907, %v3272
        %v3275 = vmul.f32 %v2909, %v3272
        %v3276 = vmul.f32 %v2911, %v3272
        %v3277 = vmul.f32 %v2913, %v3272
        %v3278 = vmul.f32 %v2915, %v3272
        %v3279 = vmul.f32 %v2917, %v3272
        %v3280 = vmul.f32 %v2919, %v3272
        %v3281 = vadd.f32 %v3261, %v3273
        %v3282 = vadd.f32 %v3262, %v3274
        %v3283 = vadd.f32 %v3263, %v3275
        %v3284 = vadd.f32 %v3264, %v3276
        %v3285 = vadd.f32 %v3265, %v3277
        %v3286 = vadd.f32 %v3266, %v3278
        %v3287 = vadd.f32 %v3267, %v3279
        %v3288 = vadd.f32 %v3268, %v3280
        %v3289 = vlaneseq
        %v3290 = vshrl.u32 %v3289, 7
        %v3291 = vsub.s32 7, %v3290
        %v3292 = vrot.slane %v2921, %v3291
        %v3293 = vmul.f32 %v2905, %v3292
        %v3294 = vmul.f32 %v2906, %v3292
        %v3295 = vmul.f32 %v2907, %v3292
        %v3296 = vmul.f32 %v2908, %v3292
        %v3297 = vmul.f32 %v2909, %v3292
        %v3298 = vmul.f32 %v2910, %v3292
        %v3299 = vmul.f32 %v2911, %v3292
        %v3300 = vmul.f32 %v2912, %v3292
        %v3301 = vmul.f32 %v2913, %v3292
        %v3302 = vmul.f32 %v2914, %v3292
        %v3303 = vmul.f32 %v2915, %v3292
        %v3304 = vmul.f32 %v2916, %v3292
        %v3305 = vmul.f32 %v2917, %v3292
        %v3306 = vmul.f32 %v2918, %v3292
        %v3307 = vmul.f32 %v2919, %v3292
        %v3308 = vmul.f32 %v2920, %v3292
        %v3325 = vrot.slane %v3293, 1
        %v3326 = vrot.slane %v3294, 1
        %v3327 = vsel %vm2979, %v3325, %v3326
        %v3328 = vrot.slane %v3295, 1
        %v3329 = vrot.slane %v3296, 1
        %v3330 = vsel %vm2979, %v3328, %v3329
        %v3331 = vrot.slane %v3297, 1
        %v3332 = vrot.slane %v3298, 1
        %v3333 = vsel %vm2979, %v3331, %v3332
        %v3334 = vrot.slane %v3299, 1
        %v3335 = vrot.slane %v3300, 1
        %v3336 = vsel %vm2979, %v3334, %v3335
        %v3337 = vrot.slane %v3301, 1
        %v3338 = vrot.slane %v3302, 1
        %v3339 = vsel %vm2979, %v3337, %v3338
        %v3340 = vrot.slane %v3303, 1
        %v3341 = vrot.slane %v3304, 1
        %v3342 = vsel %vm2979, %v3340, %v3341
        %v3343 = vrot.slane %v3305, 1
        %v3344 = vrot.slane %v3306, 1
        %v3345 = vsel %vm2979, %v3343, %v3344
        %v3346 = vrot.slane %v3307, 1
        %v3347 = vrot.slane %v3308, 1
        %v3348 = vsel %vm2979, %v3346, %v3347
        %v3357 = vadd.f32 %v3281, %v3327
        %v3358 = vadd.f32 %v3282, %v3330
        %v3359 = vadd.f32 %v3283, %v3333
        %v3360 = vadd.f32 %v3284, %v3336
        %v3361 = vadd.f32 %v3285, %v3339
        %v3362 = vadd.f32 %v3286, %v3342
        %v3363 = vadd.f32 %v3287, %v3345
        %v3364 = vadd.f32 %v3288, %v3348
        %v3365 = vlaneseq
        %v3366 = vshrl.u32 %v3365, 7
        %v3367 = vsub.s32 0, %v3366
        %v3368 = vrot.slane %v2922, %v3367
        %v3369 = vmul.f32 %v2905, %v3368
        %v3370 = vmul.f32 %v2906, %v3368
        %v3371 = vmul.f32 %v2907, %v3368
        %v3372 = vmul.f32 %v2908, %v3368
        %v3373 = vmul.f32 %v2909, %v3368
        %v3374 = vmul.f32 %v2910, %v3368
        %v3375 = vmul.f32 %v2911, %v3368
        %v3376 = vmul.f32 %v2912, %v3368
        %v3377 = vmul.f32 %v2913, %v3368
        %v3378 = vmul.f32 %v2914, %v3368
        %v3379 = vmul.f32 %v2915, %v3368
        %v3380 = vmul.f32 %v2916, %v3368
        %v3381 = vmul.f32 %v2917, %v3368
        %v3382 = vmul.f32 %v2918, %v3368
        %v3383 = vmul.f32 %v2919, %v3368
        %v3384 = vmul.f32 %v2920, %v3368
        %v3401 = vrot.slane %v3369, 2
        %v3402 = vrot.slane %v3370, 2
        %v3403 = vsel %vm3056, %v3401, %v3402
        %v3404 = vrot.slane %v3371, 2
        %v3405 = vrot.slane %v3372, 2
        %v3406 = vsel %vm3056, %v3404, %v3405
        %v3407 = vrot.slane %v3373, 2
        %v3408 = vrot.slane %v3374, 2
        %v3409 = vsel %vm3056, %v3407, %v3408
        %v3410 = vrot.slane %v3375, 2
        %v3411 = vrot.slane %v3376, 2
        %v3412 = vsel %vm3056, %v3410, %v3411
        %v3413 = vrot.slane %v3377, 2
        %v3414 = vrot.slane %v3378, 2
        %v3415 = vsel %vm3056, %v3413, %v3414
        %v3416 = vrot.slane %v3379, 2
        %v3417 = vrot.slane %v3380, 2
        %v3418 = vsel %vm3056, %v3416, %v3417
        %v3419 = vrot.slane %v3381, 2
        %v3420 = vrot.slane %v3382, 2
        %v3421 = vsel %vm3056, %v3419, %v3420
        %v3422 = vrot.slane %v3383, 2
        %v3423 = vrot.slane %v3384, 2
        %v3424 = vsel %vm3056, %v3422, %v3423
        %v3433 = vadd.f32 %v3357, %v3403
        %v3434 = vadd.f32 %v3358, %v3406
        %v3435 = vadd.f32 %v3359, %v3409
        %v3436 = vadd.f32 %v3360, %v3412
        %v3437 = vadd.f32 %v3361, %v3415
        %v3438 = vadd.f32 %v3362, %v3418
        %v3439 = vadd.f32 %v3363, %v3421
        %v3440 = vadd.f32 %v3364, %v3424
        %v3441 = vld [vmem:[#allocation16] sm:$0x1]
        %v3443 = vlaneseq
        %v3444 = vshrl.u32 %v3443, 7
        %v3445 = vsub.s32 0, %v3444
        %v3446 = vrot.slane %v3441, %v3445
        %v3448 = vmul.f32 %v3433, %v3446
        %v3449 = vmul.f32 %v3434, %v3446
        %v3450 = vmul.f32 %v3435, %v3446
        %v3451 = vmul.f32 %v3436, %v3446
        %v3452 = vmul.f32 %v3437, %v3446
        %v3453 = vmul.f32 %v3438, %v3446
        %v3454 = vmul.f32 %v3439, %v3446
        %v3455 = vmul.f32 %v3440, %v3446
        %v3456 = vld [vmem:[#allocation17] sm:$0x1]
        %v3458 = vlaneseq
        %v3459 = vshrl.u32 %v3458, 7
        %v3460 = vsub.s32 0, %v3459
        %v3461 = vrot.slane %v3456, %v3460
        %v3463 = vadd.f32 %v3448, %v3461
        %v3464 = vadd.f32 %v3449, %v3461
        %v3465 = vadd.f32 %v3450, %v3461
        %v3466 = vadd.f32 %v3451, %v3461
        %v3467 = vadd.f32 %v3452, %v3461
        %v3468 = vadd.f32 %v3453, %v3461
        %v3469 = vadd.f32 %v3454, %v3461
        %v3470 = vadd.f32 %v3455, %v3461
        %v3471 = vld [vmem:[#allocation19] sm:$0x1]
        %v3472 = vld [vmem:[#allocation20] sm:$0x1]
        %v3473 = vsel %vm862, %v3463, 0.0
        %3474 = vadd.xlane.f32.xlu0 %v3473
        %v3475 = vpop.xlane.xlu0 %3474
        %v3476 = vsel %vm862, %v3464, 0.0
        %3477 = vadd.xlane.f32.xlu0 %v3476
        %v3478 = vpop.xlane.xlu0 %3477
        %v3479 = vsel %vm862, %v3465, 0.0
        %3480 = vadd.xlane.f32.xlu0 %v3479
        %v3481 = vpop.xlane.xlu0 %3480
        %v3482 = vsel %vm862, %v3466, 0.0
        %3483 = vadd.xlane.f32.xlu0 %v3482
        %v3484 = vpop.xlane.xlu0 %3483
        %v3485 = vsel %vm862, %v3467, 0.0
        %3486 = vadd.xlane.f32.xlu0 %v3485
        %v3487 = vpop.xlane.xlu0 %3486
        %v3488 = vsel %vm862, %v3468, 0.0
        %3489 = vadd.xlane.f32.xlu0 %v3488
        %v3490 = vpop.xlane.xlu0 %3489
        %v3491 = vsel %vm862, %v3469, 0.0
        %3492 = vadd.xlane.f32.xlu0 %v3491
        %v3493 = vpop.xlane.xlu0 %3492
        %v3494 = vsel %vm862, %v3470, 0.0
        %3495 = vadd.xlane.f32.xlu0 %v3494
        %v3496 = vpop.xlane.xlu0 %3495
        %v3497 = vmul.f32 %v3475, %v887
        %v3498 = vmul.f32 %v3478, %v887
        %v3499 = vmul.f32 %v3481, %v887
        %v3500 = vmul.f32 %v3484, %v887
        %v3501 = vmul.f32 %v3487, %v887
        %v3502 = vmul.f32 %v3490, %v887
        %v3503 = vmul.f32 %v3493, %v887
        %v3504 = vmul.f32 %v3496, %v887
        %v3505 = vsub.f32 %v3463, %v3497
        %v3506 = vsub.f32 %v3464, %v3498
        %v3507 = vsub.f32 %v3465, %v3499
        %v3508 = vsub.f32 %v3466, %v3500
        %v3509 = vsub.f32 %v3467, %v3501
        %v3510 = vsub.f32 %v3468, %v3502
        %v3511 = vsub.f32 %v3469, %v3503
        %v3512 = vsub.f32 %v3470, %v3504
        %v3513 = vmul.f32 %v3505, %v3505
        %v3514 = vmul.f32 %v3506, %v3506
        %v3515 = vmul.f32 %v3507, %v3507
        %v3516 = vmul.f32 %v3508, %v3508
        %v3517 = vmul.f32 %v3509, %v3509
        %v3518 = vmul.f32 %v3510, %v3510
        %v3519 = vmul.f32 %v3511, %v3511
        %v3520 = vmul.f32 %v3512, %v3512
        %v3521 = vsel %vm862, %v3513, 0.0
        %3522 = vadd.xlane.f32.xlu0 %v3521
        %v3523 = vpop.xlane.xlu0 %3522
        %v3524 = vsel %vm862, %v3514, 0.0
        %3525 = vadd.xlane.f32.xlu0 %v3524
        %v3526 = vpop.xlane.xlu0 %3525
        %v3527 = vsel %vm862, %v3515, 0.0
        %3528 = vadd.xlane.f32.xlu0 %v3527
        %v3529 = vpop.xlane.xlu0 %3528
        %v3530 = vsel %vm862, %v3516, 0.0
        %3531 = vadd.xlane.f32.xlu0 %v3530
        %v3532 = vpop.xlane.xlu0 %3531
        %v3533 = vsel %vm862, %v3517, 0.0
        %3534 = vadd.xlane.f32.xlu0 %v3533
        %v3535 = vpop.xlane.xlu0 %3534
        %v3536 = vsel %vm862, %v3518, 0.0
        %3537 = vadd.xlane.f32.xlu0 %v3536
        %v3538 = vpop.xlane.xlu0 %3537
        %v3539 = vsel %vm862, %v3519, 0.0
        %3540 = vadd.xlane.f32.xlu0 %v3539
        %v3541 = vpop.xlane.xlu0 %3540
        %v3542 = vsel %vm862, %v3520, 0.0
        %3543 = vadd.xlane.f32.xlu0 %v3542
        %v3544 = vpop.xlane.xlu0 %3543
        %v3545 = vmul.f32 %v3523, %v887
        %v3546 = vmul.f32 %v3526, %v887
        %v3547 = vmul.f32 %v3529, %v887
        %v3548 = vmul.f32 %v3532, %v887
        %v3549 = vmul.f32 %v3535, %v887
        %v3550 = vmul.f32 %v3538, %v887
        %v3551 = vmul.f32 %v3541, %v887
        %v3552 = vmul.f32 %v3544, %v887
        %v3553 = vadd.f32 %v3545, 1e-05
        %v3554 = vadd.f32 %v3546, 1e-05
        %v3555 = vadd.f32 %v3547, 1e-05
        %v3556 = vadd.f32 %v3548, 1e-05
        %v3557 = vadd.f32 %v3549, 1e-05
        %v3558 = vadd.f32 %v3550, 1e-05
        %v3559 = vadd.f32 %v3551, 1e-05
        %v3560 = vadd.f32 %v3552, 1e-05
        %v3561 = vrsqrt.pop %v3553
        %v3562 = vrsqrt.pop %v3554
        %v3563 = vrsqrt.pop %v3555
        %v3564 = vrsqrt.pop %v3556
        %v3565 = vrsqrt.pop %v3557
        %v3566 = vrsqrt.pop %v3558
        %v3567 = vrsqrt.pop %v3559
        %v3568 = vrsqrt.pop %v3560
        %v3569 = vmul.f32 %v3505, %v3561
        %v3570 = vmul.f32 %v3506, %v3562
        %v3571 = vmul.f32 %v3507, %v3563
        %v3572 = vmul.f32 %v3508, %v3564
        %v3573 = vmul.f32 %v3509, %v3565
        %v3574 = vmul.f32 %v3510, %v3566
        %v3575 = vmul.f32 %v3511, %v3567
        %v3576 = vmul.f32 %v3512, %v3568
        %v3578 = vlaneseq
        %v3579 = vshrl.u32 %v3578, 7
        %v3580 = vsub.s32 0, %v3579
        %v3581 = vrot.slane %v3471, %v3580
        %v3583 = vmul.f32 %v3569, %v3581
        %v3584 = vmul.f32 %v3570, %v3581
        %v3585 = vmul.f32 %v3571, %v3581
        %v3586 = vmul.f32 %v3572, %v3581
        %v3587 = vmul.f32 %v3573, %v3581
        %v3588 = vmul.f32 %v3574, %v3581
        %v3589 = vmul.f32 %v3575, %v3581
        %v3590 = vmul.f32 %v3576, %v3581
        %v3592 = vlaneseq
        %v3593 = vshrl.u32 %v3592, 7
        %v3594 = vsub.s32 0, %v3593
        %v3595 = vrot.slane %v3472, %v3594
        %v3597 = vadd.f32 %v3583, %v3595
        %v3598 = vadd.f32 %v3584, %v3595
        %v3599 = vadd.f32 %v3585, %v3595
        %v3600 = vadd.f32 %v3586, %v3595
        %v3601 = vadd.f32 %v3587, %v3595
        %v3602 = vadd.f32 %v3588, %v3595
        %v3603 = vadd.f32 %v3589, %v3595
        %v3604 = vadd.f32 %v3590, %v3595
        %v3605 = vpack.c.bf16 %v3598, %v3597
        %v3606 = vpack.c.bf16 %v3600, %v3599
        %v3607 = vpack.c.bf16 %v3602, %v3601
        %v3608 = vpack.c.bf16 %v3604, %v3603
        %v3609 = vld [vmem:[#allocation22] sm:$0xff]
        %v3610 = vld [vmem:[#allocation22 + $0x8] sm:$0xff]
        %v3611 = vld [vmem:[#allocation22 + $0x10] sm:$0xff]
        %v3612 = vld [vmem:[#allocation22 + $0x18] sm:$0xff]
        %v3613 = vpack.c.bf16 %v3610, %v3609
        %v3614 = vpack.c.bf16 %v3612, %v3611
        %v3615 = vld [vmem:[#allocation23] sm:$0x1]
        %v3617 = vlaneseq
        %v3618 = vshrl.u32 %v3617, 7
        %v3619 = vsub.s32 0, %v3618
        %v3620 = vrot.slane %v3615, %v3619
        %v3623 = vsel %vm862, %v3605, 0
        %v3626 = vsel %vm862, %v3606, 0
        %v3629 = vsel %vm862, %v3607, 0
        %v3632 = vsel %vm862, %v3608, 0
        %3634 = vmatprep.subr.bf16.mxu0 0
        %3635 = vmatpush1.bf16.msra.mxu0 0
        %3636 = vmatprep.subr.bf16.mxu0 0
        %3637 = vmatpush1.bf16.msra.mxu0 0
        %3638 = vmatprep.subr.bf16.mxu0 0
        %3639 = vmatpush1.bf16.msra.mxu0 0
        %3640 = vmatprep.subr.bf16.mxu0 0
        %3641 = vmatpush1.bf16.msra.mxu0 0
        %3642 = vmatprep.subr.bf16.mxu0 0
        %3643 = vmatpush1.bf16.msra.mxu0 0
        %3644 = vmatprep.subr.bf16.mxu0 0
        %3645 = vmatpush1.bf16.msra.mxu0 0
        %3646 = vmatprep.subr.bf16.mxu0 0
        %3647 = vmatpush1.bf16.msra.mxu0 %v3614
        %3648 = vmatprep.subr.bf16.mxu0 0
        %3649 = vmatpush1.bf16.msra.mxu0 %v3613
        %3650 = vmatprep.subr.bf16.mxu0 0
        %3651 = vmatpush2.bf16.msra.mxu0 0
        %3652 = vmatprep.subr.bf16.mxu0 0
        %3653 = vmatpush2.bf16.msra.mxu0 0
        %3654 = vmatprep.subr.bf16.mxu0 0
        %3655 = vmatpush2.bf16.msra.mxu0 0
        %3656 = vmatprep.subr.bf16.mxu0 0
        %3657 = vmatpush2.bf16.msra.mxu0 0
        %3658 = vmatprep.subr.bf16.mxu0 0
        %3659 = vmatpush2.bf16.msra.mxu0 0
        %3660 = vmatprep.subr.bf16.mxu0 0
        %3661 = vmatpush2.bf16.msra.mxu0 0
        %3662 = vmatprep.subr.bf16.mxu0 0
        %3663 = vmatpush2.bf16.msra.mxu0 0
        %3664 = vmatprep.subr.bf16.mxu0 0
        %3665 = vmatpush2.bf16.msra.mxu0 0
        %3666 = vmatprep.mubr.bf16.mxu0 0
        %3667 = vmatmul.mubr.bf16.gmra.mxu0 %v3623
        %v3668 = vpop.f32.mrf.mxu0
        %v3669 = vadd.f32 %v3620, %v3668
        %v3670 = vpop.f32.mrf.mxu0
        %v3671 = vpop.f32.mrf.mxu0
        %v3672 = vadd.f32 %v3620, %v3671
        %v3673 = vpop.f32.mrf.mxu0
        %3674 = vmatprep.mubr.bf16.mxu0 0
        %3675 = vmatmul.mubr.bf16.gmra.mxu0 %v3626
        %v3676 = vpop.f32.mrf.mxu0
        %v3677 = vadd.f32 %v3620, %v3676
        %v3678 = vpop.f32.mrf.mxu0
        %v3679 = vpop.f32.mrf.mxu0
        %v3680 = vadd.f32 %v3620, %v3679
        %v3681 = vpop.f32.mrf.mxu0
        %3682 = vmatprep.mubr.bf16.mxu0 0
        %3683 = vmatmul.mubr.bf16.gmra.mxu0 %v3629
        %v3684 = vpop.f32.mrf.mxu0
        %v3685 = vadd.f32 %v3620, %v3684
        %v3686 = vpop.f32.mrf.mxu0
        %v3687 = vpop.f32.mrf.mxu0
        %v3688 = vadd.f32 %v3620, %v3687
        %v3689 = vpop.f32.mrf.mxu0
        %3690 = vmatprep.mubr.bf16.mxu0 0
        %3691 = vmatmul.mubr.bf16.gmra.mxu0 %v3632
        %v3692 = vpop.f32.mrf.mxu0
        %v3693 = vadd.f32 %v3620, %v3692
        %v3694 = vpop.f32.mrf.mxu0
        %v3695 = vpop.f32.mrf.mxu0
        %v3696 = vadd.f32 %v3620, %v3695
        %v3697 = vpop.f32.mrf.mxu0
        %3698 = vdwg.mxu0
        %v3699 = vmul.f32 %v3669, 0.5
        %v3700 = vmul.f32 %v3672, 0.5
        %v3701 = vmul.f32 %v3677, 0.5
        %v3702 = vmul.f32 %v3680, 0.5
        %v3703 = vmul.f32 %v3685, 0.5
        %v3704 = vmul.f32 %v3688, 0.5
        %v3705 = vmul.f32 %v3693, 0.5
        %v3706 = vmul.f32 %v3696, 0.5
        %v3707 = vmul.f32 %v3669, 0.70710677
        %v3708 = vmul.f32 %v3672, 0.70710677
        %v3709 = vmul.f32 %v3677, 0.70710677
        %v3710 = vmul.f32 %v3680, 0.70710677
        %v3711 = vmul.f32 %v3685, 0.70710677
        %v3712 = vmul.f32 %v3688, 0.70710677
        %v3713 = vmul.f32 %v3693, 0.70710677
        %v3714 = vmul.f32 %v3696, 0.70710677
        %v3715 = verf.f32.pop %v3707
        %v3716 = verf.f32.pop %v3708
        %v3717 = verf.f32.pop %v3709
        %v3718 = verf.f32.pop %v3710
        %v3719 = verf.f32.pop %v3711
        %v3720 = verf.f32.pop %v3712
        %v3721 = verf.f32.pop %v3713
        %v3722 = verf.f32.pop %v3714
        %v3723 = vadd.f32 %v3715, 1.0
        %v3724 = vadd.f32 %v3716, 1.0
        %v3725 = vadd.f32 %v3717, 1.0
        %v3726 = vadd.f32 %v3718, 1.0
        %v3727 = vadd.f32 %v3719, 1.0
        %v3728 = vadd.f32 %v3720, 1.0
        %v3729 = vadd.f32 %v3721, 1.0
        %v3730 = vadd.f32 %v3722, 1.0
        %v3731 = vmul.f32 %v3699, %v3723
        %v3732 = vmul.f32 %v3700, %v3724
        %v3733 = vmul.f32 %v3701, %v3725
        %v3734 = vmul.f32 %v3702, %v3726
        %v3735 = vmul.f32 %v3703, %v3727
        %v3736 = vmul.f32 %v3704, %v3728
        %v3737 = vmul.f32 %v3705, %v3729
        %v3738 = vmul.f32 %v3706, %v3730
        %v3739 = vpack.c.bf16 %v3732, %v3731
        %v3740 = vpack.c.bf16 %v3734, %v3733
        %v3741 = vpack.c.bf16 %v3736, %v3735
        %v3742 = vpack.c.bf16 %v3738, %v3737
        %v3743 = vld [vmem:[%s19] sm:$0xff]
        %v3744 = vld [vmem:[%s19 + $0x8] sm:$0xff]
        %v3745 = vld [vmem:[%s19 + $0x10] sm:$0xff]
        %v3746 = vld [vmem:[%s19 + $0x18] sm:$0xff]
        %v3747 = vld [vmem:[%s19 + $0x20] sm:$0xff]
        %v3748 = vld [vmem:[%s19 + $0x28] sm:$0xff]
        %v3749 = vld [vmem:[%s19 + $0x30] sm:$0xff]
        %v3750 = vld [vmem:[%s19 + $0x38] sm:$0xff]
        %v3751 = vld [vmem:[%s19 + $0x40] sm:$0xff]
        %v3752 = vld [vmem:[%s19 + $0x48] sm:$0xff]
        %v3753 = vld [vmem:[%s19 + $0x50] sm:$0xff]
        %v3754 = vld [vmem:[%s19 + $0x58] sm:$0xff]
        %v3755 = vld [vmem:[%s19 + $0x60] sm:$0xff]
        %v3756 = vld [vmem:[%s19 + $0x68] sm:$0xff]
        %v3757 = vld [vmem:[%s19 + $0x70] sm:$0xff]
        %v3758 = vld [vmem:[%s19 + $0x78] sm:$0xff]
        %v3759 = vpack.c.bf16 %v3744, %v3743
        %v3760 = vpack.c.bf16 %v3746, %v3745
        %v3761 = vpack.c.bf16 %v3748, %v3747
        %v3762 = vpack.c.bf16 %v3750, %v3749
        %v3763 = vpack.c.bf16 %v3752, %v3751
        %v3764 = vpack.c.bf16 %v3754, %v3753
        %v3765 = vpack.c.bf16 %v3756, %v3755
        %v3766 = vpack.c.bf16 %v3758, %v3757
        %v3767 = vld [vmem:[#allocation25] sm:$0x1]
        %v3769 = vlaneseq
        %v3770 = vshrl.u32 %v3769, 7
        %v3771 = vsub.s32 0, %v3770
        %v3772 = vrot.slane %v3767, %v3771
        %3774 = vmatprep.subr.bf16.mxu0 0
        %3775 = vmatpush1.bf16.msra.mxu0 %v3766
        %3776 = vmatprep.subr.bf16.mxu0 0
        %3777 = vmatpush1.bf16.msra.mxu0 %v3765
        %3778 = vmatprep.subr.bf16.mxu0 0
        %3779 = vmatpush1.bf16.msra.mxu0 %v3764
        %3780 = vmatprep.subr.bf16.mxu0 0
        %3781 = vmatpush1.bf16.msra.mxu0 %v3763
        %3782 = vmatprep.subr.bf16.mxu0 0
        %3783 = vmatpush1.bf16.msra.mxu0 %v3762
        %3784 = vmatprep.subr.bf16.mxu0 0
        %3785 = vmatpush1.bf16.msra.mxu0 %v3761
        %3786 = vmatprep.subr.bf16.mxu0 0
        %3787 = vmatpush1.bf16.msra.mxu0 %v3760
        %3788 = vmatprep.subr.bf16.mxu0 0
        %3789 = vmatpush1.bf16.msra.mxu0 %v3759
        %3790 = vmatprep.subr.bf16.mxu0 0
        %3791 = vmatpush2.bf16.msra.mxu0 0
        %3792 = vmatprep.subr.bf16.mxu0 0
        %3793 = vmatpush2.bf16.msra.mxu0 0
        %3794 = vmatprep.subr.bf16.mxu0 0
        %3795 = vmatpush2.bf16.msra.mxu0 0
        %3796 = vmatprep.subr.bf16.mxu0 0
        %3797 = vmatpush2.bf16.msra.mxu0 0
        %3798 = vmatprep.subr.bf16.mxu0 0
        %3799 = vmatpush2.bf16.msra.mxu0 0
        %3800 = vmatprep.subr.bf16.mxu0 0
        %3801 = vmatpush2.bf16.msra.mxu0 0
        %3802 = vmatprep.subr.bf16.mxu0 0
        %3803 = vmatpush2.bf16.msra.mxu0 0
        %3804 = vmatprep.subr.bf16.mxu0 0
        %3805 = vmatpush2.bf16.msra.mxu0 0
        %3806 = vmatprep.mubr.bf16.mxu0 0
        %3807 = vmatmul.mubr.bf16.gmra.mxu0 %v3739
        %v3808 = vpop.f32.mrf.mxu0
        %v3809 = vadd.f32 %v3772, %v3808
        %v3810 = vpop.f32.mrf.mxu0
        %v3811 = vpop.f32.mrf.mxu0
        %v3812 = vadd.f32 %v3772, %v3811
        %v3813 = vpop.f32.mrf.mxu0
        %3814 = vmatprep.mubr.bf16.mxu0 0
        %3815 = vmatmul.mubr.bf16.gmra.mxu0 %v3740
        %v3816 = vpop.f32.mrf.mxu0
        %v3817 = vadd.f32 %v3772, %v3816
        %v3818 = vpop.f32.mrf.mxu0
        %v3819 = vpop.f32.mrf.mxu0
        %v3820 = vadd.f32 %v3772, %v3819
        %v3821 = vpop.f32.mrf.mxu0
        %3822 = vmatprep.mubr.bf16.mxu0 0
        %3823 = vmatmul.mubr.bf16.gmra.mxu0 %v3741
        %v3824 = vpop.f32.mrf.mxu0
        %v3825 = vadd.f32 %v3772, %v3824
        %v3826 = vpop.f32.mrf.mxu0
        %v3827 = vpop.f32.mrf.mxu0
        %v3828 = vadd.f32 %v3772, %v3827
        %v3829 = vpop.f32.mrf.mxu0
        %3830 = vmatprep.mubr.bf16.mxu0 0
        %3831 = vmatmul.mubr.bf16.gmra.mxu0 %v3742
        %v3832 = vpop.f32.mrf.mxu0
        %v3833 = vadd.f32 %v3772, %v3832
        %v3834 = vpop.f32.mrf.mxu0
        %v3835 = vpop.f32.mrf.mxu0
        %v3836 = vadd.f32 %v3772, %v3835
        %v3837 = vpop.f32.mrf.mxu0
        %3838 = vdwg.mxu0
        %v3839 = vadd.f32 %v3463, %v3809
        %v3840 = vadd.f32 %v3464, %v3812
        %v3841 = vadd.f32 %v3465, %v3817
        %v3842 = vadd.f32 %v3466, %v3820
        %v3843 = vadd.f32 %v3467, %v3825
        %v3844 = vadd.f32 %v3468, %v3828
        %v3845 = vadd.f32 %v3469, %v3833
        %v3846 = vadd.f32 %v3470, %v3836
        %3847 = vst.msk [vmem:[%s850] sm:$0xff] %vm862, %v3839
        %3848 = vst.msk [vmem:[%s850 + $0x8] sm:$0xff] %vm862, %v3840
        %3849 = vst.msk [vmem:[%s850 + $0x10] sm:$0xff] %vm862, %v3841
        %3850 = vst.msk [vmem:[%s850 + $0x18] sm:$0xff] %vm862, %v3842
        %3851 = vst.msk [vmem:[%s850 + $0x20] sm:$0xff] %vm862, %v3843
        %3852 = vst.msk [vmem:[%s850 + $0x28] sm:$0xff] %vm862, %v3844
        %3853 = vst.msk [vmem:[%s850 + $0x30] sm:$0xff] %vm862, %v3845
        %3854 = vst.msk [vmem:[%s850 + $0x38] sm:$0xff] %vm862, %v3846
        %p3855 = scmp.lt.s32.totalorder %s40, 1
        %s3856 = scalar_select %p3855, %s40, 1
        %s3857 = smul.addr %s3856, 8
        %s3858 = smul.addr %s3857, 8
        %s3859 = scalar_lea.vmem %s21, %s3858
        // Predicated region
        $region165: #{tinyvit_block_forward.1} parent=103 // pred_check
          %p3860 = pneg %p504
        $region166: #{tinyvit_block_forward.1} parent=103 // pred_check_branch
          %3862 = sbr.rel (%p3860) target = $region168
        $region167: #{tinyvit_block_forward.1} parent=103 // pred_region
          _
        $region168: #{tinyvit_block_forward.1} parent=103 // pred_fallthru
          _
      $region104: #{tinyvit_block_forward.1} parent=5 // pred_fallthru
        _
      %p3863 = scmp.le.s32.totalorder 2, %s35
      // Predicated region
      $region169: #{tinyvit_block_forward.1} parent=5 // pred_check
        %p3864 = pneg %p3863
      $region170: #{tinyvit_block_forward.1} parent=5 // pred_check_branch
        %3866 = sbr.rel (%p3864) target = $region172
      $region171: #{tinyvit_block_forward.1} parent=5 // pred_region
        %s3867 = ssub.s32 %s35, 2
        // Predicated region
        $region173: #{tinyvit_block_forward.1} parent=171 // pred_check
          %p3868 = pneg %p510
        $region174: #{tinyvit_block_forward.1} parent=171 // pred_check_branch
          %3870 = sbr.rel (%p3868) target = $region176
        $region175: #{tinyvit_block_forward.1} parent=171 // pred_region
          %p3871 = scmp.lt.s32.totalorder %s41, 1
          %s3872 = scalar_select %p3871, %s41, 1
          %s3873 = smul.addr %s3872, 8
          %s3874 = smul.addr %s3873, 8
          %s3875 = scalar_lea.vmem %s21, %s3874
        $region176: #{tinyvit_block_forward.1} parent=171 // pred_fallthru
          _
      $region172: #{tinyvit_block_forward.1} parent=5 // pred_fallthru
        _
    $region6: #{tinyvit_block_forward.1} parent=1 // loop_footer
      %s39 = sadd.s32 1, %s35
    $region7: #{tinyvit_block_forward.1} parent=1 // loop_footer_branch
      %34 = sbr.rel target = $region3
    $region8: #{tinyvit_block_forward.1} parent=1 // loop_exit
      _
    %3876 = vsyncpa [#allocation4], 1
    %s3877 = scalar_lea.sflag [#allocation4], 1
    %3878 = vsyncpa %s3877, 1
    %3879 = vsyncpa [#allocation6], 1
    %3880 = vsyncpa [#allocation9], 1
    %3881 = vsyncpa [#allocation12], 1
    %3882 = vsyncpa [#allocation15], 1
    %3883 = vsyncpa [#allocation18], 1
    %3884 = vsyncpa [#allocation21], 1
    %3885 = vsyncpa [#allocation24], 1

</llo_original>
